<compile_context>
chip_gen: v6e
topology: v6e:2x2x1
jax: 0.10.0
libtpu: 0.0.40
codegen_flags: <defaults>
</compile_context>

<pallas_src>
import functools

import jax
import jax.numpy as jnp
from jax.experimental import pallas as pl
from jax.experimental.pallas import tpu as pltpu

LN_EPS = 1e-5  # PyTorch nn.LayerNorm default


# --------------------------------------------------------------------------
# Generation-aware scoped-VMEM budget and row-tile selection
# --------------------------------------------------------------------------
@functools.lru_cache(maxsize=1)
def _vmem_limit_bytes():
    """~Half of physical VMEM, capped at 64 MiB (v5e/v6e: 64 MiB, v7x: 32 MiB)."""
    cap = 128 << 20
    try:
        info = pltpu.get_tpu_info()
        cap = int(getattr(info, "vmem_capacity_bytes", cap) or cap)
    except Exception:
        pass
    return int(max(16 << 20, min(64 << 20, cap // 2)))


def _pick_tile_rows(n, tile_rows, min_steps=2):
    """Row tile giving >= min_steps near-equal grid steps, a multiple of 8.

    >=2 balanced steps keeps both v7x TensorCores busy under
    dimension_semantics=("parallel",) and restores DMA/compute overlap.
    """
    steps = max(min_steps, pl.cdiv(n, tile_rows))
    tm = pl.cdiv(n, steps)
    tm = ((tm + 7) // 8) * 8           # sublane multiple
    if tm >= n:
        return n                        # full dim satisfies the (8,128) rule
    return min(tm, tile_rows)


# --------------------------------------------------------------------------
# Shared row-tiled pallas_call: rows (N, K) x grid-invariant consts -> (N, C)
# Trailing partial block handled by Pallas (writes masked); no jnp.pad copies.
# --------------------------------------------------------------------------
def _tiled_rows_call(kernel, rows, consts, out_cols, out_dtype, tile_rows):
    n, k = rows.shape
    tm = _pick_tile_rows(n, tile_rows)
    in_specs = [pl.BlockSpec((tm, k), lambda i: (i, 0))]
    for cst in consts:
        # Constant block index across the grid -> Pallas skips re-DMA per step.
        in_specs.append(pl.BlockSpec(cst.shape, lambda i: (0, 0)))
    return pl.pallas_call(
        kernel,
        out_shape=jax.ShapeDtypeStruct((n, out_cols), out_dtype),
        grid=(pl.cdiv(n, tm),),
        in_specs=in_specs,
        out_specs=pl.BlockSpec((tm, out_cols), lambda i: (i, 0)),
        compiler_params=pltpu.CompilerParams(
            dimension_semantics=("parallel",),
            vmem_limit_bytes=_vmem_limit_bytes(),
        ),
    )(rows, *consts)


# --------------------------------------------------------------------------
# Kernel 1: fused count-weighted LayerNorm + reduction matmul (PatchMerging)
# --------------------------------------------------------------------------
def _patch_merge_kernel(x_ref, w_ref, b_ref, cw_ref, o_ref):
    x = x_ref[...].astype(jnp.float32)                   # (TM, 6C) dedup'd rows
    cw = cw_ref[...]                                      # (1, 6C) counts {1,1,2,2,1,1}
    # LN stats over the original 192-wide (duplicated) vector, via counts / 192.
    mean = jnp.sum(x * cw, axis=-1, keepdims=True) * (1.0 / 192.0)
    centered = x - mean
    var = jnp.sum(centered * centered * cw, axis=-1, keepdims=True) * (1.0 / 192.0)
    xn = centered * jax.lax.rsqrt(var + LN_EPS)           # LN w/o affine (folded)
    # HBM-bound stage: keep f32-faithful MXU passes (per review, revisit on v5e
    # only if the concat round trip is fully removed and MXU becomes binding).
    o_ref[...] = (
        jnp.dot(xn, w_ref[...],
                preferred_element_type=jnp.float32,
                precision=jax.lax.Precision.HIGHEST)
        + b_ref[...]
    ).astype(o_ref.dtype)


def patch_merging_3d(x, gamma, beta, w_red, *, tile_rows=2048):
    """MONAI v0.9.0 `PatchMerging` ('merging' mode, spatial_dims=3).

    x:      (B, D, H, W, C) channels-last
    gamma:  (8C,)  LayerNorm weight
    beta:   (8C,)  LayerNorm bias
    w_red:  (8C, 2C) reduction weight (== torch Linear.weight.T)
    returns (B, ceil(D/2), ceil(H/2), ceil(W/2), 2C)
    """
    b, d, h, w, c = x.shape
    c2 = w_red.shape[1]
    # pad odd spatial dims exactly like F.pad in the torch module
    x = jnp.pad(x, ((0, 0), (0, d % 2), (0, h % 2), (0, w % 2), (0, 0)))

    # MONAI v0.9.0 slice order has x5==x2 and x6==x3; gather only the 6 unique
    # parities (144 instead of 192 channels) and fold the duplicates into the
    # weight + count-weighted LN statistics (exact algebraic identity).
    xm = jnp.concatenate(
        [
            x[:, 0::2, 0::2, 0::2, :],   # x0 (0,0,0)
            x[:, 1::2, 0::2, 0::2, :],   # x1 (1,0,0)
            x[:, 0::2, 1::2, 0::2, :],   # x2 (0,1,0)   (== x5)
            x[:, 0::2, 0::2, 1::2, :],   # x3 (0,0,1)   (== x6)
            x[:, 1::2, 0::2, 1::2, :],   # x4 (1,0,1)
            x[:, 1::2, 1::2, 1::2, :],   # x7 (1,1,1)
        ],
        axis=-1,
    )                                                     # (B, D2, H2, W2, 6C)
    b2, d2, h2, w2, c6 = xm.shape
    rows = xm.reshape(-1, c6)

    # Fold LN affine into the reduction matmul and dedup the duplicated blocks:
    #   w_eff = gamma[:,None] * w_red ;  w_d sums the x2/x5 and x3/x6 blocks.
    w_eff = (gamma[:, None] * w_red).astype(jnp.float32)   # (8C, 2C)
    w_d = jnp.concatenate(
        [
            w_eff[0 * c:1 * c],
            w_eff[1 * c:2 * c],
            w_eff[2 * c:3 * c] + w_eff[5 * c:6 * c],
            w_eff[3 * c:4 * c] + w_eff[6 * c:7 * c],
            w_eff[4 * c:5 * c],
            w_eff[7 * c:8 * c],
        ],
        axis=0,
    )                                                      # (6C, 2C)
    # one-time (1,8C)x(8C,2C) product at full f32 precision (review item)
    b_eff = jnp.dot(beta.reshape(1, -1).astype(jnp.float32),
                    w_red.astype(jnp.float32),
                    precision=jax.lax.Precision.HIGHEST)   # (1, 2C)
    counts = jnp.concatenate(
        [jnp.full((c,), v, jnp.float32) for v in (1.0, 1.0, 2.0, 2.0, 1.0, 1.0)]
    ).reshape(1, c6)

    out = _tiled_rows_call(_patch_merge_kernel, rows, (w_d, b_eff, counts),
                           c2, x.dtype, tile_rows)
    return out.reshape(b2, d2, h2, w2, c2)


# --------------------------------------------------------------------------
# Kernel 2: 1x1x1 Conv3d (MAT3D.Conv3D_1D, 720 -> 768) == per-voxel matmul+bias
# --------------------------------------------------------------------------
def _conv1x1_kernel(x_ref, w_ref, b_ref, o_ref):
    # bf16 operands (DEFAULT MXU precision rounds to bf16 anyway), f32 accumulate.
    o_ref[...] = (
        jnp.dot(x_ref[...], w_ref[...], preferred_element_type=jnp.float32)
        + b_ref[...]
    ).astype(o_ref.dtype)


def conv3d_1x1_ndhwc(x_ndhwc, w_t, bias, *, tile_rows=1024, out_dtype=None):
    """Channels-last pointwise conv core (no layout transposes).

    x_ndhwc: (B, D, H, W, Cin)   -- pass bf16 activations to halve HBM traffic
    w_t:     (Cin, Cout)         -- pre-transposed once (torch weight.T)
    bias:    (Cout,)
    returns  (B, D, H, W, Cout) in out_dtype (default: x dtype)
    """
    cin, cout = w_t.shape
    out_dtype = out_dtype or x_ndhwc.dtype
    rows = x_ndhwc.reshape(-1, cin)
    if rows.dtype != jnp.bfloat16:
        # NOTE: ideally the producer already emits bf16 channels-last so this
        # cast (an extra HBM pass when standalone) fuses away / is a no-op.
        rows = rows.astype(jnp.bfloat16)
    w_bf16 = w_t.astype(jnp.bfloat16)                       # one-time, ~1.1 MiB
    b_f32 = bias.reshape(1, cout).astype(jnp.float32)
    out = _tiled_rows_call(_conv1x1_kernel, rows, (w_bf16, b_f32),
                           cout, out_dtype, tile_rows)
    return out.reshape(*x_ndhwc.shape[:-1], cout)


def conv3d_1x1(x_ncdhw, w, bias, *, tile_rows=1024, out_dtype=None):
    """Torch-layout compatibility wrapper: NCDHW in/out, weight (Cout, Cin).

    NOTE: each transpose is a full HBM round trip of the activation; prefer
    keeping activations channels-last and calling conv3d_1x1_ndhwc directly.
    """
    x_cl = jnp.transpose(x_ncdhw, (0, 2, 3, 4, 1))
    y = conv3d_1x1_ndhwc(x_cl, jnp.transpose(w), bias,
                         tile_rows=tile_rows, out_dtype=out_dtype)
    return jnp.transpose(y, (0, 4, 1, 2, 3))


# --------------------------------------------------------------------------
# Pure-JAX references (torch-faithful, full 8-slice path, f32)
# --------------------------------------------------------------------------
def _patch_merging_ref(x, gamma, beta, w_red):
    d, h, w = x.shape[1:4]
    x = jnp.pad(x, ((0, 0), (0, d % 2), (0, h % 2), (0, w % 2), (0, 0)))
    sl = [
        x[:, 0::2, 0::2, 0::2, :], x[:, 1::2, 0::2, 0::2, :],
        x[:, 0::2, 1::2, 0::2, :], x[:, 0::2, 0::2, 1::2, :],
        x[:, 1::2, 0::2, 1::2, :], x[:, 0::2, 1::2, 0::2, :],
        x[:, 0::2, 0::2, 1::2, :], x[:, 1::2, 1::2, 1::2, :],
    ]
    xm = jnp.concatenate(sl, axis=-1).astype(jnp.float32)
    mu = jnp.mean(xm, axis=-1, keepdims=True)
    var = jnp.mean((xm - mu) ** 2, axis=-1, keepdims=True)
    xn = (xm - mu) * jax.lax.rsqrt(var + LN_EPS) * gamma + beta
    return jnp.einsum("bdhwc,co->bdhwo", xn, w_red,
                      precision=jax.lax.Precision.HIGHEST)


def _conv1x1_ref_ndhwc(x_ndhwc, w_t, bias):
    y = jnp.einsum("bdhwc,co->bdhwo",
                   x_ndhwc.astype(jnp.float32), w_t.astype(jnp.float32),
                   precision=jax.lax.Precision.HIGHEST)
    return y + bias.astype(jnp.float32)


# --------------------------------------------------------------------------
if __name__ == "__main__":
    key = jax.random.PRNGKey(0)
    k1, k2, k3, k4, k5, k6, k7, k8 = jax.random.split(key, 8)

    # ---- PatchMerging: dim = feature_size = 24 ------------------------------
    dim = 24
    gamma = 1.0 + 0.1 * jax.random.normal(k2, (8 * dim,), dtype=jnp.float32)
    beta = 0.1 * jax.random.normal(k3, (8 * dim,), dtype=jnp.float32)
    w_red = (jax.random.normal(k4, (8 * dim, 2 * dim), dtype=jnp.float32)
             / jnp.sqrt(8 * dim))

    # even spatial dims (1024 rows -> 2 balanced grid steps)
    x_pm = jax.random.normal(k1, (2, 16, 16, 16, dim), dtype=jnp.float32)
    y_pm = jax.block_until_ready(patch_merging_3d(x_pm, gamma, beta, w_red))
    y_pm_ref = _patch_merging_ref(x_pm, gamma, beta, w_red)
    assert y_pm.shape == (2, 8, 8, 8, 2 * dim)
    assert jnp.allclose(y_pm, y_pm_ref, rtol=1e-3, atol=1e-3), "patch merging mismatch"

    # odd spatial dims (exercises the F.pad path and the masked partial block)
    x_pm_odd = jax.random.normal(k8, (2, 9, 10, 9, dim), dtype=jnp.float32)
    y_pm_odd = jax.block_until_ready(patch_merging_3d(x_pm_odd, gamma, beta, w_red))
    y_pm_odd_ref = _patch_merging_ref(x_pm_odd, gamma, beta, w_red)
    assert y_pm_odd.shape == (2, 5, 5, 5, 2 * dim)
    assert jnp.allclose(y_pm_odd, y_pm_odd_ref, rtol=1e-3, atol=1e-3), \
        "patch merging (odd dims) mismatch"

    # ---- Conv3D_1D: 720 -> 768, 1x1x1 kernel, channels-last bf16 path -------
    cin, cout = 720, 768
    # 600 voxel-rows -> 2 balanced grid steps (304 + 296) incl. a partial block
    x_cv = jax.random.normal(k5, (1, 6, 10, 10, cin), dtype=jnp.bfloat16)
    w_t = (jax.random.normal(k6, (cin, cout), dtype=jnp.float32)
           / jnp.sqrt(cin))                      # (Cin, Cout) == torch weight.T
    b_cv = 0.01 * jax.random.normal(k7, (cout,), dtype=jnp.float32)

    y_cv = jax.block_until_ready(conv3d_1x1_ndhwc(x_cv, w_t, b_cv))
    y_cv_ref = _conv1x1_ref_ndhwc(x_cv, w_t, b_cv)
    assert y_cv.shape == (1, 6, 10, 10, cout)
    assert y_cv.dtype == jnp.bfloat16
    # bf16 operands/output vs f32 reference -> looser tolerance
    assert jnp.allclose(y_cv.astype(jnp.float32), y_cv_ref,
                        rtol=5e-2, atol=5e-2), "conv1x1 mismatch"

    print("KERNEL_OK")
</pallas_src>

<mosaic_0001>
module attributes {stable_mosaic.version = 11 : i64} {
  func.func @_patch_merge_kernel(%arg0: i32, %arg1: memref<512x144xf32, #tpu.memory_space<vmem>>, %arg2: memref<144x48xf32, #tpu.memory_space<vmem>>, %arg3: memref<1x48xf32, #tpu.memory_space<vmem>>, %arg4: memref<1x144xf32, #tpu.memory_space<vmem>>, %arg5: memref<512x48xf32, #tpu.memory_space<vmem>>) attributes {dimension_semantics = [#tpu.dimension_semantics<parallel>], iteration_bounds = array<i64: 2>, scalar_prefetch = 0 : i64, scratch_operands = 0 : i64, tpu.core_type = #tpu.core_type<tc>, window_params = [{transform_indices = @transform_0, window_bounds = array<i64: 512, 144>}, {pipeline_mode = #tpu.pipeline_mode<synchronous>, transform_indices = @transform_1, window_bounds = array<i64: 144, 48>}, {pipeline_mode = #tpu.pipeline_mode<synchronous>, transform_indices = @transform_2, window_bounds = array<i64: 1, 48>}, {pipeline_mode = #tpu.pipeline_mode<synchronous>, transform_indices = @transform_3, window_bounds = array<i64: 1, 144>}, {transform_indices = @transform_4, window_bounds = array<i64: 512, 48>}]} {
    %c0 = arith.constant 0 : index
    %c0_0 = arith.constant 0 : index
    %0 = vector.load %arg1[%c0, %c0_0] : memref<512x144xf32, #tpu.memory_space<vmem>>, vector<512x144xf32>
    %c0_1 = arith.constant 0 : index
    %c0_2 = arith.constant 0 : index
    %1 = vector.load %arg4[%c0_1, %c0_2] : memref<1x144xf32, #tpu.memory_space<vmem>>, vector<1x144xf32>
    %2 = vector.broadcast %1 : vector<1x144xf32> to vector<512x144xf32>
    %3 = arith.mulf %0, %2 : vector<512x144xf32>
    %cst = arith.constant dense<0.000000e+00> : vector<512xf32>
    %4 = vector.multi_reduction <add>, %3, %cst [1] : vector<512x144xf32> to vector<512xf32>
    %5 = vector.shape_cast %4 : vector<512xf32> to vector<512x1xf32>
    %cst_3 = arith.constant 0.00520833349 : f32
    %6 = vector.broadcast %cst_3 : f32 to vector<512x1xf32>
    %7 = arith.mulf %5, %6 : vector<512x1xf32>
    %8 = vector.broadcast %7 : vector<512x1xf32> to vector<512x144xf32>
    %9 = arith.subf %0, %8 : vector<512x144xf32>
    %10 = arith.mulf %9, %9 : vector<512x144xf32>
    %11 = vector.broadcast %1 : vector<1x144xf32> to vector<512x144xf32>
    %12 = arith.mulf %10, %11 : vector<512x144xf32>
    %cst_4 = arith.constant dense<0.000000e+00> : vector<512xf32>
    %13 = vector.multi_reduction <add>, %12, %cst_4 [1] : vector<512x144xf32> to vector<512xf32>
    %14 = vector.shape_cast %13 : vector<512xf32> to vector<512x1xf32>
    %cst_5 = arith.constant 0.00520833349 : f32
    %15 = vector.broadcast %cst_5 : f32 to vector<512x1xf32>
    %16 = arith.mulf %14, %15 : vector<512x1xf32>
    %cst_6 = arith.constant 9.99999974E-6 : f32
    %17 = vector.broadcast %cst_6 : f32 to vector<512x1xf32>
    %18 = arith.addf %16, %17 : vector<512x1xf32>
    %19 = math.rsqrt %18 : vector<512x1xf32>
    %20 = vector.broadcast %19 : vector<512x1xf32> to vector<512x144xf32>
    %21 = arith.mulf %9, %20 : vector<512x144xf32>
    %c0_7 = arith.constant 0 : index
    %c0_8 = arith.constant 0 : index
    %22 = vector.load %arg2[%c0_7, %c0_8] : memref<144x48xf32, #tpu.memory_space<vmem>>, vector<144x48xf32>
    %cst_9 = arith.constant dense<0.000000e+00> : vector<512x48xf32>
    %23 = tpu.matmul %21, %22, %cst_9 {dimension_numbers = #tpu.dot_dimension_numbers<[1], [0], [0], [1], [0, 0, 1, 1], [], []>, precision = #tpu.contract_precision<fp32>} : vector<512x144xf32>, vector<144x48xf32>, vector<512x48xf32> -> vector<512x48xf32>
    %c0_10 = arith.constant 0 : index
    %c0_11 = arith.constant 0 : index
    %24 = vector.load %arg3[%c0_10, %c0_11] : memref<1x48xf32, #tpu.memory_space<vmem>>, vector<1x48xf32>
    %25 = vector.broadcast %24 : vector<1x48xf32> to vector<512x48xf32>
    %26 = arith.addf %23, %25 : vector<512x48xf32>
    %c0_12 = arith.constant 0 : index
    %c0_13 = arith.constant 0 : index
    %27 = vector.load %arg5[%c0_12, %c0_13] : memref<512x48xf32, #tpu.memory_space<vmem>>, vector<512x48xf32>
    tpu.vector_store %arg5[%c0_12, %c0_13], %26 {strides = array<i32>} : memref<512x48xf32, #tpu.memory_space<vmem>>, vector<512x48xf32>,
    return
  }
  func.func @transform_0(%arg0: i32) -> (i32, i32) {
    %c0_i32 = arith.constant 0 : i32
    %c0_i32_0 = arith.constant 0 : i32
    return %arg0, %c0_i32 : i32, i32
  }
  func.func @transform_1(%arg0: i32) -> (i32, i32) {
    %c0_i32 = arith.constant 0 : i32
    %c0_i32_0 = arith.constant 0 : i32
    %c0_i32_1 = arith.constant 0 : i32
    return %c0_i32, %c0_i32_0 : i32, i32
  }
  func.func @transform_2(%arg0: i32) -> (i32, i32) {
    %c0_i32 = arith.constant 0 : i32
    %c0_i32_0 = arith.constant 0 : i32
    %c0_i32_1 = arith.constant 0 : i32
    return %c0_i32, %c0_i32_0 : i32, i32
  }
  func.func @transform_3(%arg0: i32) -> (i32, i32) {
    %c0_i32 = arith.constant 0 : i32
    %c0_i32_0 = arith.constant 0 : i32
    %c0_i32_1 = arith.constant 0 : i32
    return %c0_i32, %c0_i32_0 : i32, i32
  }
  func.func @transform_4(%arg0: i32) -> (i32, i32) {
    %c0_i32 = arith.constant 0 : i32
    %c0_i32_0 = arith.constant 0 : i32
    return %arg0, %c0_i32 : i32, i32
  }
}

</mosaic_0001>

<llo_original>
// kernel: tpu_custom_call.1
$region0: #{tpu_custom_call.1}
  #allocation0 [shape = 'u32[]', space=smem, size = 0x4, offset = 0x4, fixed_abs, tag = 'smem constant byte address 0x4 - core index']
  #allocation1 [shape = 'u32[144,128]{1,0:T(1,128)}', space=vmem, size = 0x12000, scoped, tag = 'internal scratch']
  %s0 = inlined_call_operand.vmem [shape: f32[1024,144], index: 0, kind: input, shape index: {}]
  %s1 = inlined_call_operand.vmem [shape: f32[144,48], index: 1, kind: input, shape index: {}]
  %s2 = inlined_call_operand.vmem [shape: f32[1,48], index: 2, kind: input, shape index: {}]
  %s3 = inlined_call_operand.vmem [shape: f32[1,144], index: 3, kind: input, shape index: {}]
  %s4 = inlined_call_operand.vmem [shape: f32[1024,48], index: 4, kind: output, shape index: {}]
  %s5 = sld [smem:[#allocation0]]
  $region49: #{tpu_custom_call.1} parent=0
    _
  %s7 = ssub.s32 1, %s5
  %s8 = scalar_select 0, %s7, %s5
  loop: start=0, step=1, limit=4
  $region2: #{tpu_custom_call.1} parent=0 // loop_pre_header
    _
  $region3: #{tpu_custom_call.1} parent=0 // loop_header
    %s10 = sphi 0, %s14
    %p11 = scmp.ge.s32.totalorder %s10, 4
    %s20 = sphi 0, %s22
    %s23 = sphi 0, %s20
    %s24 = sphi 0, %s23
    %s40 = sphi 0, %s24
    %s44 = sphi 0, %s44
    %s46 = sphi 0, %s44
    %s47 = sphi 0, %s46
    %s61 = sphi 0, %s47
    %s65 = sphi 0, %s65
    %s67 = sphi 0, %s65
    %s68 = sphi 0, %s67
    %s82 = sphi 0, %s68
    %s86 = sphi 0, %s86
    %s88 = sphi 0, %s86
    %s89 = sphi 0, %s88
    %s103 = sphi 0, %s89
    %s109 = sphi 0, %s111
    %s112 = sphi 0, %s109
    %s113 = sphi 0, %s112
    %s129 = sphi 0, %s113
  $region4: #{tpu_custom_call.1} parent=0 // loop_header_branch
    %13 = sbr.rel (%p11) target = $region8
  $region5: #{tpu_custom_call.1} parent=0 // loop_body
    %s15 = ssub.s32 %s10, 1
    %s16 = ssub.s32 %s10, 2
    %s17 = sadd.s32 %s10, 1
    %s18 = ssub.s32 %s10, %s17
    %p19 = scmp.eq.s32.totalorder %s18, 0
    %s21 = sadd.s32 %s20, 1
    %s22 = scalar_select %p19, %s20, %s21
    %p25 = pneg %p19
    %p26 = scmp.eq.s32.totalorder %s10, 1
    %p27 = por %p25, %p26
    %p28 = scmp.ne.s32.totalorder %s20, %s23
    %p29 = scmp.eq.s32.totalorder %s10, 0
    %p30 = por %p28, %p29
    %p31 = scmp.ne.s32.totalorder %s20, %s23
    %p32 = scmp.eq.s32.totalorder %s15, 1
    %p33 = por %p31, %p32
    %p34 = scmp.ne.s32.totalorder %s23, %s24
    %p35 = scmp.eq.s32.totalorder %s15, 0
    %p36 = por %p34, %p35
    %p37 = scmp.ne.s32.totalorder %s23, %s24
    %p38 = scmp.eq.s32.totalorder %s16, 1
    %p39 = por %p37, %p38
    %p41 = scmp.ne.s32.totalorder %s24, %s40
    %p42 = scmp.eq.s32.totalorder %s16, 0
    %p43 = por %p41, %p42
    %s45 = sadd.s32 %s44, 1
    %p48 = scmp.eq.s32.totalorder %s10, 1
    %p49 = scmp.ne.s32.totalorder %s44, %s46
    %p50 = scmp.eq.s32.totalorder %s10, 0
    %p51 = por %p49, %p50
    %p52 = scmp.ne.s32.totalorder %s44, %s46
    %p53 = scmp.eq.s32.totalorder %s15, 1
    %p54 = por %p52, %p53
    %p55 = scmp.ne.s32.totalorder %s46, %s47
    %p56 = scmp.eq.s32.totalorder %s15, 0
    %p57 = por %p55, %p56
    %p58 = scmp.ne.s32.totalorder %s46, %s47
    %p59 = scmp.eq.s32.totalorder %s16, 1
    %p60 = por %p58, %p59
    %p62 = scmp.ne.s32.totalorder %s47, %s61
    %p63 = scmp.eq.s32.totalorder %s16, 0
    %p64 = por %p62, %p63
    %s66 = sadd.s32 %s65, 1
    %p69 = scmp.eq.s32.totalorder %s10, 1
    %p70 = scmp.ne.s32.totalorder %s65, %s67
    %p71 = scmp.eq.s32.totalorder %s10, 0
    %p72 = por %p70, %p71
    %p73 = scmp.ne.s32.totalorder %s65, %s67
    %p74 = scmp.eq.s32.totalorder %s15, 1
    %p75 = por %p73, %p74
    %p76 = scmp.ne.s32.totalorder %s67, %s68
    %p77 = scmp.eq.s32.totalorder %s15, 0
    %p78 = por %p76, %p77
    %p79 = scmp.ne.s32.totalorder %s67, %s68
    %p80 = scmp.eq.s32.totalorder %s16, 1
    %p81 = por %p79, %p80
    %p83 = scmp.ne.s32.totalorder %s68, %s82
    %p84 = scmp.eq.s32.totalorder %s16, 0
    %p85 = por %p83, %p84
    %s87 = sadd.s32 %s86, 1
    %p90 = scmp.eq.s32.totalorder %s10, 1
    %p91 = scmp.ne.s32.totalorder %s86, %s88
    %p92 = scmp.eq.s32.totalorder %s10, 0
    %p93 = por %p91, %p92
    %p94 = scmp.ne.s32.totalorder %s86, %s88
    %p95 = scmp.eq.s32.totalorder %s15, 1
    %p96 = por %p94, %p95
    %p97 = scmp.ne.s32.totalorder %s88, %s89
    %p98 = scmp.eq.s32.totalorder %s15, 0
    %p99 = por %p97, %p98
    %p100 = scmp.ne.s32.totalorder %s88, %s89
    %p101 = scmp.eq.s32.totalorder %s16, 1
    %p102 = por %p100, %p101
    %p104 = scmp.ne.s32.totalorder %s89, %s103
    %p105 = scmp.eq.s32.totalorder %s16, 0
    %p106 = por %p104, %p105
    %s107 = ssub.s32 %s10, %s17
    %p108 = scmp.eq.s32.totalorder %s107, 0
    %s110 = sadd.s32 %s109, 1
    %s111 = scalar_select %p108, %s109, %s110
    %p114 = pneg %p108
    %p115 = scmp.eq.s32.totalorder %s10, 1
    %p116 = por %p114, %p115
    %p117 = scmp.ne.s32.totalorder %s109, %s112
    %p118 = scmp.eq.s32.totalorder %s10, 0
    %p119 = por %p117, %p118
    %p120 = scmp.ne.s32.totalorder %s109, %s112
    %p121 = scmp.eq.s32.totalorder %s15, 1
    %p122 = por %p120, %p121
    %p123 = scmp.ne.s32.totalorder %s112, %s113
    %p124 = scmp.eq.s32.totalorder %s15, 0
    %p125 = por %p123, %p124
    %p126 = scmp.ne.s32.totalorder %s112, %s113
    %p127 = scmp.eq.s32.totalorder %s16, 1
    %p128 = por %p126, %p127
    %p130 = scmp.ne.s32.totalorder %s113, %s129
    %p131 = scmp.eq.s32.totalorder %s16, 0
    %p132 = por %p130, %p131
    %p133 = scmp.le.s32.totalorder 1, %s10
    %p134 = scmp.lt.s32.totalorder %s10, 3
    %p135 = pnand %p133, %p134
    %p136 = pneg %p135
    // Predicated region
    $region9: #{tpu_custom_call.1} parent=5 // pred_check
      _
    $region10: #{tpu_custom_call.1} parent=5 // pred_check_branch
      %138 = sbr.rel (%p135) target = $region12
    $region11: #{tpu_custom_call.1} parent=5 // pred_region
      %s139 = ssub.s32 %s10, 1
      // Predicated region
      $region13: #{tpu_custom_call.1} parent=11 // pred_check
        %p140 = pneg %p57
      $region14: #{tpu_custom_call.1} parent=11 // pred_check_branch
        %142 = sbr.rel (%p140) target = $region16
      $region15: #{tpu_custom_call.1} parent=11 // pred_region
        _
      $region16: #{tpu_custom_call.1} parent=11 // pred_fallthru
        _
      // Predicated region
      $region17: #{tpu_custom_call.1} parent=11 // pred_check
        %p143 = pneg %p78
      $region18: #{tpu_custom_call.1} parent=11 // pred_check_branch
        %145 = sbr.rel (%p143) target = $region20
      $region19: #{tpu_custom_call.1} parent=11 // pred_region
        _
      $region20: #{tpu_custom_call.1} parent=11 // pred_fallthru
        _
      // Predicated region
      $region21: #{tpu_custom_call.1} parent=11 // pred_check
        %p146 = pneg %p99
      $region22: #{tpu_custom_call.1} parent=11 // pred_check_branch
        %148 = sbr.rel (%p146) target = $region24
      $region23: #{tpu_custom_call.1} parent=11 // pred_region
        _
      $region24: #{tpu_custom_call.1} parent=11 // pred_fallthru
        _
    $region12: #{tpu_custom_call.1} parent=5 // pred_fallthru
      _
    %p149 = scmp.lt.s32.totalorder %s10, 2
    // Predicated region
    $region25: #{tpu_custom_call.1} parent=5 // pred_check
      %p150 = pneg %p149
    $region26: #{tpu_custom_call.1} parent=5 // pred_check_branch
      %152 = sbr.rel (%p150) target = $region28
    $region27: #{tpu_custom_call.1} parent=5 // pred_region
      // Predicated region
      $region29: #{tpu_custom_call.1} parent=27 // pred_check
        %p153 = pneg %p30
      $region30: #{tpu_custom_call.1} parent=27 // pred_check_branch
        %155 = sbr.rel (%p153) target = $region32
      $region31: #{tpu_custom_call.1} parent=27 // pred_region
        %s156 = smul.u32 64, %s10
        %p157 = scmp.lt.s32.totalorder %s156, 127
        %s158 = scalar_select %p157, %s156, 127
        %s159 = smul.addr %s158, 2
        %s160 = smul.addr %s159, 8
        %s161 = scalar_lea.vmem %s0, %s160
        %s162 = smul.u32 64, %s10
      $region32: #{tpu_custom_call.1} parent=27 // pred_fallthru
        _
    $region28: #{tpu_custom_call.1} parent=5 // pred_fallthru
      _
    %p163 = scmp.le.s32.totalorder 1, %s10
    %p164 = scmp.lt.s32.totalorder %s10, 3
    %p165 = pnand %p163, %p164
    %p166 = pneg %p165
    // Predicated region
    $region33: #{tpu_custom_call.1} parent=5 // pred_check
      _
    $region34: #{tpu_custom_call.1} parent=5 // pred_check_branch
      %168 = sbr.rel (%p165) target = $region36
    $region35: #{tpu_custom_call.1} parent=5 // pred_region
      %s169 = ssub.s32 %s10, 1
      %s170 = smul.u32 64, %s15
      %p171 = scmp.lt.s32.totalorder %s170, 127
      %s172 = scalar_select %p171, %s170, 127
      %s173 = smul.addr %s172, 2
      %s174 = smul.addr %s173, 8
      %s175 = scalar_lea.vmem %s0, %s174
      %p176 = pneg %p36
      %p177 = pneg %p33
      %p178 = pneg %p57
      %p179 = pneg %p54
      %p180 = pneg %p78
      %p181 = pneg %p75
      %p182 = pneg %p99
      %p183 = pneg %p96
      %p184 = pneg %p125
      %p185 = pneg %p122
      %s186 = smul.u32 64, %s15
      %p187 = scmp.lt.s32.totalorder %s186, 127
      %s188 = scalar_select %p187, %s186, 127
      %s189 = smul.addr %s188, 8
      %s190 = scalar_lea.vmem %s4, %s189
      %s191 = smul.u32 64, %s15
      %p192 = scmp.lt.s32.totalorder %s191, 127
      %s193 = scalar_select %p192, %s191, 127
      %s194 = smul.addr %s193, 2
      %s195 = smul.addr %s194, 8
      %s196 = scalar_lea.vmem %s0, %s195
      %s197 = smul.u32 64, %s15
      %s198 = smul.u32 64, %s15
      %p199 = scmp.lt.s32.totalorder %s198, 127
      %s200 = scalar_select %p199, %s198, 127
      %s201 = smul.addr %s200, 8
      %s202 = scalar_lea.vmem %s4, %s201
      %s203 = smul.u32 64, %s15
      %v204 = vld [vmem:[%s196] sm:$0xff]
      %v205 = vld [vmem:[%s196 + $0x8] sm:$0xff]
      %v206 = vld [vmem:[%s196 + $0x10] sm:$0xff]
      %v207 = vld [vmem:[%s196 + $0x18] sm:$0xff]
      %v208 = vld [vmem:[%s196 + $0x20] sm:$0xff]
      %v209 = vld [vmem:[%s196 + $0x28] sm:$0xff]
      %v210 = vld [vmem:[%s196 + $0x30] sm:$0xff]
      %v211 = vld [vmem:[%s196 + $0x38] sm:$0xff]
      %v212 = vld [vmem:[%s196 + $0x40] sm:$0xff]
      %v213 = vld [vmem:[%s196 + $0x48] sm:$0xff]
      %v214 = vld [vmem:[%s196 + $0x50] sm:$0xff]
      %v215 = vld [vmem:[%s196 + $0x58] sm:$0xff]
      %v216 = vld [vmem:[%s196 + $0x60] sm:$0xff]
      %v217 = vld [vmem:[%s196 + $0x68] sm:$0xff]
      %v218 = vld [vmem:[%s196 + $0x70] sm:$0xff]
      %v219 = vld [vmem:[%s196 + $0x78] sm:$0xff]
      %v220 = vld [vmem:[%s196 + $0x80] sm:$0xff]
      %v221 = vld [vmem:[%s196 + $0x88] sm:$0xff]
      %v222 = vld [vmem:[%s196 + $0x90] sm:$0xff]
      %v223 = vld [vmem:[%s196 + $0x98] sm:$0xff]
      %v224 = vld [vmem:[%s196 + $0xa0] sm:$0xff]
      %v225 = vld [vmem:[%s196 + $0xa8] sm:$0xff]
      %v226 = vld [vmem:[%s196 + $0xb0] sm:$0xff]
      %v227 = vld [vmem:[%s196 + $0xb8] sm:$0xff]
      %v228 = vld [vmem:[%s196 + $0xc0] sm:$0xff]
      %v229 = vld [vmem:[%s196 + $0xc8] sm:$0xff]
      %v230 = vld [vmem:[%s196 + $0xd0] sm:$0xff]
      %v231 = vld [vmem:[%s196 + $0xd8] sm:$0xff]
      %v232 = vld [vmem:[%s196 + $0xe0] sm:$0xff]
      %v233 = vld [vmem:[%s196 + $0xe8] sm:$0xff]
      %v234 = vld [vmem:[%s196 + $0xf0] sm:$0xff]
      %v235 = vld [vmem:[%s196 + $0xf8] sm:$0xff]
      %v236 = vld [vmem:[%s196 + $0x100] sm:$0xff]
      %v237 = vld [vmem:[%s196 + $0x108] sm:$0xff]
      %v238 = vld [vmem:[%s196 + $0x110] sm:$0xff]
      %v239 = vld [vmem:[%s196 + $0x118] sm:$0xff]
      %v240 = vld [vmem:[%s196 + $0x120] sm:$0xff]
      %v241 = vld [vmem:[%s196 + $0x128] sm:$0xff]
      %v242 = vld [vmem:[%s196 + $0x130] sm:$0xff]
      %v243 = vld [vmem:[%s196 + $0x138] sm:$0xff]
      %v244 = vld [vmem:[%s196 + $0x140] sm:$0xff]
      %v245 = vld [vmem:[%s196 + $0x148] sm:$0xff]
      %v246 = vld [vmem:[%s196 + $0x150] sm:$0xff]
      %v247 = vld [vmem:[%s196 + $0x158] sm:$0xff]
      %v248 = vld [vmem:[%s196 + $0x160] sm:$0xff]
      %v249 = vld [vmem:[%s196 + $0x168] sm:$0xff]
      %v250 = vld [vmem:[%s196 + $0x170] sm:$0xff]
      %v251 = vld [vmem:[%s196 + $0x178] sm:$0xff]
      %v252 = vld [vmem:[%s196 + $0x180] sm:$0xff]
      %v253 = vld [vmem:[%s196 + $0x188] sm:$0xff]
      %v254 = vld [vmem:[%s196 + $0x190] sm:$0xff]
      %v255 = vld [vmem:[%s196 + $0x198] sm:$0xff]
      %v256 = vld [vmem:[%s196 + $0x1a0] sm:$0xff]
      %v257 = vld [vmem:[%s196 + $0x1a8] sm:$0xff]
      %v258 = vld [vmem:[%s196 + $0x1b0] sm:$0xff]
      %v259 = vld [vmem:[%s196 + $0x1b8] sm:$0xff]
      %v260 = vld [vmem:[%s196 + $0x1c0] sm:$0xff]
      %v261 = vld [vmem:[%s196 + $0x1c8] sm:$0xff]
      %v262 = vld [vmem:[%s196 + $0x1d0] sm:$0xff]
      %v263 = vld [vmem:[%s196 + $0x1d8] sm:$0xff]
      %v264 = vld [vmem:[%s196 + $0x1e0] sm:$0xff]
      %v265 = vld [vmem:[%s196 + $0x1e8] sm:$0xff]
      %v266 = vld [vmem:[%s196 + $0x1f0] sm:$0xff]
      %v267 = vld [vmem:[%s196 + $0x1f8] sm:$0xff]
      %v268 = vld [vmem:[%s196 + $0x200] sm:$0xff]
      %v269 = vld [vmem:[%s196 + $0x208] sm:$0xff]
      %v270 = vld [vmem:[%s196 + $0x210] sm:$0xff]
      %v271 = vld [vmem:[%s196 + $0x218] sm:$0xff]
      %v272 = vld [vmem:[%s196 + $0x220] sm:$0xff]
      %v273 = vld [vmem:[%s196 + $0x228] sm:$0xff]
      %v274 = vld [vmem:[%s196 + $0x230] sm:$0xff]
      %v275 = vld [vmem:[%s196 + $0x238] sm:$0xff]
      %v276 = vld [vmem:[%s196 + $0x240] sm:$0xff]
      %v277 = vld [vmem:[%s196 + $0x248] sm:$0xff]
      %v278 = vld [vmem:[%s196 + $0x250] sm:$0xff]
      %v279 = vld [vmem:[%s196 + $0x258] sm:$0xff]
      %v280 = vld [vmem:[%s196 + $0x260] sm:$0xff]
      %v281 = vld [vmem:[%s196 + $0x268] sm:$0xff]
      %v282 = vld [vmem:[%s196 + $0x270] sm:$0xff]
      %v283 = vld [vmem:[%s196 + $0x278] sm:$0xff]
      %v284 = vld [vmem:[%s196 + $0x280] sm:$0xff]
      %v285 = vld [vmem:[%s196 + $0x288] sm:$0xff]
      %v286 = vld [vmem:[%s196 + $0x290] sm:$0xff]
      %v287 = vld [vmem:[%s196 + $0x298] sm:$0xff]
      %v288 = vld [vmem:[%s196 + $0x2a0] sm:$0xff]
      %v289 = vld [vmem:[%s196 + $0x2a8] sm:$0xff]
      %v290 = vld [vmem:[%s196 + $0x2b0] sm:$0xff]
      %v291 = vld [vmem:[%s196 + $0x2b8] sm:$0xff]
      %v292 = vld [vmem:[%s196 + $0x2c0] sm:$0xff]
      %v293 = vld [vmem:[%s196 + $0x2c8] sm:$0xff]
      %v294 = vld [vmem:[%s196 + $0x2d0] sm:$0xff]
      %v295 = vld [vmem:[%s196 + $0x2d8] sm:$0xff]
      %v296 = vld [vmem:[%s196 + $0x2e0] sm:$0xff]
      %v297 = vld [vmem:[%s196 + $0x2e8] sm:$0xff]
      %v298 = vld [vmem:[%s196 + $0x2f0] sm:$0xff]
      %v299 = vld [vmem:[%s196 + $0x2f8] sm:$0xff]
      %v300 = vld [vmem:[%s196 + $0x300] sm:$0xff]
      %v301 = vld [vmem:[%s196 + $0x308] sm:$0xff]
      %v302 = vld [vmem:[%s196 + $0x310] sm:$0xff]
      %v303 = vld [vmem:[%s196 + $0x318] sm:$0xff]
      %v304 = vld [vmem:[%s196 + $0x320] sm:$0xff]
      %v305 = vld [vmem:[%s196 + $0x328] sm:$0xff]
      %v306 = vld [vmem:[%s196 + $0x330] sm:$0xff]
      %v307 = vld [vmem:[%s196 + $0x338] sm:$0xff]
      %v308 = vld [vmem:[%s196 + $0x340] sm:$0xff]
      %v309 = vld [vmem:[%s196 + $0x348] sm:$0xff]
      %v310 = vld [vmem:[%s196 + $0x350] sm:$0xff]
      %v311 = vld [vmem:[%s196 + $0x358] sm:$0xff]
      %v312 = vld [vmem:[%s196 + $0x360] sm:$0xff]
      %v313 = vld [vmem:[%s196 + $0x368] sm:$0xff]
      %v314 = vld [vmem:[%s196 + $0x370] sm:$0xff]
      %v315 = vld [vmem:[%s196 + $0x378] sm:$0xff]
      %v316 = vld [vmem:[%s196 + $0x380] sm:$0xff]
      %v317 = vld [vmem:[%s196 + $0x388] sm:$0xff]
      %v318 = vld [vmem:[%s196 + $0x390] sm:$0xff]
      %v319 = vld [vmem:[%s196 + $0x398] sm:$0xff]
      %v320 = vld [vmem:[%s196 + $0x3a0] sm:$0xff]
      %v321 = vld [vmem:[%s196 + $0x3a8] sm:$0xff]
      %v322 = vld [vmem:[%s196 + $0x3b0] sm:$0xff]
      %v323 = vld [vmem:[%s196 + $0x3b8] sm:$0xff]
      %v324 = vld [vmem:[%s196 + $0x3c0] sm:$0xff]
      %v325 = vld [vmem:[%s196 + $0x3c8] sm:$0xff]
      %v326 = vld [vmem:[%s196 + $0x3d0] sm:$0xff]
      %v327 = vld [vmem:[%s196 + $0x3d8] sm:$0xff]
      %v328 = vld [vmem:[%s196 + $0x3e0] sm:$0xff]
      %v329 = vld [vmem:[%s196 + $0x3e8] sm:$0xff]
      %v330 = vld [vmem:[%s196 + $0x3f0] sm:$0xff]
      %v331 = vld [vmem:[%s196 + $0x3f8] sm:$0xff]
      %v332 = vld [vmem:[%s3] sm:$0x3]
      %v334 = vlaneseq
      %v335 = vshrl.u32 %v334, 7
      %v336 = vsub.s32 0, %v335
      %v337 = vrot.slane %v332, %v336
      %v338 = vlaneseq
      %v339 = vshrl.u32 %v338, 7
      %v340 = vsub.s32 1, %v339
      %v341 = vrot.slane %v332, %v340
      %v344 = vmul.f32 %v204, %v337
      %v345 = vmul.f32 %v205, %v341
      %v346 = vmul.f32 %v206, %v337
      %v347 = vmul.f32 %v207, %v341
      %v348 = vmul.f32 %v208, %v337
      %v349 = vmul.f32 %v209, %v341
      %v350 = vmul.f32 %v210, %v337
      %v351 = vmul.f32 %v211, %v341
      %v352 = vmul.f32 %v212, %v337
      %v353 = vmul.f32 %v213, %v341
      %v354 = vmul.f32 %v214, %v337
      %v355 = vmul.f32 %v215, %v341
      %v356 = vmul.f32 %v216, %v337
      %v357 = vmul.f32 %v217, %v341
      %v358 = vmul.f32 %v218, %v337
      %v359 = vmul.f32 %v219, %v341
      %v360 = vmul.f32 %v220, %v337
      %v361 = vmul.f32 %v221, %v341
      %v362 = vmul.f32 %v222, %v337
      %v363 = vmul.f32 %v223, %v341
      %v364 = vmul.f32 %v224, %v337
      %v365 = vmul.f32 %v225, %v341
      %v366 = vmul.f32 %v226, %v337
      %v367 = vmul.f32 %v227, %v341
      %v368 = vmul.f32 %v228, %v337
      %v369 = vmul.f32 %v229, %v341
      %v370 = vmul.f32 %v230, %v337
      %v371 = vmul.f32 %v231, %v341
      %v372 = vmul.f32 %v232, %v337
      %v373 = vmul.f32 %v233, %v341
      %v374 = vmul.f32 %v234, %v337
      %v375 = vmul.f32 %v235, %v341
      %v376 = vmul.f32 %v236, %v337
      %v377 = vmul.f32 %v237, %v341
      %v378 = vmul.f32 %v238, %v337
      %v379 = vmul.f32 %v239, %v341
      %v380 = vmul.f32 %v240, %v337
      %v381 = vmul.f32 %v241, %v341
      %v382 = vmul.f32 %v242, %v337
      %v383 = vmul.f32 %v243, %v341
      %v384 = vmul.f32 %v244, %v337
      %v385 = vmul.f32 %v245, %v341
      %v386 = vmul.f32 %v246, %v337
      %v387 = vmul.f32 %v247, %v341
      %v388 = vmul.f32 %v248, %v337
      %v389 = vmul.f32 %v249, %v341
      %v390 = vmul.f32 %v250, %v337
      %v391 = vmul.f32 %v251, %v341
      %v392 = vmul.f32 %v252, %v337
      %v393 = vmul.f32 %v253, %v341
      %v394 = vmul.f32 %v254, %v337
      %v395 = vmul.f32 %v255, %v341
      %v396 = vmul.f32 %v256, %v337
      %v397 = vmul.f32 %v257, %v341
      %v398 = vmul.f32 %v258, %v337
      %v399 = vmul.f32 %v259, %v341
      %v400 = vmul.f32 %v260, %v337
      %v401 = vmul.f32 %v261, %v341
      %v402 = vmul.f32 %v262, %v337
      %v403 = vmul.f32 %v263, %v341
      %v404 = vmul.f32 %v264, %v337
      %v405 = vmul.f32 %v265, %v341
      %v406 = vmul.f32 %v266, %v337
      %v407 = vmul.f32 %v267, %v341
      %v408 = vmul.f32 %v268, %v337
      %v409 = vmul.f32 %v269, %v341
      %v410 = vmul.f32 %v270, %v337
      %v411 = vmul.f32 %v271, %v341
      %v412 = vmul.f32 %v272, %v337
      %v413 = vmul.f32 %v273, %v341
      %v414 = vmul.f32 %v274, %v337
      %v415 = vmul.f32 %v275, %v341
      %v416 = vmul.f32 %v276, %v337
      %v417 = vmul.f32 %v277, %v341
      %v418 = vmul.f32 %v278, %v337
      %v419 = vmul.f32 %v279, %v341
      %v420 = vmul.f32 %v280, %v337
      %v421 = vmul.f32 %v281, %v341
      %v422 = vmul.f32 %v282, %v337
      %v423 = vmul.f32 %v283, %v341
      %v424 = vmul.f32 %v284, %v337
      %v425 = vmul.f32 %v285, %v341
      %v426 = vmul.f32 %v286, %v337
      %v427 = vmul.f32 %v287, %v341
      %v428 = vmul.f32 %v288, %v337
      %v429 = vmul.f32 %v289, %v341
      %v430 = vmul.f32 %v290, %v337
      %v431 = vmul.f32 %v291, %v341
      %v432 = vmul.f32 %v292, %v337
      %v433 = vmul.f32 %v293, %v341
      %v434 = vmul.f32 %v294, %v337
      %v435 = vmul.f32 %v295, %v341
      %v436 = vmul.f32 %v296, %v337
      %v437 = vmul.f32 %v297, %v341
      %v438 = vmul.f32 %v298, %v337
      %v439 = vmul.f32 %v299, %v341
      %v440 = vmul.f32 %v300, %v337
      %v441 = vmul.f32 %v301, %v341
      %v442 = vmul.f32 %v302, %v337
      %v443 = vmul.f32 %v303, %v341
      %v444 = vmul.f32 %v304, %v337
      %v445 = vmul.f32 %v305, %v341
      %v446 = vmul.f32 %v306, %v337
      %v447 = vmul.f32 %v307, %v341
      %v448 = vmul.f32 %v308, %v337
      %v449 = vmul.f32 %v309, %v341
      %v450 = vmul.f32 %v310, %v337
      %v451 = vmul.f32 %v311, %v341
      %v452 = vmul.f32 %v312, %v337
      %v453 = vmul.f32 %v313, %v341
      %v454 = vmul.f32 %v314, %v337
      %v455 = vmul.f32 %v315, %v341
      %v456 = vmul.f32 %v316, %v337
      %v457 = vmul.f32 %v317, %v341
      %v458 = vmul.f32 %v318, %v337
      %v459 = vmul.f32 %v319, %v341
      %v460 = vmul.f32 %v320, %v337
      %v461 = vmul.f32 %v321, %v341
      %v462 = vmul.f32 %v322, %v337
      %v463 = vmul.f32 %v323, %v341
      %v464 = vmul.f32 %v324, %v337
      %v465 = vmul.f32 %v325, %v341
      %v466 = vmul.f32 %v326, %v337
      %v467 = vmul.f32 %v327, %v341
      %v468 = vmul.f32 %v328, %v337
      %v469 = vmul.f32 %v329, %v341
      %v470 = vmul.f32 %v330, %v337
      %v471 = vmul.f32 %v331, %v341
      %vm472 = vcmask 130048
      %v473 = vsel %vm472, %v345, 0.0
      %v474 = vadd.f32 %v344, %v473
      %475 = vadd.xlane.f32.xlu0 %v474
      %v476 = vpop.xlane.xlu0 %475
      %v477 = vsel %vm472, %v347, 0.0
      %v478 = vadd.f32 %v346, %v477
      %479 = vadd.xlane.f32.xlu0 %v478
      %v480 = vpop.xlane.xlu0 %479
      %v481 = vsel %vm472, %v349, 0.0
      %v482 = vadd.f32 %v348, %v481
      %483 = vadd.xlane.f32.xlu0 %v482
      %v484 = vpop.xlane.xlu0 %483
      %v485 = vsel %vm472, %v351, 0.0
      %v486 = vadd.f32 %v350, %v485
      %487 = vadd.xlane.f32.xlu0 %v486
      %v488 = vpop.xlane.xlu0 %487
      %v489 = vsel %vm472, %v353, 0.0
      %v490 = vadd.f32 %v352, %v489
      %491 = vadd.xlane.f32.xlu0 %v490
      %v492 = vpop.xlane.xlu0 %491
      %v493 = vsel %vm472, %v355, 0.0
      %v494 = vadd.f32 %v354, %v493
      %495 = vadd.xlane.f32.xlu0 %v494
      %v496 = vpop.xlane.xlu0 %495
      %v497 = vsel %vm472, %v357, 0.0
      %v498 = vadd.f32 %v356, %v497
      %499 = vadd.xlane.f32.xlu0 %v498
      %v500 = vpop.xlane.xlu0 %499
      %v501 = vsel %vm472, %v359, 0.0
      %v502 = vadd.f32 %v358, %v501
      %503 = vadd.xlane.f32.xlu0 %v502
      %v504 = vpop.xlane.xlu0 %503
      %v505 = vsel %vm472, %v361, 0.0
      %v506 = vadd.f32 %v360, %v505
      %507 = vadd.xlane.f32.xlu0 %v506
      %v508 = vpop.xlane.xlu0 %507
      %v509 = vsel %vm472, %v363, 0.0
      %v510 = vadd.f32 %v362, %v509
      %511 = vadd.xlane.f32.xlu0 %v510
      %v512 = vpop.xlane.xlu0 %511
      %v513 = vsel %vm472, %v365, 0.0
      %v514 = vadd.f32 %v364, %v513
      %515 = vadd.xlane.f32.xlu0 %v514
      %v516 = vpop.xlane.xlu0 %515
      %v517 = vsel %vm472, %v367, 0.0
      %v518 = vadd.f32 %v366, %v517
      %519 = vadd.xlane.f32.xlu0 %v518
      %v520 = vpop.xlane.xlu0 %519
      %v521 = vsel %vm472, %v369, 0.0
      %v522 = vadd.f32 %v368, %v521
      %523 = vadd.xlane.f32.xlu0 %v522
      %v524 = vpop.xlane.xlu0 %523
      %v525 = vsel %vm472, %v371, 0.0
      %v526 = vadd.f32 %v370, %v525
      %527 = vadd.xlane.f32.xlu0 %v526
      %v528 = vpop.xlane.xlu0 %527
      %v529 = vsel %vm472, %v373, 0.0
      %v530 = vadd.f32 %v372, %v529
      %531 = vadd.xlane.f32.xlu0 %v530
      %v532 = vpop.xlane.xlu0 %531
      %v533 = vsel %vm472, %v375, 0.0
      %v534 = vadd.f32 %v374, %v533
      %535 = vadd.xlane.f32.xlu0 %v534
      %v536 = vpop.xlane.xlu0 %535
      %v537 = vsel %vm472, %v377, 0.0
      %v538 = vadd.f32 %v376, %v537
      %539 = vadd.xlane.f32.xlu0 %v538
      %v540 = vpop.xlane.xlu0 %539
      %v541 = vsel %vm472, %v379, 0.0
      %v542 = vadd.f32 %v378, %v541
      %543 = vadd.xlane.f32.xlu0 %v542
      %v544 = vpop.xlane.xlu0 %543
      %v545 = vsel %vm472, %v381, 0.0
      %v546 = vadd.f32 %v380, %v545
      %547 = vadd.xlane.f32.xlu0 %v546
      %v548 = vpop.xlane.xlu0 %547
      %v549 = vsel %vm472, %v383, 0.0
      %v550 = vadd.f32 %v382, %v549
      %551 = vadd.xlane.f32.xlu0 %v550
      %v552 = vpop.xlane.xlu0 %551
      %v553 = vsel %vm472, %v385, 0.0
      %v554 = vadd.f32 %v384, %v553
      %555 = vadd.xlane.f32.xlu0 %v554
      %v556 = vpop.xlane.xlu0 %555
      %v557 = vsel %vm472, %v387, 0.0
      %v558 = vadd.f32 %v386, %v557
      %559 = vadd.xlane.f32.xlu0 %v558
      %v560 = vpop.xlane.xlu0 %559
      %v561 = vsel %vm472, %v389, 0.0
      %v562 = vadd.f32 %v388, %v561
      %563 = vadd.xlane.f32.xlu0 %v562
      %v564 = vpop.xlane.xlu0 %563
      %v565 = vsel %vm472, %v391, 0.0
      %v566 = vadd.f32 %v390, %v565
      %567 = vadd.xlane.f32.xlu0 %v566
      %v568 = vpop.xlane.xlu0 %567
      %v569 = vsel %vm472, %v393, 0.0
      %v570 = vadd.f32 %v392, %v569
      %571 = vadd.xlane.f32.xlu0 %v570
      %v572 = vpop.xlane.xlu0 %571
      %v573 = vsel %vm472, %v395, 0.0
      %v574 = vadd.f32 %v394, %v573
      %575 = vadd.xlane.f32.xlu0 %v574
      %v576 = vpop.xlane.xlu0 %575
      %v577 = vsel %vm472, %v397, 0.0
      %v578 = vadd.f32 %v396, %v577
      %579 = vadd.xlane.f32.xlu0 %v578
      %v580 = vpop.xlane.xlu0 %579
      %v581 = vsel %vm472, %v399, 0.0
      %v582 = vadd.f32 %v398, %v581
      %583 = vadd.xlane.f32.xlu0 %v582
      %v584 = vpop.xlane.xlu0 %583
      %v585 = vsel %vm472, %v401, 0.0
      %v586 = vadd.f32 %v400, %v585
      %587 = vadd.xlane.f32.xlu0 %v586
      %v588 = vpop.xlane.xlu0 %587
      %v589 = vsel %vm472, %v403, 0.0
      %v590 = vadd.f32 %v402, %v589
      %591 = vadd.xlane.f32.xlu0 %v590
      %v592 = vpop.xlane.xlu0 %591
      %v593 = vsel %vm472, %v405, 0.0
      %v594 = vadd.f32 %v404, %v593
      %595 = vadd.xlane.f32.xlu0 %v594
      %v596 = vpop.xlane.xlu0 %595
      %v597 = vsel %vm472, %v407, 0.0
      %v598 = vadd.f32 %v406, %v597
      %599 = vadd.xlane.f32.xlu0 %v598
      %v600 = vpop.xlane.xlu0 %599
      %v601 = vsel %vm472, %v409, 0.0
      %v602 = vadd.f32 %v408, %v601
      %603 = vadd.xlane.f32.xlu0 %v602
      %v604 = vpop.xlane.xlu0 %603
      %v605 = vsel %vm472, %v411, 0.0
      %v606 = vadd.f32 %v410, %v605
      %607 = vadd.xlane.f32.xlu0 %v606
      %v608 = vpop.xlane.xlu0 %607
      %v609 = vsel %vm472, %v413, 0.0
      %v610 = vadd.f32 %v412, %v609
      %611 = vadd.xlane.f32.xlu0 %v610
      %v612 = vpop.xlane.xlu0 %611
      %v613 = vsel %vm472, %v415, 0.0
      %v614 = vadd.f32 %v414, %v613
      %615 = vadd.xlane.f32.xlu0 %v614
      %v616 = vpop.xlane.xlu0 %615
      %v617 = vsel %vm472, %v417, 0.0
      %v618 = vadd.f32 %v416, %v617
      %619 = vadd.xlane.f32.xlu0 %v618
      %v620 = vpop.xlane.xlu0 %619
      %v621 = vsel %vm472, %v419, 0.0
      %v622 = vadd.f32 %v418, %v621
      %623 = vadd.xlane.f32.xlu0 %v622
      %v624 = vpop.xlane.xlu0 %623
      %v625 = vsel %vm472, %v421, 0.0
      %v626 = vadd.f32 %v420, %v625
      %627 = vadd.xlane.f32.xlu0 %v626
      %v628 = vpop.xlane.xlu0 %627
      %v629 = vsel %vm472, %v423, 0.0
      %v630 = vadd.f32 %v422, %v629
      %631 = vadd.xlane.f32.xlu0 %v630
      %v632 = vpop.xlane.xlu0 %631
      %v633 = vsel %vm472, %v425, 0.0
      %v634 = vadd.f32 %v424, %v633
      %635 = vadd.xlane.f32.xlu0 %v634
      %v636 = vpop.xlane.xlu0 %635
      %v637 = vsel %vm472, %v427, 0.0
      %v638 = vadd.f32 %v426, %v637
      %639 = vadd.xlane.f32.xlu0 %v638
      %v640 = vpop.xlane.xlu0 %639
      %v641 = vsel %vm472, %v429, 0.0
      %v642 = vadd.f32 %v428, %v641
      %643 = vadd.xlane.f32.xlu0 %v642
      %v644 = vpop.xlane.xlu0 %643
      %v645 = vsel %vm472, %v431, 0.0
      %v646 = vadd.f32 %v430, %v645
      %647 = vadd.xlane.f32.xlu0 %v646
      %v648 = vpop.xlane.xlu0 %647
      %v649 = vsel %vm472, %v433, 0.0
      %v650 = vadd.f32 %v432, %v649
      %651 = vadd.xlane.f32.xlu0 %v650
      %v652 = vpop.xlane.xlu0 %651
      %v653 = vsel %vm472, %v435, 0.0
      %v654 = vadd.f32 %v434, %v653
      %655 = vadd.xlane.f32.xlu0 %v654
      %v656 = vpop.xlane.xlu0 %655
      %v657 = vsel %vm472, %v437, 0.0
      %v658 = vadd.f32 %v436, %v657
      %659 = vadd.xlane.f32.xlu0 %v658
      %v660 = vpop.xlane.xlu0 %659
      %v661 = vsel %vm472, %v439, 0.0
      %v662 = vadd.f32 %v438, %v661
      %663 = vadd.xlane.f32.xlu0 %v662
      %v664 = vpop.xlane.xlu0 %663
      %v665 = vsel %vm472, %v441, 0.0
      %v666 = vadd.f32 %v440, %v665
      %667 = vadd.xlane.f32.xlu0 %v666
      %v668 = vpop.xlane.xlu0 %667
      %v669 = vsel %vm472, %v443, 0.0
      %v670 = vadd.f32 %v442, %v669
      %671 = vadd.xlane.f32.xlu0 %v670
      %v672 = vpop.xlane.xlu0 %671
      %v673 = vsel %vm472, %v445, 0.0
      %v674 = vadd.f32 %v444, %v673
      %675 = vadd.xlane.f32.xlu0 %v674
      %v676 = vpop.xlane.xlu0 %675
      %v677 = vsel %vm472, %v447, 0.0
      %v678 = vadd.f32 %v446, %v677
      %679 = vadd.xlane.f32.xlu0 %v678
      %v680 = vpop.xlane.xlu0 %679
      %v681 = vsel %vm472, %v449, 0.0
      %v682 = vadd.f32 %v448, %v681
      %683 = vadd.xlane.f32.xlu0 %v682
      %v684 = vpop.xlane.xlu0 %683
      %v685 = vsel %vm472, %v451, 0.0
      %v686 = vadd.f32 %v450, %v685
      %687 = vadd.xlane.f32.xlu0 %v686
      %v688 = vpop.xlane.xlu0 %687
      %v689 = vsel %vm472, %v453, 0.0
      %v690 = vadd.f32 %v452, %v689
      %691 = vadd.xlane.f32.xlu0 %v690
      %v692 = vpop.xlane.xlu0 %691
      %v693 = vsel %vm472, %v455, 0.0
      %v694 = vadd.f32 %v454, %v693
      %695 = vadd.xlane.f32.xlu0 %v694
      %v696 = vpop.xlane.xlu0 %695
      %v697 = vsel %vm472, %v457, 0.0
      %v698 = vadd.f32 %v456, %v697
      %699 = vadd.xlane.f32.xlu0 %v698
      %v700 = vpop.xlane.xlu0 %699
      %v701 = vsel %vm472, %v459, 0.0
      %v702 = vadd.f32 %v458, %v701
      %703 = vadd.xlane.f32.xlu0 %v702
      %v704 = vpop.xlane.xlu0 %703
      %v705 = vsel %vm472, %v461, 0.0
      %v706 = vadd.f32 %v460, %v705
      %707 = vadd.xlane.f32.xlu0 %v706
      %v708 = vpop.xlane.xlu0 %707
      %v709 = vsel %vm472, %v463, 0.0
      %v710 = vadd.f32 %v462, %v709
      %711 = vadd.xlane.f32.xlu0 %v710
      %v712 = vpop.xlane.xlu0 %711
      %v713 = vsel %vm472, %v465, 0.0
      %v714 = vadd.f32 %v464, %v713
      %715 = vadd.xlane.f32.xlu0 %v714
      %v716 = vpop.xlane.xlu0 %715
      %v717 = vsel %vm472, %v467, 0.0
      %v718 = vadd.f32 %v466, %v717
      %719 = vadd.xlane.f32.xlu0 %v718
      %v720 = vpop.xlane.xlu0 %719
      %v721 = vsel %vm472, %v469, 0.0
      %v722 = vadd.f32 %v468, %v721
      %723 = vadd.xlane.f32.xlu0 %v722
      %v724 = vpop.xlane.xlu0 %723
      %v725 = vsel %vm472, %v471, 0.0
      %v726 = vadd.f32 %v470, %v725
      %727 = vadd.xlane.f32.xlu0 %v726
      %v728 = vpop.xlane.xlu0 %727
      %v729 = vmul.f32 %v476, 0.0052083335
      %v730 = vmul.f32 %v480, 0.0052083335
      %v731 = vmul.f32 %v484, 0.0052083335
      %v732 = vmul.f32 %v488, 0.0052083335
      %v733 = vmul.f32 %v492, 0.0052083335
      %v734 = vmul.f32 %v496, 0.0052083335
      %v735 = vmul.f32 %v500, 0.0052083335
      %v736 = vmul.f32 %v504, 0.0052083335
      %v737 = vmul.f32 %v508, 0.0052083335
      %v738 = vmul.f32 %v512, 0.0052083335
      %v739 = vmul.f32 %v516, 0.0052083335
      %v740 = vmul.f32 %v520, 0.0052083335
      %v741 = vmul.f32 %v524, 0.0052083335
      %v742 = vmul.f32 %v528, 0.0052083335
      %v743 = vmul.f32 %v532, 0.0052083335
      %v744 = vmul.f32 %v536, 0.0052083335
      %v745 = vmul.f32 %v540, 0.0052083335
      %v746 = vmul.f32 %v544, 0.0052083335
      %v747 = vmul.f32 %v548, 0.0052083335
      %v748 = vmul.f32 %v552, 0.0052083335
      %v749 = vmul.f32 %v556, 0.0052083335
      %v750 = vmul.f32 %v560, 0.0052083335
      %v751 = vmul.f32 %v564, 0.0052083335
      %v752 = vmul.f32 %v568, 0.0052083335
      %v753 = vmul.f32 %v572, 0.0052083335
      %v754 = vmul.f32 %v576, 0.0052083335
      %v755 = vmul.f32 %v580, 0.0052083335
      %v756 = vmul.f32 %v584, 0.0052083335
      %v757 = vmul.f32 %v588, 0.0052083335
      %v758 = vmul.f32 %v592, 0.0052083335
      %v759 = vmul.f32 %v596, 0.0052083335
      %v760 = vmul.f32 %v600, 0.0052083335
      %v761 = vmul.f32 %v604, 0.0052083335
      %v762 = vmul.f32 %v608, 0.0052083335
      %v763 = vmul.f32 %v612, 0.0052083335
      %v764 = vmul.f32 %v616, 0.0052083335
      %v765 = vmul.f32 %v620, 0.0052083335
      %v766 = vmul.f32 %v624, 0.0052083335
      %v767 = vmul.f32 %v628, 0.0052083335
      %v768 = vmul.f32 %v632, 0.0052083335
      %v769 = vmul.f32 %v636, 0.0052083335
      %v770 = vmul.f32 %v640, 0.0052083335
      %v771 = vmul.f32 %v644, 0.0052083335
      %v772 = vmul.f32 %v648, 0.0052083335
      %v773 = vmul.f32 %v652, 0.0052083335
      %v774 = vmul.f32 %v656, 0.0052083335
      %v775 = vmul.f32 %v660, 0.0052083335
      %v776 = vmul.f32 %v664, 0.0052083335
      %v777 = vmul.f32 %v668, 0.0052083335
      %v778 = vmul.f32 %v672, 0.0052083335
      %v779 = vmul.f32 %v676, 0.0052083335
      %v780 = vmul.f32 %v680, 0.0052083335
      %v781 = vmul.f32 %v684, 0.0052083335
      %v782 = vmul.f32 %v688, 0.0052083335
      %v783 = vmul.f32 %v692, 0.0052083335
      %v784 = vmul.f32 %v696, 0.0052083335
      %v785 = vmul.f32 %v700, 0.0052083335
      %v786 = vmul.f32 %v704, 0.0052083335
      %v787 = vmul.f32 %v708, 0.0052083335
      %v788 = vmul.f32 %v712, 0.0052083335
      %v789 = vmul.f32 %v716, 0.0052083335
      %v790 = vmul.f32 %v720, 0.0052083335
      %v791 = vmul.f32 %v724, 0.0052083335
      %v792 = vmul.f32 %v728, 0.0052083335
      %v793 = vsub.f32 %v204, %v729
      %v794 = vsub.f32 %v205, %v729
      %v795 = vsub.f32 %v206, %v730
      %v796 = vsub.f32 %v207, %v730
      %v797 = vsub.f32 %v208, %v731
      %v798 = vsub.f32 %v209, %v731
      %v799 = vsub.f32 %v210, %v732
      %v800 = vsub.f32 %v211, %v732
      %v801 = vsub.f32 %v212, %v733
      %v802 = vsub.f32 %v213, %v733
      %v803 = vsub.f32 %v214, %v734
      %v804 = vsub.f32 %v215, %v734
      %v805 = vsub.f32 %v216, %v735
      %v806 = vsub.f32 %v217, %v735
      %v807 = vsub.f32 %v218, %v736
      %v808 = vsub.f32 %v219, %v736
      %v809 = vsub.f32 %v220, %v737
      %v810 = vsub.f32 %v221, %v737
      %v811 = vsub.f32 %v222, %v738
      %v812 = vsub.f32 %v223, %v738
      %v813 = vsub.f32 %v224, %v739
      %v814 = vsub.f32 %v225, %v739
      %v815 = vsub.f32 %v226, %v740
      %v816 = vsub.f32 %v227, %v740
      %v817 = vsub.f32 %v228, %v741
      %v818 = vsub.f32 %v229, %v741
      %v819 = vsub.f32 %v230, %v742
      %v820 = vsub.f32 %v231, %v742
      %v821 = vsub.f32 %v232, %v743
      %v822 = vsub.f32 %v233, %v743
      %v823 = vsub.f32 %v234, %v744
      %v824 = vsub.f32 %v235, %v744
      %v825 = vsub.f32 %v236, %v745
      %v826 = vsub.f32 %v237, %v745
      %v827 = vsub.f32 %v238, %v746
      %v828 = vsub.f32 %v239, %v746
      %v829 = vsub.f32 %v240, %v747
      %v830 = vsub.f32 %v241, %v747
      %v831 = vsub.f32 %v242, %v748
      %v832 = vsub.f32 %v243, %v748
      %v833 = vsub.f32 %v244, %v749
      %v834 = vsub.f32 %v245, %v749
      %v835 = vsub.f32 %v246, %v750
      %v836 = vsub.f32 %v247, %v750
      %v837 = vsub.f32 %v248, %v751
      %v838 = vsub.f32 %v249, %v751
      %v839 = vsub.f32 %v250, %v752
      %v840 = vsub.f32 %v251, %v752
      %v841 = vsub.f32 %v252, %v753
      %v842 = vsub.f32 %v253, %v753
      %v843 = vsub.f32 %v254, %v754
      %v844 = vsub.f32 %v255, %v754
      %v845 = vsub.f32 %v256, %v755
      %v846 = vsub.f32 %v257, %v755
      %v847 = vsub.f32 %v258, %v756
      %v848 = vsub.f32 %v259, %v756
      %v849 = vsub.f32 %v260, %v757
      %v850 = vsub.f32 %v261, %v757
      %v851 = vsub.f32 %v262, %v758
      %v852 = vsub.f32 %v263, %v758
      %v853 = vsub.f32 %v264, %v759
      %v854 = vsub.f32 %v265, %v759
      %v855 = vsub.f32 %v266, %v760
      %v856 = vsub.f32 %v267, %v760
      %v857 = vsub.f32 %v268, %v761
      %v858 = vsub.f32 %v269, %v761
      %v859 = vsub.f32 %v270, %v762
      %v860 = vsub.f32 %v271, %v762
      %v861 = vsub.f32 %v272, %v763
      %v862 = vsub.f32 %v273, %v763
      %v863 = vsub.f32 %v274, %v764
      %v864 = vsub.f32 %v275, %v764
      %v865 = vsub.f32 %v276, %v765
      %v866 = vsub.f32 %v277, %v765
      %v867 = vsub.f32 %v278, %v766
      %v868 = vsub.f32 %v279, %v766
      %v869 = vsub.f32 %v280, %v767
      %v870 = vsub.f32 %v281, %v767
      %v871 = vsub.f32 %v282, %v768
      %v872 = vsub.f32 %v283, %v768
      %v873 = vsub.f32 %v284, %v769
      %v874 = vsub.f32 %v285, %v769
      %v875 = vsub.f32 %v286, %v770
      %v876 = vsub.f32 %v287, %v770
      %v877 = vsub.f32 %v288, %v771
      %v878 = vsub.f32 %v289, %v771
      %v879 = vsub.f32 %v290, %v772
      %v880 = vsub.f32 %v291, %v772
      %v881 = vsub.f32 %v292, %v773
      %v882 = vsub.f32 %v293, %v773
      %v883 = vsub.f32 %v294, %v774
      %v884 = vsub.f32 %v295, %v774
      %v885 = vsub.f32 %v296, %v775
      %v886 = vsub.f32 %v297, %v775
      %v887 = vsub.f32 %v298, %v776
      %v888 = vsub.f32 %v299, %v776
      %v889 = vsub.f32 %v300, %v777
      %v890 = vsub.f32 %v301, %v777
      %v891 = vsub.f32 %v302, %v778
      %v892 = vsub.f32 %v303, %v778
      %v893 = vsub.f32 %v304, %v779
      %v894 = vsub.f32 %v305, %v779
      %v895 = vsub.f32 %v306, %v780
      %v896 = vsub.f32 %v307, %v780
      %v897 = vsub.f32 %v308, %v781
      %v898 = vsub.f32 %v309, %v781
      %v899 = vsub.f32 %v310, %v782
      %v900 = vsub.f32 %v311, %v782
      %v901 = vsub.f32 %v312, %v783
      %v902 = vsub.f32 %v313, %v783
      %v903 = vsub.f32 %v314, %v784
      %v904 = vsub.f32 %v315, %v784
      %v905 = vsub.f32 %v316, %v785
      %v906 = vsub.f32 %v317, %v785
      %v907 = vsub.f32 %v318, %v786
      %v908 = vsub.f32 %v319, %v786
      %v909 = vsub.f32 %v320, %v787
      %v910 = vsub.f32 %v321, %v787
      %v911 = vsub.f32 %v322, %v788
      %v912 = vsub.f32 %v323, %v788
      %v913 = vsub.f32 %v324, %v789
      %v914 = vsub.f32 %v325, %v789
      %v915 = vsub.f32 %v326, %v790
      %v916 = vsub.f32 %v327, %v790
      %v917 = vsub.f32 %v328, %v791
      %v918 = vsub.f32 %v329, %v791
      %v919 = vsub.f32 %v330, %v792
      %v920 = vsub.f32 %v331, %v792
      %v921 = vmul.f32 %v793, %v793
      %v922 = vmul.f32 %v794, %v794
      %v923 = vmul.f32 %v795, %v795
      %v924 = vmul.f32 %v796, %v796
      %v925 = vmul.f32 %v797, %v797
      %v926 = vmul.f32 %v798, %v798
      %v927 = vmul.f32 %v799, %v799
      %v928 = vmul.f32 %v800, %v800
      %v929 = vmul.f32 %v801, %v801
      %v930 = vmul.f32 %v802, %v802
      %v931 = vmul.f32 %v803, %v803
      %v932 = vmul.f32 %v804, %v804
      %v933 = vmul.f32 %v805, %v805
      %v934 = vmul.f32 %v806, %v806
      %v935 = vmul.f32 %v807, %v807
      %v936 = vmul.f32 %v808, %v808
      %v937 = vmul.f32 %v809, %v809
      %v938 = vmul.f32 %v810, %v810
      %v939 = vmul.f32 %v811, %v811
      %v940 = vmul.f32 %v812, %v812
      %v941 = vmul.f32 %v813, %v813
      %v942 = vmul.f32 %v814, %v814
      %v943 = vmul.f32 %v815, %v815
      %v944 = vmul.f32 %v816, %v816
      %v945 = vmul.f32 %v817, %v817
      %v946 = vmul.f32 %v818, %v818
      %v947 = vmul.f32 %v819, %v819
      %v948 = vmul.f32 %v820, %v820
      %v949 = vmul.f32 %v821, %v821
      %v950 = vmul.f32 %v822, %v822
      %v951 = vmul.f32 %v823, %v823
      %v952 = vmul.f32 %v824, %v824
      %v953 = vmul.f32 %v825, %v825
      %v954 = vmul.f32 %v826, %v826
      %v955 = vmul.f32 %v827, %v827
      %v956 = vmul.f32 %v828, %v828
      %v957 = vmul.f32 %v829, %v829
      %v958 = vmul.f32 %v830, %v830
      %v959 = vmul.f32 %v831, %v831
      %v960 = vmul.f32 %v832, %v832
      %v961 = vmul.f32 %v833, %v833
      %v962 = vmul.f32 %v834, %v834
      %v963 = vmul.f32 %v835, %v835
      %v964 = vmul.f32 %v836, %v836
      %v965 = vmul.f32 %v837, %v837
      %v966 = vmul.f32 %v838, %v838
      %v967 = vmul.f32 %v839, %v839
      %v968 = vmul.f32 %v840, %v840
      %v969 = vmul.f32 %v841, %v841
      %v970 = vmul.f32 %v842, %v842
      %v971 = vmul.f32 %v843, %v843
      %v972 = vmul.f32 %v844, %v844
      %v973 = vmul.f32 %v845, %v845
      %v974 = vmul.f32 %v846, %v846
      %v975 = vmul.f32 %v847, %v847
      %v976 = vmul.f32 %v848, %v848
      %v977 = vmul.f32 %v849, %v849
      %v978 = vmul.f32 %v850, %v850
      %v979 = vmul.f32 %v851, %v851
      %v980 = vmul.f32 %v852, %v852
      %v981 = vmul.f32 %v853, %v853
      %v982 = vmul.f32 %v854, %v854
      %v983 = vmul.f32 %v855, %v855
      %v984 = vmul.f32 %v856, %v856
      %v985 = vmul.f32 %v857, %v857
      %v986 = vmul.f32 %v858, %v858
      %v987 = vmul.f32 %v859, %v859
      %v988 = vmul.f32 %v860, %v860
      %v989 = vmul.f32 %v861, %v861
      %v990 = vmul.f32 %v862, %v862
      %v991 = vmul.f32 %v863, %v863
      %v992 = vmul.f32 %v864, %v864
      %v993 = vmul.f32 %v865, %v865
      %v994 = vmul.f32 %v866, %v866
      %v995 = vmul.f32 %v867, %v867
      %v996 = vmul.f32 %v868, %v868
      %v997 = vmul.f32 %v869, %v869
      %v998 = vmul.f32 %v870, %v870
      %v999 = vmul.f32 %v871, %v871
      %v1000 = vmul.f32 %v872, %v872
      %v1001 = vmul.f32 %v873, %v873
      %v1002 = vmul.f32 %v874, %v874
      %v1003 = vmul.f32 %v875, %v875
      %v1004 = vmul.f32 %v876, %v876
      %v1005 = vmul.f32 %v877, %v877
      %v1006 = vmul.f32 %v878, %v878
      %v1007 = vmul.f32 %v879, %v879
      %v1008 = vmul.f32 %v880, %v880
      %v1009 = vmul.f32 %v881, %v881
      %v1010 = vmul.f32 %v882, %v882
      %v1011 = vmul.f32 %v883, %v883
      %v1012 = vmul.f32 %v884, %v884
      %v1013 = vmul.f32 %v885, %v885
      %v1014 = vmul.f32 %v886, %v886
      %v1015 = vmul.f32 %v887, %v887
      %v1016 = vmul.f32 %v888, %v888
      %v1017 = vmul.f32 %v889, %v889
      %v1018 = vmul.f32 %v890, %v890
      %v1019 = vmul.f32 %v891, %v891
      %v1020 = vmul.f32 %v892, %v892
      %v1021 = vmul.f32 %v893, %v893
      %v1022 = vmul.f32 %v894, %v894
      %v1023 = vmul.f32 %v895, %v895
      %v1024 = vmul.f32 %v896, %v896
      %v1025 = vmul.f32 %v897, %v897
      %v1026 = vmul.f32 %v898, %v898
      %v1027 = vmul.f32 %v899, %v899
      %v1028 = vmul.f32 %v900, %v900
      %v1029 = vmul.f32 %v901, %v901
      %v1030 = vmul.f32 %v902, %v902
      %v1031 = vmul.f32 %v903, %v903
      %v1032 = vmul.f32 %v904, %v904
      %v1033 = vmul.f32 %v905, %v905
      %v1034 = vmul.f32 %v906, %v906
      %v1035 = vmul.f32 %v907, %v907
      %v1036 = vmul.f32 %v908, %v908
      %v1037 = vmul.f32 %v909, %v909
      %v1038 = vmul.f32 %v910, %v910
      %v1039 = vmul.f32 %v911, %v911
      %v1040 = vmul.f32 %v912, %v912
      %v1041 = vmul.f32 %v913, %v913
      %v1042 = vmul.f32 %v914, %v914
      %v1043 = vmul.f32 %v915, %v915
      %v1044 = vmul.f32 %v916, %v916
      %v1045 = vmul.f32 %v917, %v917
      %v1046 = vmul.f32 %v918, %v918
      %v1047 = vmul.f32 %v919, %v919
      %v1048 = vmul.f32 %v920, %v920
      %v1049 = vmul.f32 %v921, %v337
      %v1050 = vmul.f32 %v922, %v341
      %v1051 = vmul.f32 %v923, %v337
      %v1052 = vmul.f32 %v924, %v341
      %v1053 = vmul.f32 %v925, %v337
      %v1054 = vmul.f32 %v926, %v341
      %v1055 = vmul.f32 %v927, %v337
      %v1056 = vmul.f32 %v928, %v341
      %v1057 = vmul.f32 %v929, %v337
      %v1058 = vmul.f32 %v930, %v341
      %v1059 = vmul.f32 %v931, %v337
      %v1060 = vmul.f32 %v932, %v341
      %v1061 = vmul.f32 %v933, %v337
      %v1062 = vmul.f32 %v934, %v341
      %v1063 = vmul.f32 %v935, %v337
      %v1064 = vmul.f32 %v936, %v341
      %v1065 = vmul.f32 %v937, %v337
      %v1066 = vmul.f32 %v938, %v341
      %v1067 = vmul.f32 %v939, %v337
      %v1068 = vmul.f32 %v940, %v341
      %v1069 = vmul.f32 %v941, %v337
      %v1070 = vmul.f32 %v942, %v341
      %v1071 = vmul.f32 %v943, %v337
      %v1072 = vmul.f32 %v944, %v341
      %v1073 = vmul.f32 %v945, %v337
      %v1074 = vmul.f32 %v946, %v341
      %v1075 = vmul.f32 %v947, %v337
      %v1076 = vmul.f32 %v948, %v341
      %v1077 = vmul.f32 %v949, %v337
      %v1078 = vmul.f32 %v950, %v341
      %v1079 = vmul.f32 %v951, %v337
      %v1080 = vmul.f32 %v952, %v341
      %v1081 = vmul.f32 %v953, %v337
      %v1082 = vmul.f32 %v954, %v341
      %v1083 = vmul.f32 %v955, %v337
      %v1084 = vmul.f32 %v956, %v341
      %v1085 = vmul.f32 %v957, %v337
      %v1086 = vmul.f32 %v958, %v341
      %v1087 = vmul.f32 %v959, %v337
      %v1088 = vmul.f32 %v960, %v341
      %v1089 = vmul.f32 %v961, %v337
      %v1090 = vmul.f32 %v962, %v341
      %v1091 = vmul.f32 %v963, %v337
      %v1092 = vmul.f32 %v964, %v341
      %v1093 = vmul.f32 %v965, %v337
      %v1094 = vmul.f32 %v966, %v341
      %v1095 = vmul.f32 %v967, %v337
      %v1096 = vmul.f32 %v968, %v341
      %v1097 = vmul.f32 %v969, %v337
      %v1098 = vmul.f32 %v970, %v341
      %v1099 = vmul.f32 %v971, %v337
      %v1100 = vmul.f32 %v972, %v341
      %v1101 = vmul.f32 %v973, %v337
      %v1102 = vmul.f32 %v974, %v341
      %v1103 = vmul.f32 %v975, %v337
      %v1104 = vmul.f32 %v976, %v341
      %v1105 = vmul.f32 %v977, %v337
      %v1106 = vmul.f32 %v978, %v341
      %v1107 = vmul.f32 %v979, %v337
      %v1108 = vmul.f32 %v980, %v341
      %v1109 = vmul.f32 %v981, %v337
      %v1110 = vmul.f32 %v982, %v341
      %v1111 = vmul.f32 %v983, %v337
      %v1112 = vmul.f32 %v984, %v341
      %v1113 = vmul.f32 %v985, %v337
      %v1114 = vmul.f32 %v986, %v341
      %v1115 = vmul.f32 %v987, %v337
      %v1116 = vmul.f32 %v988, %v341
      %v1117 = vmul.f32 %v989, %v337
      %v1118 = vmul.f32 %v990, %v341
      %v1119 = vmul.f32 %v991, %v337
      %v1120 = vmul.f32 %v992, %v341
      %v1121 = vmul.f32 %v993, %v337
      %v1122 = vmul.f32 %v994, %v341
      %v1123 = vmul.f32 %v995, %v337
      %v1124 = vmul.f32 %v996, %v341
      %v1125 = vmul.f32 %v997, %v337
      %v1126 = vmul.f32 %v998, %v341
      %v1127 = vmul.f32 %v999, %v337
      %v1128 = vmul.f32 %v1000, %v341
      %v1129 = vmul.f32 %v1001, %v337
      %v1130 = vmul.f32 %v1002, %v341
      %v1131 = vmul.f32 %v1003, %v337
      %v1132 = vmul.f32 %v1004, %v341
      %v1133 = vmul.f32 %v1005, %v337
      %v1134 = vmul.f32 %v1006, %v341
      %v1135 = vmul.f32 %v1007, %v337
      %v1136 = vmul.f32 %v1008, %v341
      %v1137 = vmul.f32 %v1009, %v337
      %v1138 = vmul.f32 %v1010, %v341
      %v1139 = vmul.f32 %v1011, %v337
      %v1140 = vmul.f32 %v1012, %v341
      %v1141 = vmul.f32 %v1013, %v337
      %v1142 = vmul.f32 %v1014, %v341
      %v1143 = vmul.f32 %v1015, %v337
      %v1144 = vmul.f32 %v1016, %v341
      %v1145 = vmul.f32 %v1017, %v337
      %v1146 = vmul.f32 %v1018, %v341
      %v1147 = vmul.f32 %v1019, %v337
      %v1148 = vmul.f32 %v1020, %v341
      %v1149 = vmul.f32 %v1021, %v337
      %v1150 = vmul.f32 %v1022, %v341
      %v1151 = vmul.f32 %v1023, %v337
      %v1152 = vmul.f32 %v1024, %v341
      %v1153 = vmul.f32 %v1025, %v337
      %v1154 = vmul.f32 %v1026, %v341
      %v1155 = vmul.f32 %v1027, %v337
      %v1156 = vmul.f32 %v1028, %v341
      %v1157 = vmul.f32 %v1029, %v337
      %v1158 = vmul.f32 %v1030, %v341
      %v1159 = vmul.f32 %v1031, %v337
      %v1160 = vmul.f32 %v1032, %v341
      %v1161 = vmul.f32 %v1033, %v337
      %v1162 = vmul.f32 %v1034, %v341
      %v1163 = vmul.f32 %v1035, %v337
      %v1164 = vmul.f32 %v1036, %v341
      %v1165 = vmul.f32 %v1037, %v337
      %v1166 = vmul.f32 %v1038, %v341
      %v1167 = vmul.f32 %v1039, %v337
      %v1168 = vmul.f32 %v1040, %v341
      %v1169 = vmul.f32 %v1041, %v337
      %v1170 = vmul.f32 %v1042, %v341
      %v1171 = vmul.f32 %v1043, %v337
      %v1172 = vmul.f32 %v1044, %v341
      %v1173 = vmul.f32 %v1045, %v337
      %v1174 = vmul.f32 %v1046, %v341
      %v1175 = vmul.f32 %v1047, %v337
      %v1176 = vmul.f32 %v1048, %v341
      %v1177 = vsel %vm472, %v1050, 0.0
      %v1178 = vadd.f32 %v1049, %v1177
      %1179 = vadd.xlane.f32.xlu0 %v1178
      %v1180 = vpop.xlane.xlu0 %1179
      %v1181 = vsel %vm472, %v1052, 0.0
      %v1182 = vadd.f32 %v1051, %v1181
      %1183 = vadd.xlane.f32.xlu0 %v1182
      %v1184 = vpop.xlane.xlu0 %1183
      %v1185 = vsel %vm472, %v1054, 0.0
      %v1186 = vadd.f32 %v1053, %v1185
      %1187 = vadd.xlane.f32.xlu0 %v1186
      %v1188 = vpop.xlane.xlu0 %1187
      %v1189 = vsel %vm472, %v1056, 0.0
      %v1190 = vadd.f32 %v1055, %v1189
      %1191 = vadd.xlane.f32.xlu0 %v1190
      %v1192 = vpop.xlane.xlu0 %1191
      %v1193 = vsel %vm472, %v1058, 0.0
      %v1194 = vadd.f32 %v1057, %v1193
      %1195 = vadd.xlane.f32.xlu0 %v1194
      %v1196 = vpop.xlane.xlu0 %1195
      %v1197 = vsel %vm472, %v1060, 0.0
      %v1198 = vadd.f32 %v1059, %v1197
      %1199 = vadd.xlane.f32.xlu0 %v1198
      %v1200 = vpop.xlane.xlu0 %1199
      %v1201 = vsel %vm472, %v1062, 0.0
      %v1202 = vadd.f32 %v1061, %v1201
      %1203 = vadd.xlane.f32.xlu0 %v1202
      %v1204 = vpop.xlane.xlu0 %1203
      %v1205 = vsel %vm472, %v1064, 0.0
      %v1206 = vadd.f32 %v1063, %v1205
      %1207 = vadd.xlane.f32.xlu0 %v1206
      %v1208 = vpop.xlane.xlu0 %1207
      %v1209 = vsel %vm472, %v1066, 0.0
      %v1210 = vadd.f32 %v1065, %v1209
      %1211 = vadd.xlane.f32.xlu0 %v1210
      %v1212 = vpop.xlane.xlu0 %1211
      %v1213 = vsel %vm472, %v1068, 0.0
      %v1214 = vadd.f32 %v1067, %v1213
      %1215 = vadd.xlane.f32.xlu0 %v1214
      %v1216 = vpop.xlane.xlu0 %1215
      %v1217 = vsel %vm472, %v1070, 0.0
      %v1218 = vadd.f32 %v1069, %v1217
      %1219 = vadd.xlane.f32.xlu0 %v1218
      %v1220 = vpop.xlane.xlu0 %1219
      %v1221 = vsel %vm472, %v1072, 0.0
      %v1222 = vadd.f32 %v1071, %v1221
      %1223 = vadd.xlane.f32.xlu0 %v1222
      %v1224 = vpop.xlane.xlu0 %1223
      %v1225 = vsel %vm472, %v1074, 0.0
      %v1226 = vadd.f32 %v1073, %v1225
      %1227 = vadd.xlane.f32.xlu0 %v1226
      %v1228 = vpop.xlane.xlu0 %1227
      %v1229 = vsel %vm472, %v1076, 0.0
      %v1230 = vadd.f32 %v1075, %v1229
      %1231 = vadd.xlane.f32.xlu0 %v1230
      %v1232 = vpop.xlane.xlu0 %1231
      %v1233 = vsel %vm472, %v1078, 0.0
      %v1234 = vadd.f32 %v1077, %v1233
      %1235 = vadd.xlane.f32.xlu0 %v1234
      %v1236 = vpop.xlane.xlu0 %1235
      %v1237 = vsel %vm472, %v1080, 0.0
      %v1238 = vadd.f32 %v1079, %v1237
      %1239 = vadd.xlane.f32.xlu0 %v1238
      %v1240 = vpop.xlane.xlu0 %1239
      %v1241 = vsel %vm472, %v1082, 0.0
      %v1242 = vadd.f32 %v1081, %v1241
      %1243 = vadd.xlane.f32.xlu0 %v1242
      %v1244 = vpop.xlane.xlu0 %1243
      %v1245 = vsel %vm472, %v1084, 0.0
      %v1246 = vadd.f32 %v1083, %v1245
      %1247 = vadd.xlane.f32.xlu0 %v1246
      %v1248 = vpop.xlane.xlu0 %1247
      %v1249 = vsel %vm472, %v1086, 0.0
      %v1250 = vadd.f32 %v1085, %v1249
      %1251 = vadd.xlane.f32.xlu0 %v1250
      %v1252 = vpop.xlane.xlu0 %1251
      %v1253 = vsel %vm472, %v1088, 0.0
      %v1254 = vadd.f32 %v1087, %v1253
      %1255 = vadd.xlane.f32.xlu0 %v1254
      %v1256 = vpop.xlane.xlu0 %1255
      %v1257 = vsel %vm472, %v1090, 0.0
      %v1258 = vadd.f32 %v1089, %v1257
      %1259 = vadd.xlane.f32.xlu0 %v1258
      %v1260 = vpop.xlane.xlu0 %1259
      %v1261 = vsel %vm472, %v1092, 0.0
      %v1262 = vadd.f32 %v1091, %v1261
      %1263 = vadd.xlane.f32.xlu0 %v1262
      %v1264 = vpop.xlane.xlu0 %1263
      %v1265 = vsel %vm472, %v1094, 0.0
      %v1266 = vadd.f32 %v1093, %v1265
      %1267 = vadd.xlane.f32.xlu0 %v1266
      %v1268 = vpop.xlane.xlu0 %1267
      %v1269 = vsel %vm472, %v1096, 0.0
      %v1270 = vadd.f32 %v1095, %v1269
      %1271 = vadd.xlane.f32.xlu0 %v1270
      %v1272 = vpop.xlane.xlu0 %1271
      %v1273 = vsel %vm472, %v1098, 0.0
      %v1274 = vadd.f32 %v1097, %v1273
      %1275 = vadd.xlane.f32.xlu0 %v1274
      %v1276 = vpop.xlane.xlu0 %1275
      %v1277 = vsel %vm472, %v1100, 0.0
      %v1278 = vadd.f32 %v1099, %v1277
      %1279 = vadd.xlane.f32.xlu0 %v1278
      %v1280 = vpop.xlane.xlu0 %1279
      %v1281 = vsel %vm472, %v1102, 0.0
      %v1282 = vadd.f32 %v1101, %v1281
      %1283 = vadd.xlane.f32.xlu0 %v1282
      %v1284 = vpop.xlane.xlu0 %1283
      %v1285 = vsel %vm472, %v1104, 0.0
      %v1286 = vadd.f32 %v1103, %v1285
      %1287 = vadd.xlane.f32.xlu0 %v1286
      %v1288 = vpop.xlane.xlu0 %1287
      %v1289 = vsel %vm472, %v1106, 0.0
      %v1290 = vadd.f32 %v1105, %v1289
      %1291 = vadd.xlane.f32.xlu0 %v1290
      %v1292 = vpop.xlane.xlu0 %1291
      %v1293 = vsel %vm472, %v1108, 0.0
      %v1294 = vadd.f32 %v1107, %v1293
      %1295 = vadd.xlane.f32.xlu0 %v1294
      %v1296 = vpop.xlane.xlu0 %1295
      %v1297 = vsel %vm472, %v1110, 0.0
      %v1298 = vadd.f32 %v1109, %v1297
      %1299 = vadd.xlane.f32.xlu0 %v1298
      %v1300 = vpop.xlane.xlu0 %1299
      %v1301 = vsel %vm472, %v1112, 0.0
      %v1302 = vadd.f32 %v1111, %v1301
      %1303 = vadd.xlane.f32.xlu0 %v1302
      %v1304 = vpop.xlane.xlu0 %1303
      %v1305 = vsel %vm472, %v1114, 0.0
      %v1306 = vadd.f32 %v1113, %v1305
      %1307 = vadd.xlane.f32.xlu0 %v1306
      %v1308 = vpop.xlane.xlu0 %1307
      %v1309 = vsel %vm472, %v1116, 0.0
      %v1310 = vadd.f32 %v1115, %v1309
      %1311 = vadd.xlane.f32.xlu0 %v1310
      %v1312 = vpop.xlane.xlu0 %1311
      %v1313 = vsel %vm472, %v1118, 0.0
      %v1314 = vadd.f32 %v1117, %v1313
      %1315 = vadd.xlane.f32.xlu0 %v1314
      %v1316 = vpop.xlane.xlu0 %1315
      %v1317 = vsel %vm472, %v1120, 0.0
      %v1318 = vadd.f32 %v1119, %v1317
      %1319 = vadd.xlane.f32.xlu0 %v1318
      %v1320 = vpop.xlane.xlu0 %1319
      %v1321 = vsel %vm472, %v1122, 0.0
      %v1322 = vadd.f32 %v1121, %v1321
      %1323 = vadd.xlane.f32.xlu0 %v1322
      %v1324 = vpop.xlane.xlu0 %1323
      %v1325 = vsel %vm472, %v1124, 0.0
      %v1326 = vadd.f32 %v1123, %v1325
      %1327 = vadd.xlane.f32.xlu0 %v1326
      %v1328 = vpop.xlane.xlu0 %1327
      %v1329 = vsel %vm472, %v1126, 0.0
      %v1330 = vadd.f32 %v1125, %v1329
      %1331 = vadd.xlane.f32.xlu0 %v1330
      %v1332 = vpop.xlane.xlu0 %1331
      %v1333 = vsel %vm472, %v1128, 0.0
      %v1334 = vadd.f32 %v1127, %v1333
      %1335 = vadd.xlane.f32.xlu0 %v1334
      %v1336 = vpop.xlane.xlu0 %1335
      %v1337 = vsel %vm472, %v1130, 0.0
      %v1338 = vadd.f32 %v1129, %v1337
      %1339 = vadd.xlane.f32.xlu0 %v1338
      %v1340 = vpop.xlane.xlu0 %1339
      %v1341 = vsel %vm472, %v1132, 0.0
      %v1342 = vadd.f32 %v1131, %v1341
      %1343 = vadd.xlane.f32.xlu0 %v1342
      %v1344 = vpop.xlane.xlu0 %1343
      %v1345 = vsel %vm472, %v1134, 0.0
      %v1346 = vadd.f32 %v1133, %v1345
      %1347 = vadd.xlane.f32.xlu0 %v1346
      %v1348 = vpop.xlane.xlu0 %1347
      %v1349 = vsel %vm472, %v1136, 0.0
      %v1350 = vadd.f32 %v1135, %v1349
      %1351 = vadd.xlane.f32.xlu0 %v1350
      %v1352 = vpop.xlane.xlu0 %1351
      %v1353 = vsel %vm472, %v1138, 0.0
      %v1354 = vadd.f32 %v1137, %v1353
      %1355 = vadd.xlane.f32.xlu0 %v1354
      %v1356 = vpop.xlane.xlu0 %1355
      %v1357 = vsel %vm472, %v1140, 0.0
      %v1358 = vadd.f32 %v1139, %v1357
      %1359 = vadd.xlane.f32.xlu0 %v1358
      %v1360 = vpop.xlane.xlu0 %1359
      %v1361 = vsel %vm472, %v1142, 0.0
      %v1362 = vadd.f32 %v1141, %v1361
      %1363 = vadd.xlane.f32.xlu0 %v1362
      %v1364 = vpop.xlane.xlu0 %1363
      %v1365 = vsel %vm472, %v1144, 0.0
      %v1366 = vadd.f32 %v1143, %v1365
      %1367 = vadd.xlane.f32.xlu0 %v1366
      %v1368 = vpop.xlane.xlu0 %1367
      %v1369 = vsel %vm472, %v1146, 0.0
      %v1370 = vadd.f32 %v1145, %v1369
      %1371 = vadd.xlane.f32.xlu0 %v1370
      %v1372 = vpop.xlane.xlu0 %1371
      %v1373 = vsel %vm472, %v1148, 0.0
      %v1374 = vadd.f32 %v1147, %v1373
      %1375 = vadd.xlane.f32.xlu0 %v1374
      %v1376 = vpop.xlane.xlu0 %1375
      %v1377 = vsel %vm472, %v1150, 0.0
      %v1378 = vadd.f32 %v1149, %v1377
      %1379 = vadd.xlane.f32.xlu0 %v1378
      %v1380 = vpop.xlane.xlu0 %1379
      %v1381 = vsel %vm472, %v1152, 0.0
      %v1382 = vadd.f32 %v1151, %v1381
      %1383 = vadd.xlane.f32.xlu0 %v1382
      %v1384 = vpop.xlane.xlu0 %1383
      %v1385 = vsel %vm472, %v1154, 0.0
      %v1386 = vadd.f32 %v1153, %v1385
      %1387 = vadd.xlane.f32.xlu0 %v1386
      %v1388 = vpop.xlane.xlu0 %1387
      %v1389 = vsel %vm472, %v1156, 0.0
      %v1390 = vadd.f32 %v1155, %v1389
      %1391 = vadd.xlane.f32.xlu0 %v1390
      %v1392 = vpop.xlane.xlu0 %1391
      %v1393 = vsel %vm472, %v1158, 0.0
      %v1394 = vadd.f32 %v1157, %v1393
      %1395 = vadd.xlane.f32.xlu0 %v1394
      %v1396 = vpop.xlane.xlu0 %1395
      %v1397 = vsel %vm472, %v1160, 0.0
      %v1398 = vadd.f32 %v1159, %v1397
      %1399 = vadd.xlane.f32.xlu0 %v1398
      %v1400 = vpop.xlane.xlu0 %1399
      %v1401 = vsel %vm472, %v1162, 0.0
      %v1402 = vadd.f32 %v1161, %v1401
      %1403 = vadd.xlane.f32.xlu0 %v1402
      %v1404 = vpop.xlane.xlu0 %1403
      %v1405 = vsel %vm472, %v1164, 0.0
      %v1406 = vadd.f32 %v1163, %v1405
      %1407 = vadd.xlane.f32.xlu0 %v1406
      %v1408 = vpop.xlane.xlu0 %1407
      %v1409 = vsel %vm472, %v1166, 0.0
      %v1410 = vadd.f32 %v1165, %v1409
      %1411 = vadd.xlane.f32.xlu0 %v1410
      %v1412 = vpop.xlane.xlu0 %1411
      %v1413 = vsel %vm472, %v1168, 0.0
      %v1414 = vadd.f32 %v1167, %v1413
      %1415 = vadd.xlane.f32.xlu0 %v1414
      %v1416 = vpop.xlane.xlu0 %1415
      %v1417 = vsel %vm472, %v1170, 0.0
      %v1418 = vadd.f32 %v1169, %v1417
      %1419 = vadd.xlane.f32.xlu0 %v1418
      %v1420 = vpop.xlane.xlu0 %1419
      %v1421 = vsel %vm472, %v1172, 0.0
      %v1422 = vadd.f32 %v1171, %v1421
      %1423 = vadd.xlane.f32.xlu0 %v1422
      %v1424 = vpop.xlane.xlu0 %1423
      %v1425 = vsel %vm472, %v1174, 0.0
      %v1426 = vadd.f32 %v1173, %v1425
      %1427 = vadd.xlane.f32.xlu0 %v1426
      %v1428 = vpop.xlane.xlu0 %1427
      %v1429 = vsel %vm472, %v1176, 0.0
      %v1430 = vadd.f32 %v1175, %v1429
      %1431 = vadd.xlane.f32.xlu0 %v1430
      %v1432 = vpop.xlane.xlu0 %1431
      %v1433 = vmul.f32 %v1180, 0.0052083335
      %v1434 = vmul.f32 %v1184, 0.0052083335
      %v1435 = vmul.f32 %v1188, 0.0052083335
      %v1436 = vmul.f32 %v1192, 0.0052083335
      %v1437 = vmul.f32 %v1196, 0.0052083335
      %v1438 = vmul.f32 %v1200, 0.0052083335
      %v1439 = vmul.f32 %v1204, 0.0052083335
      %v1440 = vmul.f32 %v1208, 0.0052083335
      %v1441 = vmul.f32 %v1212, 0.0052083335
      %v1442 = vmul.f32 %v1216, 0.0052083335
      %v1443 = vmul.f32 %v1220, 0.0052083335
      %v1444 = vmul.f32 %v1224, 0.0052083335
      %v1445 = vmul.f32 %v1228, 0.0052083335
      %v1446 = vmul.f32 %v1232, 0.0052083335
      %v1447 = vmul.f32 %v1236, 0.0052083335
      %v1448 = vmul.f32 %v1240, 0.0052083335
      %v1449 = vmul.f32 %v1244, 0.0052083335
      %v1450 = vmul.f32 %v1248, 0.0052083335
      %v1451 = vmul.f32 %v1252, 0.0052083335
      %v1452 = vmul.f32 %v1256, 0.0052083335
      %v1453 = vmul.f32 %v1260, 0.0052083335
      %v1454 = vmul.f32 %v1264, 0.0052083335
      %v1455 = vmul.f32 %v1268, 0.0052083335
      %v1456 = vmul.f32 %v1272, 0.0052083335
      %v1457 = vmul.f32 %v1276, 0.0052083335
      %v1458 = vmul.f32 %v1280, 0.0052083335
      %v1459 = vmul.f32 %v1284, 0.0052083335
      %v1460 = vmul.f32 %v1288, 0.0052083335
      %v1461 = vmul.f32 %v1292, 0.0052083335
      %v1462 = vmul.f32 %v1296, 0.0052083335
      %v1463 = vmul.f32 %v1300, 0.0052083335
      %v1464 = vmul.f32 %v1304, 0.0052083335
      %v1465 = vmul.f32 %v1308, 0.0052083335
      %v1466 = vmul.f32 %v1312, 0.0052083335
      %v1467 = vmul.f32 %v1316, 0.0052083335
      %v1468 = vmul.f32 %v1320, 0.0052083335
      %v1469 = vmul.f32 %v1324, 0.0052083335
      %v1470 = vmul.f32 %v1328, 0.0052083335
      %v1471 = vmul.f32 %v1332, 0.0052083335
      %v1472 = vmul.f32 %v1336, 0.0052083335
      %v1473 = vmul.f32 %v1340, 0.0052083335
      %v1474 = vmul.f32 %v1344, 0.0052083335
      %v1475 = vmul.f32 %v1348, 0.0052083335
      %v1476 = vmul.f32 %v1352, 0.0052083335
      %v1477 = vmul.f32 %v1356, 0.0052083335
      %v1478 = vmul.f32 %v1360, 0.0052083335
      %v1479 = vmul.f32 %v1364, 0.0052083335
      %v1480 = vmul.f32 %v1368, 0.0052083335
      %v1481 = vmul.f32 %v1372, 0.0052083335
      %v1482 = vmul.f32 %v1376, 0.0052083335
      %v1483 = vmul.f32 %v1380, 0.0052083335
      %v1484 = vmul.f32 %v1384, 0.0052083335
      %v1485 = vmul.f32 %v1388, 0.0052083335
      %v1486 = vmul.f32 %v1392, 0.0052083335
      %v1487 = vmul.f32 %v1396, 0.0052083335
      %v1488 = vmul.f32 %v1400, 0.0052083335
      %v1489 = vmul.f32 %v1404, 0.0052083335
      %v1490 = vmul.f32 %v1408, 0.0052083335
      %v1491 = vmul.f32 %v1412, 0.0052083335
      %v1492 = vmul.f32 %v1416, 0.0052083335
      %v1493 = vmul.f32 %v1420, 0.0052083335
      %v1494 = vmul.f32 %v1424, 0.0052083335
      %v1495 = vmul.f32 %v1428, 0.0052083335
      %v1496 = vmul.f32 %v1432, 0.0052083335
      %v1497 = vadd.f32 %v1433, 1e-05
      %v1498 = vadd.f32 %v1434, 1e-05
      %v1499 = vadd.f32 %v1435, 1e-05
      %v1500 = vadd.f32 %v1436, 1e-05
      %v1501 = vadd.f32 %v1437, 1e-05
      %v1502 = vadd.f32 %v1438, 1e-05
      %v1503 = vadd.f32 %v1439, 1e-05
      %v1504 = vadd.f32 %v1440, 1e-05
      %v1505 = vadd.f32 %v1441, 1e-05
      %v1506 = vadd.f32 %v1442, 1e-05
      %v1507 = vadd.f32 %v1443, 1e-05
      %v1508 = vadd.f32 %v1444, 1e-05
      %v1509 = vadd.f32 %v1445, 1e-05
      %v1510 = vadd.f32 %v1446, 1e-05
      %v1511 = vadd.f32 %v1447, 1e-05
      %v1512 = vadd.f32 %v1448, 1e-05
      %v1513 = vadd.f32 %v1449, 1e-05
      %v1514 = vadd.f32 %v1450, 1e-05
      %v1515 = vadd.f32 %v1451, 1e-05
      %v1516 = vadd.f32 %v1452, 1e-05
      %v1517 = vadd.f32 %v1453, 1e-05
      %v1518 = vadd.f32 %v1454, 1e-05
      %v1519 = vadd.f32 %v1455, 1e-05
      %v1520 = vadd.f32 %v1456, 1e-05
      %v1521 = vadd.f32 %v1457, 1e-05
      %v1522 = vadd.f32 %v1458, 1e-05
      %v1523 = vadd.f32 %v1459, 1e-05
      %v1524 = vadd.f32 %v1460, 1e-05
      %v1525 = vadd.f32 %v1461, 1e-05
      %v1526 = vadd.f32 %v1462, 1e-05
      %v1527 = vadd.f32 %v1463, 1e-05
      %v1528 = vadd.f32 %v1464, 1e-05
      %v1529 = vadd.f32 %v1465, 1e-05
      %v1530 = vadd.f32 %v1466, 1e-05
      %v1531 = vadd.f32 %v1467, 1e-05
      %v1532 = vadd.f32 %v1468, 1e-05
      %v1533 = vadd.f32 %v1469, 1e-05
      %v1534 = vadd.f32 %v1470, 1e-05
      %v1535 = vadd.f32 %v1471, 1e-05
      %v1536 = vadd.f32 %v1472, 1e-05
      %v1537 = vadd.f32 %v1473, 1e-05
      %v1538 = vadd.f32 %v1474, 1e-05
      %v1539 = vadd.f32 %v1475, 1e-05
      %v1540 = vadd.f32 %v1476, 1e-05
      %v1541 = vadd.f32 %v1477, 1e-05
      %v1542 = vadd.f32 %v1478, 1e-05
      %v1543 = vadd.f32 %v1479, 1e-05
      %v1544 = vadd.f32 %v1480, 1e-05
      %v1545 = vadd.f32 %v1481, 1e-05
      %v1546 = vadd.f32 %v1482, 1e-05
      %v1547 = vadd.f32 %v1483, 1e-05
      %v1548 = vadd.f32 %v1484, 1e-05
      %v1549 = vadd.f32 %v1485, 1e-05
      %v1550 = vadd.f32 %v1486, 1e-05
      %v1551 = vadd.f32 %v1487, 1e-05
      %v1552 = vadd.f32 %v1488, 1e-05
      %v1553 = vadd.f32 %v1489, 1e-05
      %v1554 = vadd.f32 %v1490, 1e-05
      %v1555 = vadd.f32 %v1491, 1e-05
      %v1556 = vadd.f32 %v1492, 1e-05
      %v1557 = vadd.f32 %v1493, 1e-05
      %v1558 = vadd.f32 %v1494, 1e-05
      %v1559 = vadd.f32 %v1495, 1e-05
      %v1560 = vadd.f32 %v1496, 1e-05
      %v1561 = vrsqrt.pop %v1497
      %v1562 = vrsqrt.pop %v1498
      %v1563 = vrsqrt.pop %v1499
      %v1564 = vrsqrt.pop %v1500
      %v1565 = vrsqrt.pop %v1501
      %v1566 = vrsqrt.pop %v1502
      %v1567 = vrsqrt.pop %v1503
      %v1568 = vrsqrt.pop %v1504
      %v1569 = vrsqrt.pop %v1505
      %v1570 = vrsqrt.pop %v1506
      %v1571 = vrsqrt.pop %v1507
      %v1572 = vrsqrt.pop %v1508
      %v1573 = vrsqrt.pop %v1509
      %v1574 = vrsqrt.pop %v1510
      %v1575 = vrsqrt.pop %v1511
      %v1576 = vrsqrt.pop %v1512
      %v1577 = vrsqrt.pop %v1513
      %v1578 = vrsqrt.pop %v1514
      %v1579 = vrsqrt.pop %v1515
      %v1580 = vrsqrt.pop %v1516
      %v1581 = vrsqrt.pop %v1517
      %v1582 = vrsqrt.pop %v1518
      %v1583 = vrsqrt.pop %v1519
      %v1584 = vrsqrt.pop %v1520
      %v1585 = vrsqrt.pop %v1521
      %v1586 = vrsqrt.pop %v1522
      %v1587 = vrsqrt.pop %v1523
      %v1588 = vrsqrt.pop %v1524
      %v1589 = vrsqrt.pop %v1525
      %v1590 = vrsqrt.pop %v1526
      %v1591 = vrsqrt.pop %v1527
      %v1592 = vrsqrt.pop %v1528
      %v1593 = vrsqrt.pop %v1529
      %v1594 = vrsqrt.pop %v1530
      %v1595 = vrsqrt.pop %v1531
      %v1596 = vrsqrt.pop %v1532
      %v1597 = vrsqrt.pop %v1533
      %v1598 = vrsqrt.pop %v1534
      %v1599 = vrsqrt.pop %v1535
      %v1600 = vrsqrt.pop %v1536
      %v1601 = vrsqrt.pop %v1537
      %v1602 = vrsqrt.pop %v1538
      %v1603 = vrsqrt.pop %v1539
      %v1604 = vrsqrt.pop %v1540
      %v1605 = vrsqrt.pop %v1541
      %v1606 = vrsqrt.pop %v1542
      %v1607 = vrsqrt.pop %v1543
      %v1608 = vrsqrt.pop %v1544
      %v1609 = vrsqrt.pop %v1545
      %v1610 = vrsqrt.pop %v1546
      %v1611 = vrsqrt.pop %v1547
      %v1612 = vrsqrt.pop %v1548
      %v1613 = vrsqrt.pop %v1549
      %v1614 = vrsqrt.pop %v1550
      %v1615 = vrsqrt.pop %v1551
      %v1616 = vrsqrt.pop %v1552
      %v1617 = vrsqrt.pop %v1553
      %v1618 = vrsqrt.pop %v1554
      %v1619 = vrsqrt.pop %v1555
      %v1620 = vrsqrt.pop %v1556
      %v1621 = vrsqrt.pop %v1557
      %v1622 = vrsqrt.pop %v1558
      %v1623 = vrsqrt.pop %v1559
      %v1624 = vrsqrt.pop %v1560
      %v1625 = vmul.f32 %v793, %v1561
      %v1626 = vmul.f32 %v794, %v1561
      %v1627 = vmul.f32 %v795, %v1562
      %v1628 = vmul.f32 %v796, %v1562
      %v1629 = vmul.f32 %v797, %v1563
      %v1630 = vmul.f32 %v798, %v1563
      %v1631 = vmul.f32 %v799, %v1564
      %v1632 = vmul.f32 %v800, %v1564
      %v1633 = vmul.f32 %v801, %v1565
      %v1634 = vmul.f32 %v802, %v1565
      %v1635 = vmul.f32 %v803, %v1566
      %v1636 = vmul.f32 %v804, %v1566
      %v1637 = vmul.f32 %v805, %v1567
      %v1638 = vmul.f32 %v806, %v1567
      %v1639 = vmul.f32 %v807, %v1568
      %v1640 = vmul.f32 %v808, %v1568
      %v1641 = vmul.f32 %v809, %v1569
      %v1642 = vmul.f32 %v810, %v1569
      %v1643 = vmul.f32 %v811, %v1570
      %v1644 = vmul.f32 %v812, %v1570
      %v1645 = vmul.f32 %v813, %v1571
      %v1646 = vmul.f32 %v814, %v1571
      %v1647 = vmul.f32 %v815, %v1572
      %v1648 = vmul.f32 %v816, %v1572
      %v1649 = vmul.f32 %v817, %v1573
      %v1650 = vmul.f32 %v818, %v1573
      %v1651 = vmul.f32 %v819, %v1574
      %v1652 = vmul.f32 %v820, %v1574
      %v1653 = vmul.f32 %v821, %v1575
      %v1654 = vmul.f32 %v822, %v1575
      %v1655 = vmul.f32 %v823, %v1576
      %v1656 = vmul.f32 %v824, %v1576
      %v1657 = vmul.f32 %v825, %v1577
      %v1658 = vmul.f32 %v826, %v1577
      %v1659 = vmul.f32 %v827, %v1578
      %v1660 = vmul.f32 %v828, %v1578
      %v1661 = vmul.f32 %v829, %v1579
      %v1662 = vmul.f32 %v830, %v1579
      %v1663 = vmul.f32 %v831, %v1580
      %v1664 = vmul.f32 %v832, %v1580
      %v1665 = vmul.f32 %v833, %v1581
      %v1666 = vmul.f32 %v834, %v1581
      %v1667 = vmul.f32 %v835, %v1582
      %v1668 = vmul.f32 %v836, %v1582
      %v1669 = vmul.f32 %v837, %v1583
      %v1670 = vmul.f32 %v838, %v1583
      %v1671 = vmul.f32 %v839, %v1584
      %v1672 = vmul.f32 %v840, %v1584
      %v1673 = vmul.f32 %v841, %v1585
      %v1674 = vmul.f32 %v842, %v1585
      %v1675 = vmul.f32 %v843, %v1586
      %v1676 = vmul.f32 %v844, %v1586
      %v1677 = vmul.f32 %v845, %v1587
      %v1678 = vmul.f32 %v846, %v1587
      %v1679 = vmul.f32 %v847, %v1588
      %v1680 = vmul.f32 %v848, %v1588
      %v1681 = vmul.f32 %v849, %v1589
      %v1682 = vmul.f32 %v850, %v1589
      %v1683 = vmul.f32 %v851, %v1590
      %v1684 = vmul.f32 %v852, %v1590
      %v1685 = vmul.f32 %v853, %v1591
      %v1686 = vmul.f32 %v854, %v1591
      %v1687 = vmul.f32 %v855, %v1592
      %v1688 = vmul.f32 %v856, %v1592
      %v1689 = vmul.f32 %v857, %v1593
      %v1690 = vmul.f32 %v858, %v1593
      %v1691 = vmul.f32 %v859, %v1594
      %v1692 = vmul.f32 %v860, %v1594
      %v1693 = vmul.f32 %v861, %v1595
      %v1694 = vmul.f32 %v862, %v1595
      %v1695 = vmul.f32 %v863, %v1596
      %v1696 = vmul.f32 %v864, %v1596
      %v1697 = vmul.f32 %v865, %v1597
      %v1698 = vmul.f32 %v866, %v1597
      %v1699 = vmul.f32 %v867, %v1598
      %v1700 = vmul.f32 %v868, %v1598
      %v1701 = vmul.f32 %v869, %v1599
      %v1702 = vmul.f32 %v870, %v1599
      %v1703 = vmul.f32 %v871, %v1600
      %v1704 = vmul.f32 %v872, %v1600
      %v1705 = vmul.f32 %v873, %v1601
      %v1706 = vmul.f32 %v874, %v1601
      %v1707 = vmul.f32 %v875, %v1602
      %v1708 = vmul.f32 %v876, %v1602
      %v1709 = vmul.f32 %v877, %v1603
      %v1710 = vmul.f32 %v878, %v1603
      %v1711 = vmul.f32 %v879, %v1604
      %v1712 = vmul.f32 %v880, %v1604
      %v1713 = vmul.f32 %v881, %v1605
      %v1714 = vmul.f32 %v882, %v1605
      %v1715 = vmul.f32 %v883, %v1606
      %v1716 = vmul.f32 %v884, %v1606
      %v1717 = vmul.f32 %v885, %v1607
      %v1718 = vmul.f32 %v886, %v1607
      %v1719 = vmul.f32 %v887, %v1608
      %v1720 = vmul.f32 %v888, %v1608
      %v1721 = vmul.f32 %v889, %v1609
      %v1722 = vmul.f32 %v890, %v1609
      %v1723 = vmul.f32 %v891, %v1610
      %v1724 = vmul.f32 %v892, %v1610
      %v1725 = vmul.f32 %v893, %v1611
      %v1726 = vmul.f32 %v894, %v1611
      %v1727 = vmul.f32 %v895, %v1612
      %v1728 = vmul.f32 %v896, %v1612
      %v1729 = vmul.f32 %v897, %v1613
      %v1730 = vmul.f32 %v898, %v1613
      %v1731 = vmul.f32 %v899, %v1614
      %v1732 = vmul.f32 %v900, %v1614
      %v1733 = vmul.f32 %v901, %v1615
      %v1734 = vmul.f32 %v902, %v1615
      %v1735 = vmul.f32 %v903, %v1616
      %v1736 = vmul.f32 %v904, %v1616
      %v1737 = vmul.f32 %v905, %v1617
      %v1738 = vmul.f32 %v906, %v1617
      %v1739 = vmul.f32 %v907, %v1618
      %v1740 = vmul.f32 %v908, %v1618
      %v1741 = vmul.f32 %v909, %v1619
      %v1742 = vmul.f32 %v910, %v1619
      %v1743 = vmul.f32 %v911, %v1620
      %v1744 = vmul.f32 %v912, %v1620
      %v1745 = vmul.f32 %v913, %v1621
      %v1746 = vmul.f32 %v914, %v1621
      %v1747 = vmul.f32 %v915, %v1622
      %v1748 = vmul.f32 %v916, %v1622
      %v1749 = vmul.f32 %v917, %v1623
      %v1750 = vmul.f32 %v918, %v1623
      %v1751 = vmul.f32 %v919, %v1624
      %v1752 = vmul.f32 %v920, %v1624
      %v1753 = vld [vmem:[%s1] sm:$0xff]
      %v1754 = vld [vmem:[%s1 + $0x8] sm:$0xff]
      %v1755 = vld [vmem:[%s1 + $0x10] sm:$0xff]
      %v1756 = vld [vmem:[%s1 + $0x18] sm:$0xff]
      %v1757 = vld [vmem:[%s1 + $0x20] sm:$0xff]
      %v1758 = vld [vmem:[%s1 + $0x28] sm:$0xff]
      %v1759 = vld [vmem:[%s1 + $0x30] sm:$0xff]
      %v1760 = vld [vmem:[%s1 + $0x38] sm:$0xff]
      %v1761 = vld [vmem:[%s1 + $0x40] sm:$0xff]
      %v1762 = vld [vmem:[%s1 + $0x48] sm:$0xff]
      %v1763 = vld [vmem:[%s1 + $0x50] sm:$0xff]
      %v1764 = vld [vmem:[%s1 + $0x58] sm:$0xff]
      %v1765 = vld [vmem:[%s1 + $0x60] sm:$0xff]
      %v1766 = vld [vmem:[%s1 + $0x68] sm:$0xff]
      %v1767 = vld [vmem:[%s1 + $0x70] sm:$0xff]
      %v1768 = vld [vmem:[%s1 + $0x78] sm:$0xff]
      %v1769 = vld [vmem:[%s1 + $0x80] sm:$0xff]
      %v1770 = vld [vmem:[%s1 + $0x88] sm:$0xff]
      %v1771 = vld [vmem:[%s2] sm:$0x1]
      %v1773 = vlaneseq
      %v1774 = vshrl.u32 %v1773, 7
      %v1775 = vsub.s32 0, %v1774
      %v1776 = vrot.slane %v1771, %v1775
      %v1779 = vsel %vm472, %v1626, 0
      %v1782 = vsel %vm472, %v1628, 0
      %v1785 = vsel %vm472, %v1630, 0
      %v1788 = vsel %vm472, %v1632, 0
      %v1791 = vsel %vm472, %v1634, 0
      %v1794 = vsel %vm472, %v1636, 0
      %v1797 = vsel %vm472, %v1638, 0
      %v1800 = vsel %vm472, %v1640, 0
      %v1803 = vsel %vm472, %v1642, 0
      %v1806 = vsel %vm472, %v1644, 0
      %v1809 = vsel %vm472, %v1646, 0
      %v1812 = vsel %vm472, %v1648, 0
      %v1815 = vsel %vm472, %v1650, 0
      %v1818 = vsel %vm472, %v1652, 0
      %v1821 = vsel %vm472, %v1654, 0
      %v1824 = vsel %vm472, %v1656, 0
      %v1827 = vsel %vm472, %v1658, 0
      %v1830 = vsel %vm472, %v1660, 0
      %v1833 = vsel %vm472, %v1662, 0
      %v1836 = vsel %vm472, %v1664, 0
      %v1839 = vsel %vm472, %v1666, 0
      %v1842 = vsel %vm472, %v1668, 0
      %v1845 = vsel %vm472, %v1670, 0
      %v1848 = vsel %vm472, %v1672, 0
      %v1851 = vsel %vm472, %v1674, 0
      %v1854 = vsel %vm472, %v1676, 0
      %v1857 = vsel %vm472, %v1678, 0
      %v1860 = vsel %vm472, %v1680, 0
      %v1863 = vsel %vm472, %v1682, 0
      %v1866 = vsel %vm472, %v1684, 0
      %v1869 = vsel %vm472, %v1686, 0
      %v1872 = vsel %vm472, %v1688, 0
      %v1875 = vsel %vm472, %v1690, 0
      %v1878 = vsel %vm472, %v1692, 0
      %v1881 = vsel %vm472, %v1694, 0
      %v1884 = vsel %vm472, %v1696, 0
      %v1887 = vsel %vm472, %v1698, 0
      %v1890 = vsel %vm472, %v1700, 0
      %v1893 = vsel %vm472, %v1702, 0
      %v1896 = vsel %vm472, %v1704, 0
      %v1899 = vsel %vm472, %v1706, 0
      %v1902 = vsel %vm472, %v1708, 0
      %v1905 = vsel %vm472, %v1710, 0
      %v1908 = vsel %vm472, %v1712, 0
      %v1911 = vsel %vm472, %v1714, 0
      %v1914 = vsel %vm472, %v1716, 0
      %v1917 = vsel %vm472, %v1718, 0
      %v1920 = vsel %vm472, %v1720, 0
      %v1923 = vsel %vm472, %v1722, 0
      %v1926 = vsel %vm472, %v1724, 0
      %v1929 = vsel %vm472, %v1726, 0
      %v1932 = vsel %vm472, %v1728, 0
      %v1935 = vsel %vm472, %v1730, 0
      %v1938 = vsel %vm472, %v1732, 0
      %v1941 = vsel %vm472, %v1734, 0
      %v1944 = vsel %vm472, %v1736, 0
      %v1947 = vsel %vm472, %v1738, 0
      %v1950 = vsel %vm472, %v1740, 0
      %v1953 = vsel %vm472, %v1742, 0
      %v1956 = vsel %vm472, %v1744, 0
      %v1959 = vsel %vm472, %v1746, 0
      %v1962 = vsel %vm472, %v1748, 0
      %v1965 = vsel %vm472, %v1750, 0
      %v1968 = vsel %vm472, %v1752, 0
      %1970 = vmatprep.subr.mxu0 0.0
      %v1971 = vand.u32 %v1768, 4294901760
      %1972 = vmatpush1.msra.mxu0 %v1971
      %1973 = vmatprep.subr.mxu0 0.0
      %v1974 = vand.u32 %v1767, 4294901760
      %1975 = vmatpush1.msra.mxu0 %v1974
      %1976 = vmatprep.subr.mxu0 0.0
      %v1977 = vand.u32 %v1766, 4294901760
      %1978 = vmatpush1.msra.mxu0 %v1977
      %1979 = vmatprep.subr.mxu0 0.0
      %v1980 = vand.u32 %v1765, 4294901760
      %1981 = vmatpush1.msra.mxu0 %v1980
      %1982 = vmatprep.subr.mxu0 0.0
      %v1983 = vand.u32 %v1764, 4294901760
      %1984 = vmatpush1.msra.mxu0 %v1983
      %1985 = vmatprep.subr.mxu0 0.0
      %v1986 = vand.u32 %v1763, 4294901760
      %1987 = vmatpush1.msra.mxu0 %v1986
      %1988 = vmatprep.subr.mxu0 0.0
      %v1989 = vand.u32 %v1762, 4294901760
      %1990 = vmatpush1.msra.mxu0 %v1989
      %1991 = vmatprep.subr.mxu0 0.0
      %v1992 = vand.u32 %v1761, 4294901760
      %1993 = vmatpush1.msra.mxu0 %v1992
      %1994 = vmatprep.subr.mxu0 0.0
      %v1995 = vand.u32 %v1760, 4294901760
      %1996 = vmatpush1.msra.mxu0 %v1995
      %1997 = vmatprep.subr.mxu0 0.0
      %v1998 = vand.u32 %v1759, 4294901760
      %1999 = vmatpush1.msra.mxu0 %v1998
      %2000 = vmatprep.subr.mxu0 0.0
      %v2001 = vand.u32 %v1758, 4294901760
      %2002 = vmatpush1.msra.mxu0 %v2001
      %2003 = vmatprep.subr.mxu0 0.0
      %v2004 = vand.u32 %v1757, 4294901760
      %2005 = vmatpush1.msra.mxu0 %v2004
      %2006 = vmatprep.subr.mxu0 0.0
      %v2007 = vand.u32 %v1756, 4294901760
      %2008 = vmatpush1.msra.mxu0 %v2007
      %2009 = vmatprep.subr.mxu0 0.0
      %v2010 = vand.u32 %v1755, 4294901760
      %2011 = vmatpush1.msra.mxu0 %v2010
      %2012 = vmatprep.subr.mxu0 0.0
      %v2013 = vand.u32 %v1754, 4294901760
      %2014 = vmatpush1.msra.mxu0 %v2013
      %2015 = vmatprep.subr.mxu0 0.0
      %v2016 = vand.u32 %v1753, 4294901760
      %2017 = vmatpush1.msra.mxu0 %v2016
      %2018 = vmatprep.subr.mxu0 0.0
      %2019 = vmatpush2.msra.mxu0 0.0
      %2020 = vmatprep.subr.mxu0 0.0
      %2021 = vmatpush2.msra.mxu0 0.0
      %2022 = vmatprep.subr.mxu0 0.0
      %2023 = vmatpush2.msra.mxu0 0.0
      %2024 = vmatprep.subr.mxu0 0.0
      %2025 = vmatpush2.msra.mxu0 0.0
      %2026 = vmatprep.subr.mxu0 0.0
      %2027 = vmatpush2.msra.mxu0 0.0
      %2028 = vmatprep.subr.mxu0 0.0
      %2029 = vmatpush2.msra.mxu0 0.0
      %2030 = vmatprep.subr.mxu0 0.0
      %2031 = vmatpush2.msra.mxu0 0.0
      %2032 = vmatprep.subr.mxu0 0.0
      %2033 = vmatpush2.msra.mxu0 0.0
      %2034 = vmatprep.subr.mxu0 0.0
      %2035 = vmatpush2.msra.mxu0 0.0
      %2036 = vmatprep.subr.mxu0 0.0
      %2037 = vmatpush2.msra.mxu0 0.0
      %2038 = vmatprep.subr.mxu0 0.0
      %2039 = vmatpush2.msra.mxu0 0.0
      %2040 = vmatprep.subr.mxu0 0.0
      %2041 = vmatpush2.msra.mxu0 0.0
      %2042 = vmatprep.subr.mxu0 0.0
      %2043 = vmatpush2.msra.mxu0 0.0
      %2044 = vmatprep.subr.mxu0 0.0
      %2045 = vmatpush2.msra.mxu0 0.0
      %2046 = vmatprep.subr.mxu0 0.0
      %v2047 = vand.u32 %v1770, 4294901760
      %2048 = vmatpush2.msra.mxu0 %v2047
      %2049 = vmatprep.subr.mxu0 0.0
      %v2050 = vand.u32 %v1769, 4294901760
      %2051 = vmatpush2.msra.mxu0 %v2050
      %v2052 = vand.u32 %v1779, 4294901760
      %v2053 = vsub.f32 %v1779, %v2052
      %v2054 = vand.u32 %v2053, 4294901760
      %v2055 = vsub.f32 %v2053, %v2054
      %v2056 = vand.u32 %v2055, 4294901760
      %2057 = vmatprep.mubr.f32.mxu0 %v2056
      %v2058 = vand.u32 %v1625, 4294901760
      %v2059 = vsub.f32 %v1625, %v2058
      %v2060 = vand.u32 %v2059, 4294901760
      %v2061 = vsub.f32 %v2059, %v2060
      %v2062 = vand.u32 %v2061, 4294901760
      %2063 = vmatmul.mubr.f32.gmra.mxu0 %v2062
      %v2064 = vpop.f32.mrf.mxu0
      %v2065 = vadd.f32 %v1776, %v2064
      %v2066 = vpop.f32.mrf.mxu0
      %v2067 = vand.u32 %v1782, 4294901760
      %v2068 = vsub.f32 %v1782, %v2067
      %v2069 = vand.u32 %v2068, 4294901760
      %v2070 = vsub.f32 %v2068, %v2069
      %v2071 = vand.u32 %v2070, 4294901760
      %2072 = vmatprep.mubr.f32.mxu0 %v2071
      %v2073 = vand.u32 %v1627, 4294901760
      %v2074 = vsub.f32 %v1627, %v2073
      %v2075 = vand.u32 %v2074, 4294901760
      %v2076 = vsub.f32 %v2074, %v2075
      %v2077 = vand.u32 %v2076, 4294901760
      %2078 = vmatmul.mubr.f32.gmra.mxu0 %v2077
      %v2079 = vpop.f32.mrf.mxu0
      %v2080 = vadd.f32 %v1776, %v2079
      %v2081 = vpop.f32.mrf.mxu0
      %v2082 = vand.u32 %v1785, 4294901760
      %v2083 = vsub.f32 %v1785, %v2082
      %v2084 = vand.u32 %v2083, 4294901760
      %v2085 = vsub.f32 %v2083, %v2084
      %v2086 = vand.u32 %v2085, 4294901760
      %2087 = vmatprep.mubr.f32.mxu0 %v2086
      %v2088 = vand.u32 %v1629, 4294901760
      %v2089 = vsub.f32 %v1629, %v2088
      %v2090 = vand.u32 %v2089, 4294901760
      %v2091 = vsub.f32 %v2089, %v2090
      %v2092 = vand.u32 %v2091, 4294901760
      %2093 = vmatmul.mubr.f32.gmra.mxu0 %v2092
      %v2094 = vpop.f32.mrf.mxu0
      %v2095 = vadd.f32 %v1776, %v2094
      %v2096 = vpop.f32.mrf.mxu0
      %v2097 = vand.u32 %v1788, 4294901760
      %v2098 = vsub.f32 %v1788, %v2097
      %v2099 = vand.u32 %v2098, 4294901760
      %v2100 = vsub.f32 %v2098, %v2099
      %v2101 = vand.u32 %v2100, 4294901760
      %2102 = vmatprep.mubr.f32.mxu0 %v2101
      %v2103 = vand.u32 %v1631, 4294901760
      %v2104 = vsub.f32 %v1631, %v2103
      %v2105 = vand.u32 %v2104, 4294901760
      %v2106 = vsub.f32 %v2104, %v2105
      %v2107 = vand.u32 %v2106, 4294901760
      %2108 = vmatmul.mubr.f32.gmra.mxu0 %v2107
      %v2109 = vpop.f32.mrf.mxu0
      %v2110 = vadd.f32 %v1776, %v2109
      %v2111 = vpop.f32.mrf.mxu0
      %v2112 = vand.u32 %v1791, 4294901760
      %v2113 = vsub.f32 %v1791, %v2112
      %v2114 = vand.u32 %v2113, 4294901760
      %v2115 = vsub.f32 %v2113, %v2114
      %v2116 = vand.u32 %v2115, 4294901760
      %2117 = vmatprep.mubr.f32.mxu0 %v2116
      %v2118 = vand.u32 %v1633, 4294901760
      %v2119 = vsub.f32 %v1633, %v2118
      %v2120 = vand.u32 %v2119, 4294901760
      %v2121 = vsub.f32 %v2119, %v2120
      %v2122 = vand.u32 %v2121, 4294901760
      %2123 = vmatmul.mubr.f32.gmra.mxu0 %v2122
      %v2124 = vpop.f32.mrf.mxu0
      %v2125 = vadd.f32 %v1776, %v2124
      %v2126 = vpop.f32.mrf.mxu0
      %v2127 = vand.u32 %v1794, 4294901760
      %v2128 = vsub.f32 %v1794, %v2127
      %v2129 = vand.u32 %v2128, 4294901760
      %v2130 = vsub.f32 %v2128, %v2129
      %v2131 = vand.u32 %v2130, 4294901760
      %2132 = vmatprep.mubr.f32.mxu0 %v2131
      %v2133 = vand.u32 %v1635, 4294901760
      %v2134 = vsub.f32 %v1635, %v2133
      %v2135 = vand.u32 %v2134, 4294901760
      %v2136 = vsub.f32 %v2134, %v2135
      %v2137 = vand.u32 %v2136, 4294901760
      %2138 = vmatmul.mubr.f32.gmra.mxu0 %v2137
      %v2139 = vpop.f32.mrf.mxu0
      %v2140 = vadd.f32 %v1776, %v2139
      %v2141 = vpop.f32.mrf.mxu0
      %v2142 = vand.u32 %v1797, 4294901760
      %v2143 = vsub.f32 %v1797, %v2142
      %v2144 = vand.u32 %v2143, 4294901760
      %v2145 = vsub.f32 %v2143, %v2144
      %v2146 = vand.u32 %v2145, 4294901760
      %2147 = vmatprep.mubr.f32.mxu0 %v2146
      %v2148 = vand.u32 %v1637, 4294901760
      %v2149 = vsub.f32 %v1637, %v2148
      %v2150 = vand.u32 %v2149, 4294901760
      %v2151 = vsub.f32 %v2149, %v2150
      %v2152 = vand.u32 %v2151, 4294901760
      %2153 = vmatmul.mubr.f32.gmra.mxu0 %v2152
      %v2154 = vpop.f32.mrf.mxu0
      %v2155 = vadd.f32 %v1776, %v2154
      %v2156 = vpop.f32.mrf.mxu0
      %v2157 = vand.u32 %v1800, 4294901760
      %v2158 = vsub.f32 %v1800, %v2157
      %v2159 = vand.u32 %v2158, 4294901760
      %v2160 = vsub.f32 %v2158, %v2159
      %v2161 = vand.u32 %v2160, 4294901760
      %2162 = vmatprep.mubr.f32.mxu0 %v2161
      %v2163 = vand.u32 %v1639, 4294901760
      %v2164 = vsub.f32 %v1639, %v2163
      %v2165 = vand.u32 %v2164, 4294901760
      %v2166 = vsub.f32 %v2164, %v2165
      %v2167 = vand.u32 %v2166, 4294901760
      %2168 = vmatmul.mubr.f32.gmra.mxu0 %v2167
      %v2169 = vpop.f32.mrf.mxu0
      %v2170 = vadd.f32 %v1776, %v2169
      %v2171 = vpop.f32.mrf.mxu0
      %v2172 = vand.u32 %v1803, 4294901760
      %v2173 = vsub.f32 %v1803, %v2172
      %v2174 = vand.u32 %v2173, 4294901760
      %v2175 = vsub.f32 %v2173, %v2174
      %v2176 = vand.u32 %v2175, 4294901760
      %2177 = vmatprep.mubr.f32.mxu0 %v2176
      %v2178 = vand.u32 %v1641, 4294901760
      %v2179 = vsub.f32 %v1641, %v2178
      %v2180 = vand.u32 %v2179, 4294901760
      %v2181 = vsub.f32 %v2179, %v2180
      %v2182 = vand.u32 %v2181, 4294901760
      %2183 = vmatmul.mubr.f32.gmra.mxu0 %v2182
      %v2184 = vpop.f32.mrf.mxu0
      %v2185 = vadd.f32 %v1776, %v2184
      %v2186 = vpop.f32.mrf.mxu0
      %v2187 = vand.u32 %v1806, 4294901760
      %v2188 = vsub.f32 %v1806, %v2187
      %v2189 = vand.u32 %v2188, 4294901760
      %v2190 = vsub.f32 %v2188, %v2189
      %v2191 = vand.u32 %v2190, 4294901760
      %2192 = vmatprep.mubr.f32.mxu0 %v2191
      %v2193 = vand.u32 %v1643, 4294901760
      %v2194 = vsub.f32 %v1643, %v2193
      %v2195 = vand.u32 %v2194, 4294901760
      %v2196 = vsub.f32 %v2194, %v2195
      %v2197 = vand.u32 %v2196, 4294901760
      %2198 = vmatmul.mubr.f32.gmra.mxu0 %v2197
      %v2199 = vpop.f32.mrf.mxu0
      %v2200 = vadd.f32 %v1776, %v2199
      %v2201 = vpop.f32.mrf.mxu0
      %v2202 = vand.u32 %v1809, 4294901760
      %v2203 = vsub.f32 %v1809, %v2202
      %v2204 = vand.u32 %v2203, 4294901760
      %v2205 = vsub.f32 %v2203, %v2204
      %v2206 = vand.u32 %v2205, 4294901760
      %2207 = vmatprep.mubr.f32.mxu0 %v2206
      %v2208 = vand.u32 %v1645, 4294901760
      %v2209 = vsub.f32 %v1645, %v2208
      %v2210 = vand.u32 %v2209, 4294901760
      %v2211 = vsub.f32 %v2209, %v2210
      %v2212 = vand.u32 %v2211, 4294901760
      %2213 = vmatmul.mubr.f32.gmra.mxu0 %v2212
      %v2214 = vpop.f32.mrf.mxu0
      %v2215 = vadd.f32 %v1776, %v2214
      %v2216 = vpop.f32.mrf.mxu0
      %v2217 = vand.u32 %v1812, 4294901760
      %v2218 = vsub.f32 %v1812, %v2217
      %v2219 = vand.u32 %v2218, 4294901760
      %v2220 = vsub.f32 %v2218, %v2219
      %v2221 = vand.u32 %v2220, 4294901760
      %2222 = vmatprep.mubr.f32.mxu0 %v2221
      %v2223 = vand.u32 %v1647, 4294901760
      %v2224 = vsub.f32 %v1647, %v2223
      %v2225 = vand.u32 %v2224, 4294901760
      %v2226 = vsub.f32 %v2224, %v2225
      %v2227 = vand.u32 %v2226, 4294901760
      %2228 = vmatmul.mubr.f32.gmra.mxu0 %v2227
      %v2229 = vpop.f32.mrf.mxu0
      %v2230 = vadd.f32 %v1776, %v2229
      %v2231 = vpop.f32.mrf.mxu0
      %v2232 = vand.u32 %v1815, 4294901760
      %v2233 = vsub.f32 %v1815, %v2232
      %v2234 = vand.u32 %v2233, 4294901760
      %v2235 = vsub.f32 %v2233, %v2234
      %v2236 = vand.u32 %v2235, 4294901760
      %2237 = vmatprep.mubr.f32.mxu0 %v2236
      %v2238 = vand.u32 %v1649, 4294901760
      %v2239 = vsub.f32 %v1649, %v2238
      %v2240 = vand.u32 %v2239, 4294901760
      %v2241 = vsub.f32 %v2239, %v2240
      %v2242 = vand.u32 %v2241, 4294901760
      %2243 = vmatmul.mubr.f32.gmra.mxu0 %v2242
      %v2244 = vpop.f32.mrf.mxu0
      %v2245 = vadd.f32 %v1776, %v2244
      %v2246 = vpop.f32.mrf.mxu0
      %v2247 = vand.u32 %v1818, 4294901760
      %v2248 = vsub.f32 %v1818, %v2247
      %v2249 = vand.u32 %v2248, 4294901760
      %v2250 = vsub.f32 %v2248, %v2249
      %v2251 = vand.u32 %v2250, 4294901760
      %2252 = vmatprep.mubr.f32.mxu0 %v2251
      %v2253 = vand.u32 %v1651, 4294901760
      %v2254 = vsub.f32 %v1651, %v2253
      %v2255 = vand.u32 %v2254, 4294901760
      %v2256 = vsub.f32 %v2254, %v2255
      %v2257 = vand.u32 %v2256, 4294901760
      %2258 = vmatmul.mubr.f32.gmra.mxu0 %v2257
      %v2259 = vpop.f32.mrf.mxu0
      %v2260 = vadd.f32 %v1776, %v2259
      %v2261 = vpop.f32.mrf.mxu0
      %v2262 = vand.u32 %v1821, 4294901760
      %v2263 = vsub.f32 %v1821, %v2262
      %v2264 = vand.u32 %v2263, 4294901760
      %v2265 = vsub.f32 %v2263, %v2264
      %v2266 = vand.u32 %v2265, 4294901760
      %2267 = vmatprep.mubr.f32.mxu0 %v2266
      %v2268 = vand.u32 %v1653, 4294901760
      %v2269 = vsub.f32 %v1653, %v2268
      %v2270 = vand.u32 %v2269, 4294901760
      %v2271 = vsub.f32 %v2269, %v2270
      %v2272 = vand.u32 %v2271, 4294901760
      %2273 = vmatmul.mubr.f32.gmra.mxu0 %v2272
      %v2274 = vpop.f32.mrf.mxu0
      %v2275 = vadd.f32 %v1776, %v2274
      %v2276 = vpop.f32.mrf.mxu0
      %v2277 = vand.u32 %v1824, 4294901760
      %v2278 = vsub.f32 %v1824, %v2277
      %v2279 = vand.u32 %v2278, 4294901760
      %v2280 = vsub.f32 %v2278, %v2279
      %v2281 = vand.u32 %v2280, 4294901760
      %2282 = vmatprep.mubr.f32.mxu0 %v2281
      %v2283 = vand.u32 %v1655, 4294901760
      %v2284 = vsub.f32 %v1655, %v2283
      %v2285 = vand.u32 %v2284, 4294901760
      %v2286 = vsub.f32 %v2284, %v2285
      %v2287 = vand.u32 %v2286, 4294901760
      %2288 = vmatmul.mubr.f32.gmra.mxu0 %v2287
      %v2289 = vpop.f32.mrf.mxu0
      %v2290 = vadd.f32 %v1776, %v2289
      %v2291 = vpop.f32.mrf.mxu0
      %v2292 = vand.u32 %v1827, 4294901760
      %v2293 = vsub.f32 %v1827, %v2292
      %v2294 = vand.u32 %v2293, 4294901760
      %v2295 = vsub.f32 %v2293, %v2294
      %v2296 = vand.u32 %v2295, 4294901760
      %2297 = vmatprep.mubr.f32.mxu0 %v2296
      %v2298 = vand.u32 %v1657, 4294901760
      %v2299 = vsub.f32 %v1657, %v2298
      %v2300 = vand.u32 %v2299, 4294901760
      %v2301 = vsub.f32 %v2299, %v2300
      %v2302 = vand.u32 %v2301, 4294901760
      %2303 = vmatmul.mubr.f32.gmra.mxu0 %v2302
      %v2304 = vpop.f32.mrf.mxu0
      %v2305 = vadd.f32 %v1776, %v2304
      %v2306 = vpop.f32.mrf.mxu0
      %v2307 = vand.u32 %v1830, 4294901760
      %v2308 = vsub.f32 %v1830, %v2307
      %v2309 = vand.u32 %v2308, 4294901760
      %v2310 = vsub.f32 %v2308, %v2309
      %v2311 = vand.u32 %v2310, 4294901760
      %2312 = vmatprep.mubr.f32.mxu0 %v2311
      %v2313 = vand.u32 %v1659, 4294901760
      %v2314 = vsub.f32 %v1659, %v2313
      %v2315 = vand.u32 %v2314, 4294901760
      %v2316 = vsub.f32 %v2314, %v2315
      %v2317 = vand.u32 %v2316, 4294901760
      %2318 = vmatmul.mubr.f32.gmra.mxu0 %v2317
      %v2319 = vpop.f32.mrf.mxu0
      %v2320 = vadd.f32 %v1776, %v2319
      %v2321 = vpop.f32.mrf.mxu0
      %v2322 = vand.u32 %v1833, 4294901760
      %v2323 = vsub.f32 %v1833, %v2322
      %v2324 = vand.u32 %v2323, 4294901760
      %v2325 = vsub.f32 %v2323, %v2324
      %v2326 = vand.u32 %v2325, 4294901760
      %2327 = vmatprep.mubr.f32.mxu0 %v2326
      %v2328 = vand.u32 %v1661, 4294901760
      %v2329 = vsub.f32 %v1661, %v2328
      %v2330 = vand.u32 %v2329, 4294901760
      %v2331 = vsub.f32 %v2329, %v2330
      %v2332 = vand.u32 %v2331, 4294901760
      %2333 = vmatmul.mubr.f32.gmra.mxu0 %v2332
      %v2334 = vpop.f32.mrf.mxu0
      %v2335 = vadd.f32 %v1776, %v2334
      %v2336 = vpop.f32.mrf.mxu0
      %v2337 = vand.u32 %v1836, 4294901760
      %v2338 = vsub.f32 %v1836, %v2337
      %v2339 = vand.u32 %v2338, 4294901760
      %v2340 = vsub.f32 %v2338, %v2339
      %v2341 = vand.u32 %v2340, 4294901760
      %2342 = vmatprep.mubr.f32.mxu0 %v2341
      %v2343 = vand.u32 %v1663, 4294901760
      %v2344 = vsub.f32 %v1663, %v2343
      %v2345 = vand.u32 %v2344, 4294901760
      %v2346 = vsub.f32 %v2344, %v2345
      %v2347 = vand.u32 %v2346, 4294901760
      %2348 = vmatmul.mubr.f32.gmra.mxu0 %v2347
      %v2349 = vpop.f32.mrf.mxu0
      %v2350 = vadd.f32 %v1776, %v2349
      %v2351 = vpop.f32.mrf.mxu0
      %v2352 = vand.u32 %v1839, 4294901760
      %v2353 = vsub.f32 %v1839, %v2352
      %v2354 = vand.u32 %v2353, 4294901760
      %v2355 = vsub.f32 %v2353, %v2354
      %v2356 = vand.u32 %v2355, 4294901760
      %2357 = vmatprep.mubr.f32.mxu0 %v2356
      %v2358 = vand.u32 %v1665, 4294901760
      %v2359 = vsub.f32 %v1665, %v2358
      %v2360 = vand.u32 %v2359, 4294901760
      %v2361 = vsub.f32 %v2359, %v2360
      %v2362 = vand.u32 %v2361, 4294901760
      %2363 = vmatmul.mubr.f32.gmra.mxu0 %v2362
      %v2364 = vpop.f32.mrf.mxu0
      %v2365 = vadd.f32 %v1776, %v2364
      %v2366 = vpop.f32.mrf.mxu0
      %v2367 = vand.u32 %v1842, 4294901760
      %v2368 = vsub.f32 %v1842, %v2367
      %v2369 = vand.u32 %v2368, 4294901760
      %v2370 = vsub.f32 %v2368, %v2369
      %v2371 = vand.u32 %v2370, 4294901760
      %2372 = vmatprep.mubr.f32.mxu0 %v2371
      %v2373 = vand.u32 %v1667, 4294901760
      %v2374 = vsub.f32 %v1667, %v2373
      %v2375 = vand.u32 %v2374, 4294901760
      %v2376 = vsub.f32 %v2374, %v2375
      %v2377 = vand.u32 %v2376, 4294901760
      %2378 = vmatmul.mubr.f32.gmra.mxu0 %v2377
      %v2379 = vpop.f32.mrf.mxu0
      %v2380 = vadd.f32 %v1776, %v2379
      %v2381 = vpop.f32.mrf.mxu0
      %v2382 = vand.u32 %v1845, 4294901760
      %v2383 = vsub.f32 %v1845, %v2382
      %v2384 = vand.u32 %v2383, 4294901760
      %v2385 = vsub.f32 %v2383, %v2384
      %v2386 = vand.u32 %v2385, 4294901760
      %2387 = vmatprep.mubr.f32.mxu0 %v2386
      %v2388 = vand.u32 %v1669, 4294901760
      %v2389 = vsub.f32 %v1669, %v2388
      %v2390 = vand.u32 %v2389, 4294901760
      %v2391 = vsub.f32 %v2389, %v2390
      %v2392 = vand.u32 %v2391, 4294901760
      %2393 = vmatmul.mubr.f32.gmra.mxu0 %v2392
      %v2394 = vpop.f32.mrf.mxu0
      %v2395 = vadd.f32 %v1776, %v2394
      %v2396 = vpop.f32.mrf.mxu0
      %v2397 = vand.u32 %v1848, 4294901760
      %v2398 = vsub.f32 %v1848, %v2397
      %v2399 = vand.u32 %v2398, 4294901760
      %v2400 = vsub.f32 %v2398, %v2399
      %v2401 = vand.u32 %v2400, 4294901760
      %2402 = vmatprep.mubr.f32.mxu0 %v2401
      %v2403 = vand.u32 %v1671, 4294901760
      %v2404 = vsub.f32 %v1671, %v2403
      %v2405 = vand.u32 %v2404, 4294901760
      %v2406 = vsub.f32 %v2404, %v2405
      %v2407 = vand.u32 %v2406, 4294901760
      %2408 = vmatmul.mubr.f32.gmra.mxu0 %v2407
      %v2409 = vpop.f32.mrf.mxu0
      %v2410 = vadd.f32 %v1776, %v2409
      %v2411 = vpop.f32.mrf.mxu0
      %v2412 = vand.u32 %v1851, 4294901760
      %v2413 = vsub.f32 %v1851, %v2412
      %v2414 = vand.u32 %v2413, 4294901760
      %v2415 = vsub.f32 %v2413, %v2414
      %v2416 = vand.u32 %v2415, 4294901760
      %2417 = vmatprep.mubr.f32.mxu0 %v2416
      %v2418 = vand.u32 %v1673, 4294901760
      %v2419 = vsub.f32 %v1673, %v2418
      %v2420 = vand.u32 %v2419, 4294901760
      %v2421 = vsub.f32 %v2419, %v2420
      %v2422 = vand.u32 %v2421, 4294901760
      %2423 = vmatmul.mubr.f32.gmra.mxu0 %v2422
      %v2424 = vpop.f32.mrf.mxu0
      %v2425 = vadd.f32 %v1776, %v2424
      %v2426 = vpop.f32.mrf.mxu0
      %v2427 = vand.u32 %v1854, 4294901760
      %v2428 = vsub.f32 %v1854, %v2427
      %v2429 = vand.u32 %v2428, 4294901760
      %v2430 = vsub.f32 %v2428, %v2429
      %v2431 = vand.u32 %v2430, 4294901760
      %2432 = vmatprep.mubr.f32.mxu0 %v2431
      %v2433 = vand.u32 %v1675, 4294901760
      %v2434 = vsub.f32 %v1675, %v2433
      %v2435 = vand.u32 %v2434, 4294901760
      %v2436 = vsub.f32 %v2434, %v2435
      %v2437 = vand.u32 %v2436, 4294901760
      %2438 = vmatmul.mubr.f32.gmra.mxu0 %v2437
      %v2439 = vpop.f32.mrf.mxu0
      %v2440 = vadd.f32 %v1776, %v2439
      %v2441 = vpop.f32.mrf.mxu0
      %v2442 = vand.u32 %v1857, 4294901760
      %v2443 = vsub.f32 %v1857, %v2442
      %v2444 = vand.u32 %v2443, 4294901760
      %v2445 = vsub.f32 %v2443, %v2444
      %v2446 = vand.u32 %v2445, 4294901760
      %2447 = vmatprep.mubr.f32.mxu0 %v2446
      %v2448 = vand.u32 %v1677, 4294901760
      %v2449 = vsub.f32 %v1677, %v2448
      %v2450 = vand.u32 %v2449, 4294901760
      %v2451 = vsub.f32 %v2449, %v2450
      %v2452 = vand.u32 %v2451, 4294901760
      %2453 = vmatmul.mubr.f32.gmra.mxu0 %v2452
      %v2454 = vpop.f32.mrf.mxu0
      %v2455 = vadd.f32 %v1776, %v2454
      %v2456 = vpop.f32.mrf.mxu0
      %v2457 = vand.u32 %v1860, 4294901760
      %v2458 = vsub.f32 %v1860, %v2457
      %v2459 = vand.u32 %v2458, 4294901760
      %v2460 = vsub.f32 %v2458, %v2459
      %v2461 = vand.u32 %v2460, 4294901760
      %2462 = vmatprep.mubr.f32.mxu0 %v2461
      %v2463 = vand.u32 %v1679, 4294901760
      %v2464 = vsub.f32 %v1679, %v2463
      %v2465 = vand.u32 %v2464, 4294901760
      %v2466 = vsub.f32 %v2464, %v2465
      %v2467 = vand.u32 %v2466, 4294901760
      %2468 = vmatmul.mubr.f32.gmra.mxu0 %v2467
      %v2469 = vpop.f32.mrf.mxu0
      %v2470 = vadd.f32 %v1776, %v2469
      %v2471 = vpop.f32.mrf.mxu0
      %v2472 = vand.u32 %v1863, 4294901760
      %v2473 = vsub.f32 %v1863, %v2472
      %v2474 = vand.u32 %v2473, 4294901760
      %v2475 = vsub.f32 %v2473, %v2474
      %v2476 = vand.u32 %v2475, 4294901760
      %2477 = vmatprep.mubr.f32.mxu0 %v2476
      %v2478 = vand.u32 %v1681, 4294901760
      %v2479 = vsub.f32 %v1681, %v2478
      %v2480 = vand.u32 %v2479, 4294901760
      %v2481 = vsub.f32 %v2479, %v2480
      %v2482 = vand.u32 %v2481, 4294901760
      %2483 = vmatmul.mubr.f32.gmra.mxu0 %v2482
      %v2484 = vpop.f32.mrf.mxu0
      %v2485 = vadd.f32 %v1776, %v2484
      %v2486 = vpop.f32.mrf.mxu0
      %v2487 = vand.u32 %v1866, 4294901760
      %v2488 = vsub.f32 %v1866, %v2487
      %v2489 = vand.u32 %v2488, 4294901760
      %v2490 = vsub.f32 %v2488, %v2489
      %v2491 = vand.u32 %v2490, 4294901760
      %2492 = vmatprep.mubr.f32.mxu0 %v2491
      %v2493 = vand.u32 %v1683, 4294901760
      %v2494 = vsub.f32 %v1683, %v2493
      %v2495 = vand.u32 %v2494, 4294901760
      %v2496 = vsub.f32 %v2494, %v2495
      %v2497 = vand.u32 %v2496, 4294901760
      %2498 = vmatmul.mubr.f32.gmra.mxu0 %v2497
      %v2499 = vpop.f32.mrf.mxu0
      %v2500 = vadd.f32 %v1776, %v2499
      %v2501 = vpop.f32.mrf.mxu0
      %v2502 = vand.u32 %v1869, 4294901760
      %v2503 = vsub.f32 %v1869, %v2502
      %v2504 = vand.u32 %v2503, 4294901760
      %v2505 = vsub.f32 %v2503, %v2504
      %v2506 = vand.u32 %v2505, 4294901760
      %2507 = vmatprep.mubr.f32.mxu0 %v2506
      %v2508 = vand.u32 %v1685, 4294901760
      %v2509 = vsub.f32 %v1685, %v2508
      %v2510 = vand.u32 %v2509, 4294901760
      %v2511 = vsub.f32 %v2509, %v2510
      %v2512 = vand.u32 %v2511, 4294901760
      %2513 = vmatmul.mubr.f32.gmra.mxu0 %v2512
      %v2514 = vpop.f32.mrf.mxu0
      %v2515 = vadd.f32 %v1776, %v2514
      %v2516 = vpop.f32.mrf.mxu0
      %v2517 = vand.u32 %v1872, 4294901760
      %v2518 = vsub.f32 %v1872, %v2517
      %v2519 = vand.u32 %v2518, 4294901760
      %v2520 = vsub.f32 %v2518, %v2519
      %v2521 = vand.u32 %v2520, 4294901760
      %2522 = vmatprep.mubr.f32.mxu0 %v2521
      %v2523 = vand.u32 %v1687, 4294901760
      %v2524 = vsub.f32 %v1687, %v2523
      %v2525 = vand.u32 %v2524, 4294901760
      %v2526 = vsub.f32 %v2524, %v2525
      %v2527 = vand.u32 %v2526, 4294901760
      %2528 = vmatmul.mubr.f32.gmra.mxu0 %v2527
      %v2529 = vpop.f32.mrf.mxu0
      %v2530 = vadd.f32 %v1776, %v2529
      %v2531 = vpop.f32.mrf.mxu0
      %v2532 = vand.u32 %v1875, 4294901760
      %v2533 = vsub.f32 %v1875, %v2532
      %v2534 = vand.u32 %v2533, 4294901760
      %v2535 = vsub.f32 %v2533, %v2534
      %v2536 = vand.u32 %v2535, 4294901760
      %2537 = vmatprep.mubr.f32.mxu0 %v2536
      %v2538 = vand.u32 %v1689, 4294901760
      %v2539 = vsub.f32 %v1689, %v2538
      %v2540 = vand.u32 %v2539, 4294901760
      %v2541 = vsub.f32 %v2539, %v2540
      %v2542 = vand.u32 %v2541, 4294901760
      %2543 = vmatmul.mubr.f32.gmra.mxu0 %v2542
      %v2544 = vpop.f32.mrf.mxu0
      %v2545 = vadd.f32 %v1776, %v2544
      %v2546 = vpop.f32.mrf.mxu0
      %v2547 = vand.u32 %v1878, 4294901760
      %v2548 = vsub.f32 %v1878, %v2547
      %v2549 = vand.u32 %v2548, 4294901760
      %v2550 = vsub.f32 %v2548, %v2549
      %v2551 = vand.u32 %v2550, 4294901760
      %2552 = vmatprep.mubr.f32.mxu0 %v2551
      %v2553 = vand.u32 %v1691, 4294901760
      %v2554 = vsub.f32 %v1691, %v2553
      %v2555 = vand.u32 %v2554, 4294901760
      %v2556 = vsub.f32 %v2554, %v2555
      %v2557 = vand.u32 %v2556, 4294901760
      %2558 = vmatmul.mubr.f32.gmra.mxu0 %v2557
      %v2559 = vpop.f32.mrf.mxu0
      %v2560 = vadd.f32 %v1776, %v2559
      %v2561 = vpop.f32.mrf.mxu0
      %v2562 = vand.u32 %v1881, 4294901760
      %v2563 = vsub.f32 %v1881, %v2562
      %v2564 = vand.u32 %v2563, 4294901760
      %v2565 = vsub.f32 %v2563, %v2564
      %v2566 = vand.u32 %v2565, 4294901760
      %2567 = vmatprep.mubr.f32.mxu0 %v2566
      %v2568 = vand.u32 %v1693, 4294901760
      %v2569 = vsub.f32 %v1693, %v2568
      %v2570 = vand.u32 %v2569, 4294901760
      %v2571 = vsub.f32 %v2569, %v2570
      %v2572 = vand.u32 %v2571, 4294901760
      %2573 = vmatmul.mubr.f32.gmra.mxu0 %v2572
      %v2574 = vpop.f32.mrf.mxu0
      %v2575 = vadd.f32 %v1776, %v2574
      %v2576 = vpop.f32.mrf.mxu0
      %v2577 = vand.u32 %v1884, 4294901760
      %v2578 = vsub.f32 %v1884, %v2577
      %v2579 = vand.u32 %v2578, 4294901760
      %v2580 = vsub.f32 %v2578, %v2579
      %v2581 = vand.u32 %v2580, 4294901760
      %2582 = vmatprep.mubr.f32.mxu0 %v2581
      %v2583 = vand.u32 %v1695, 4294901760
      %v2584 = vsub.f32 %v1695, %v2583
      %v2585 = vand.u32 %v2584, 4294901760
      %v2586 = vsub.f32 %v2584, %v2585
      %v2587 = vand.u32 %v2586, 4294901760
      %2588 = vmatmul.mubr.f32.gmra.mxu0 %v2587
      %v2589 = vpop.f32.mrf.mxu0
      %v2590 = vadd.f32 %v1776, %v2589
      %v2591 = vpop.f32.mrf.mxu0
      %v2592 = vand.u32 %v1887, 4294901760
      %v2593 = vsub.f32 %v1887, %v2592
      %v2594 = vand.u32 %v2593, 4294901760
      %v2595 = vsub.f32 %v2593, %v2594
      %v2596 = vand.u32 %v2595, 4294901760
      %2597 = vmatprep.mubr.f32.mxu0 %v2596
      %v2598 = vand.u32 %v1697, 4294901760
      %v2599 = vsub.f32 %v1697, %v2598
      %v2600 = vand.u32 %v2599, 4294901760
      %v2601 = vsub.f32 %v2599, %v2600
      %v2602 = vand.u32 %v2601, 4294901760
      %2603 = vmatmul.mubr.f32.gmra.mxu0 %v2602
      %v2604 = vpop.f32.mrf.mxu0
      %v2605 = vadd.f32 %v1776, %v2604
      %v2606 = vpop.f32.mrf.mxu0
      %v2607 = vand.u32 %v1890, 4294901760
      %v2608 = vsub.f32 %v1890, %v2607
      %v2609 = vand.u32 %v2608, 4294901760
      %v2610 = vsub.f32 %v2608, %v2609
      %v2611 = vand.u32 %v2610, 4294901760
      %2612 = vmatprep.mubr.f32.mxu0 %v2611
      %v2613 = vand.u32 %v1699, 4294901760
      %v2614 = vsub.f32 %v1699, %v2613
      %v2615 = vand.u32 %v2614, 4294901760
      %v2616 = vsub.f32 %v2614, %v2615
      %v2617 = vand.u32 %v2616, 4294901760
      %2618 = vmatmul.mubr.f32.gmra.mxu0 %v2617
      %v2619 = vpop.f32.mrf.mxu0
      %v2620 = vadd.f32 %v1776, %v2619
      %v2621 = vpop.f32.mrf.mxu0
      %v2622 = vand.u32 %v1893, 4294901760
      %v2623 = vsub.f32 %v1893, %v2622
      %v2624 = vand.u32 %v2623, 4294901760
      %v2625 = vsub.f32 %v2623, %v2624
      %v2626 = vand.u32 %v2625, 4294901760
      %2627 = vmatprep.mubr.f32.mxu0 %v2626
      %v2628 = vand.u32 %v1701, 4294901760
      %v2629 = vsub.f32 %v1701, %v2628
      %v2630 = vand.u32 %v2629, 4294901760
      %v2631 = vsub.f32 %v2629, %v2630
      %v2632 = vand.u32 %v2631, 4294901760
      %2633 = vmatmul.mubr.f32.gmra.mxu0 %v2632
      %v2634 = vpop.f32.mrf.mxu0
      %v2635 = vadd.f32 %v1776, %v2634
      %v2636 = vpop.f32.mrf.mxu0
      %v2637 = vand.u32 %v1896, 4294901760
      %v2638 = vsub.f32 %v1896, %v2637
      %v2639 = vand.u32 %v2638, 4294901760
      %v2640 = vsub.f32 %v2638, %v2639
      %v2641 = vand.u32 %v2640, 4294901760
      %2642 = vmatprep.mubr.f32.mxu0 %v2641
      %v2643 = vand.u32 %v1703, 4294901760
      %v2644 = vsub.f32 %v1703, %v2643
      %v2645 = vand.u32 %v2644, 4294901760
      %v2646 = vsub.f32 %v2644, %v2645
      %v2647 = vand.u32 %v2646, 4294901760
      %2648 = vmatmul.mubr.f32.gmra.mxu0 %v2647
      %v2649 = vpop.f32.mrf.mxu0
      %v2650 = vadd.f32 %v1776, %v2649
      %v2651 = vpop.f32.mrf.mxu0
      %v2652 = vand.u32 %v1899, 4294901760
      %v2653 = vsub.f32 %v1899, %v2652
      %v2654 = vand.u32 %v2653, 4294901760
      %v2655 = vsub.f32 %v2653, %v2654
      %v2656 = vand.u32 %v2655, 4294901760
      %2657 = vmatprep.mubr.f32.mxu0 %v2656
      %v2658 = vand.u32 %v1705, 4294901760
      %v2659 = vsub.f32 %v1705, %v2658
      %v2660 = vand.u32 %v2659, 4294901760
      %v2661 = vsub.f32 %v2659, %v2660
      %v2662 = vand.u32 %v2661, 4294901760
      %2663 = vmatmul.mubr.f32.gmra.mxu0 %v2662
      %v2664 = vpop.f32.mrf.mxu0
      %v2665 = vadd.f32 %v1776, %v2664
      %v2666 = vpop.f32.mrf.mxu0
      %v2667 = vand.u32 %v1902, 4294901760
      %v2668 = vsub.f32 %v1902, %v2667
      %v2669 = vand.u32 %v2668, 4294901760
      %v2670 = vsub.f32 %v2668, %v2669
      %v2671 = vand.u32 %v2670, 4294901760
      %2672 = vmatprep.mubr.f32.mxu0 %v2671
      %v2673 = vand.u32 %v1707, 4294901760
      %v2674 = vsub.f32 %v1707, %v2673
      %v2675 = vand.u32 %v2674, 4294901760
      %v2676 = vsub.f32 %v2674, %v2675
      %v2677 = vand.u32 %v2676, 4294901760
      %2678 = vmatmul.mubr.f32.gmra.mxu0 %v2677
      %v2679 = vpop.f32.mrf.mxu0
      %v2680 = vadd.f32 %v1776, %v2679
      %v2681 = vpop.f32.mrf.mxu0
      %v2682 = vand.u32 %v1905, 4294901760
      %v2683 = vsub.f32 %v1905, %v2682
      %v2684 = vand.u32 %v2683, 4294901760
      %v2685 = vsub.f32 %v2683, %v2684
      %v2686 = vand.u32 %v2685, 4294901760
      %2687 = vmatprep.mubr.f32.mxu0 %v2686
      %v2688 = vand.u32 %v1709, 4294901760
      %v2689 = vsub.f32 %v1709, %v2688
      %v2690 = vand.u32 %v2689, 4294901760
      %v2691 = vsub.f32 %v2689, %v2690
      %v2692 = vand.u32 %v2691, 4294901760
      %2693 = vmatmul.mubr.f32.gmra.mxu0 %v2692
      %v2694 = vpop.f32.mrf.mxu0
      %v2695 = vadd.f32 %v1776, %v2694
      %v2696 = vpop.f32.mrf.mxu0
      %v2697 = vand.u32 %v1908, 4294901760
      %v2698 = vsub.f32 %v1908, %v2697
      %v2699 = vand.u32 %v2698, 4294901760
      %v2700 = vsub.f32 %v2698, %v2699
      %v2701 = vand.u32 %v2700, 4294901760
      %2702 = vmatprep.mubr.f32.mxu0 %v2701
      %v2703 = vand.u32 %v1711, 4294901760
      %v2704 = vsub.f32 %v1711, %v2703
      %v2705 = vand.u32 %v2704, 4294901760
      %v2706 = vsub.f32 %v2704, %v2705
      %v2707 = vand.u32 %v2706, 4294901760
      %2708 = vmatmul.mubr.f32.gmra.mxu0 %v2707
      %v2709 = vpop.f32.mrf.mxu0
      %v2710 = vadd.f32 %v1776, %v2709
      %v2711 = vpop.f32.mrf.mxu0
      %v2712 = vand.u32 %v1911, 4294901760
      %v2713 = vsub.f32 %v1911, %v2712
      %v2714 = vand.u32 %v2713, 4294901760
      %v2715 = vsub.f32 %v2713, %v2714
      %v2716 = vand.u32 %v2715, 4294901760
      %2717 = vmatprep.mubr.f32.mxu0 %v2716
      %v2718 = vand.u32 %v1713, 4294901760
      %v2719 = vsub.f32 %v1713, %v2718
      %v2720 = vand.u32 %v2719, 4294901760
      %v2721 = vsub.f32 %v2719, %v2720
      %v2722 = vand.u32 %v2721, 4294901760
      %2723 = vmatmul.mubr.f32.gmra.mxu0 %v2722
      %v2724 = vpop.f32.mrf.mxu0
      %v2725 = vadd.f32 %v1776, %v2724
      %v2726 = vpop.f32.mrf.mxu0
      %v2727 = vand.u32 %v1914, 4294901760
      %v2728 = vsub.f32 %v1914, %v2727
      %v2729 = vand.u32 %v2728, 4294901760
      %v2730 = vsub.f32 %v2728, %v2729
      %v2731 = vand.u32 %v2730, 4294901760
      %2732 = vmatprep.mubr.f32.mxu0 %v2731
      %v2733 = vand.u32 %v1715, 4294901760
      %v2734 = vsub.f32 %v1715, %v2733
      %v2735 = vand.u32 %v2734, 4294901760
      %v2736 = vsub.f32 %v2734, %v2735
      %v2737 = vand.u32 %v2736, 4294901760
      %2738 = vmatmul.mubr.f32.gmra.mxu0 %v2737
      %v2739 = vpop.f32.mrf.mxu0
      %v2740 = vadd.f32 %v1776, %v2739
      %v2741 = vpop.f32.mrf.mxu0
      %v2742 = vand.u32 %v1917, 4294901760
      %v2743 = vsub.f32 %v1917, %v2742
      %v2744 = vand.u32 %v2743, 4294901760
      %v2745 = vsub.f32 %v2743, %v2744
      %v2746 = vand.u32 %v2745, 4294901760
      %2747 = vmatprep.mubr.f32.mxu0 %v2746
      %v2748 = vand.u32 %v1717, 4294901760
      %v2749 = vsub.f32 %v1717, %v2748
      %v2750 = vand.u32 %v2749, 4294901760
      %v2751 = vsub.f32 %v2749, %v2750
      %v2752 = vand.u32 %v2751, 4294901760
      %2753 = vmatmul.mubr.f32.gmra.mxu0 %v2752
      %v2754 = vpop.f32.mrf.mxu0
      %v2755 = vadd.f32 %v1776, %v2754
      %v2756 = vpop.f32.mrf.mxu0
      %v2757 = vand.u32 %v1920, 4294901760
      %v2758 = vsub.f32 %v1920, %v2757
      %v2759 = vand.u32 %v2758, 4294901760
      %v2760 = vsub.f32 %v2758, %v2759
      %v2761 = vand.u32 %v2760, 4294901760
      %2762 = vmatprep.mubr.f32.mxu0 %v2761
      %v2763 = vand.u32 %v1719, 4294901760
      %v2764 = vsub.f32 %v1719, %v2763
      %v2765 = vand.u32 %v2764, 4294901760
      %v2766 = vsub.f32 %v2764, %v2765
      %v2767 = vand.u32 %v2766, 4294901760
      %2768 = vmatmul.mubr.f32.gmra.mxu0 %v2767
      %v2769 = vpop.f32.mrf.mxu0
      %v2770 = vadd.f32 %v1776, %v2769
      %v2771 = vpop.f32.mrf.mxu0
      %v2772 = vand.u32 %v1923, 4294901760
      %v2773 = vsub.f32 %v1923, %v2772
      %v2774 = vand.u32 %v2773, 4294901760
      %v2775 = vsub.f32 %v2773, %v2774
      %v2776 = vand.u32 %v2775, 4294901760
      %2777 = vmatprep.mubr.f32.mxu0 %v2776
      %v2778 = vand.u32 %v1721, 4294901760
      %v2779 = vsub.f32 %v1721, %v2778
      %v2780 = vand.u32 %v2779, 4294901760
      %v2781 = vsub.f32 %v2779, %v2780
      %v2782 = vand.u32 %v2781, 4294901760
      %2783 = vmatmul.mubr.f32.gmra.mxu0 %v2782
      %v2784 = vpop.f32.mrf.mxu0
      %v2785 = vadd.f32 %v1776, %v2784
      %v2786 = vpop.f32.mrf.mxu0
      %v2787 = vand.u32 %v1926, 4294901760
      %v2788 = vsub.f32 %v1926, %v2787
      %v2789 = vand.u32 %v2788, 4294901760
      %v2790 = vsub.f32 %v2788, %v2789
      %v2791 = vand.u32 %v2790, 4294901760
      %2792 = vmatprep.mubr.f32.mxu0 %v2791
      %v2793 = vand.u32 %v1723, 4294901760
      %v2794 = vsub.f32 %v1723, %v2793
      %v2795 = vand.u32 %v2794, 4294901760
      %v2796 = vsub.f32 %v2794, %v2795
      %v2797 = vand.u32 %v2796, 4294901760
      %2798 = vmatmul.mubr.f32.gmra.mxu0 %v2797
      %v2799 = vpop.f32.mrf.mxu0
      %v2800 = vadd.f32 %v1776, %v2799
      %v2801 = vpop.f32.mrf.mxu0
      %v2802 = vand.u32 %v1929, 4294901760
      %v2803 = vsub.f32 %v1929, %v2802
      %v2804 = vand.u32 %v2803, 4294901760
      %v2805 = vsub.f32 %v2803, %v2804
      %v2806 = vand.u32 %v2805, 4294901760
      %2807 = vmatprep.mubr.f32.mxu0 %v2806
      %v2808 = vand.u32 %v1725, 4294901760
      %v2809 = vsub.f32 %v1725, %v2808
      %v2810 = vand.u32 %v2809, 4294901760
      %v2811 = vsub.f32 %v2809, %v2810
      %v2812 = vand.u32 %v2811, 4294901760
      %2813 = vmatmul.mubr.f32.gmra.mxu0 %v2812
      %v2814 = vpop.f32.mrf.mxu0
      %v2815 = vadd.f32 %v1776, %v2814
      %v2816 = vpop.f32.mrf.mxu0
      %v2817 = vand.u32 %v1932, 4294901760
      %v2818 = vsub.f32 %v1932, %v2817
      %v2819 = vand.u32 %v2818, 4294901760
      %v2820 = vsub.f32 %v2818, %v2819
      %v2821 = vand.u32 %v2820, 4294901760
      %2822 = vmatprep.mubr.f32.mxu0 %v2821
      %v2823 = vand.u32 %v1727, 4294901760
      %v2824 = vsub.f32 %v1727, %v2823
      %v2825 = vand.u32 %v2824, 4294901760
      %v2826 = vsub.f32 %v2824, %v2825
      %v2827 = vand.u32 %v2826, 4294901760
      %2828 = vmatmul.mubr.f32.gmra.mxu0 %v2827
      %v2829 = vpop.f32.mrf.mxu0
      %v2830 = vadd.f32 %v1776, %v2829
      %v2831 = vpop.f32.mrf.mxu0
      %v2832 = vand.u32 %v1935, 4294901760
      %v2833 = vsub.f32 %v1935, %v2832
      %v2834 = vand.u32 %v2833, 4294901760
      %v2835 = vsub.f32 %v2833, %v2834
      %v2836 = vand.u32 %v2835, 4294901760
      %2837 = vmatprep.mubr.f32.mxu0 %v2836
      %v2838 = vand.u32 %v1729, 4294901760
      %v2839 = vsub.f32 %v1729, %v2838
      %v2840 = vand.u32 %v2839, 4294901760
      %v2841 = vsub.f32 %v2839, %v2840
      %v2842 = vand.u32 %v2841, 4294901760
      %2843 = vmatmul.mubr.f32.gmra.mxu0 %v2842
      %v2844 = vpop.f32.mrf.mxu0
      %v2845 = vadd.f32 %v1776, %v2844
      %v2846 = vpop.f32.mrf.mxu0
      %v2847 = vand.u32 %v1938, 4294901760
      %v2848 = vsub.f32 %v1938, %v2847
      %v2849 = vand.u32 %v2848, 4294901760
      %v2850 = vsub.f32 %v2848, %v2849
      %v2851 = vand.u32 %v2850, 4294901760
      %2852 = vmatprep.mubr.f32.mxu0 %v2851
      %v2853 = vand.u32 %v1731, 4294901760
      %v2854 = vsub.f32 %v1731, %v2853
      %v2855 = vand.u32 %v2854, 4294901760
      %v2856 = vsub.f32 %v2854, %v2855
      %v2857 = vand.u32 %v2856, 4294901760
      %2858 = vmatmul.mubr.f32.gmra.mxu0 %v2857
      %v2859 = vpop.f32.mrf.mxu0
      %v2860 = vadd.f32 %v1776, %v2859
      %v2861 = vpop.f32.mrf.mxu0
      %v2862 = vand.u32 %v1941, 4294901760
      %v2863 = vsub.f32 %v1941, %v2862
      %v2864 = vand.u32 %v2863, 4294901760
      %v2865 = vsub.f32 %v2863, %v2864
      %v2866 = vand.u32 %v2865, 4294901760
      %2867 = vmatprep.mubr.f32.mxu0 %v2866
      %v2868 = vand.u32 %v1733, 4294901760
      %v2869 = vsub.f32 %v1733, %v2868
      %v2870 = vand.u32 %v2869, 4294901760
      %v2871 = vsub.f32 %v2869, %v2870
      %v2872 = vand.u32 %v2871, 4294901760
      %2873 = vmatmul.mubr.f32.gmra.mxu0 %v2872
      %v2874 = vpop.f32.mrf.mxu0
      %v2875 = vadd.f32 %v1776, %v2874
      %v2876 = vpop.f32.mrf.mxu0
      %v2877 = vand.u32 %v1944, 4294901760
      %v2878 = vsub.f32 %v1944, %v2877
      %v2879 = vand.u32 %v2878, 4294901760
      %v2880 = vsub.f32 %v2878, %v2879
      %v2881 = vand.u32 %v2880, 4294901760
      %2882 = vmatprep.mubr.f32.mxu0 %v2881
      %v2883 = vand.u32 %v1735, 4294901760
      %v2884 = vsub.f32 %v1735, %v2883
      %v2885 = vand.u32 %v2884, 4294901760
      %v2886 = vsub.f32 %v2884, %v2885
      %v2887 = vand.u32 %v2886, 4294901760
      %2888 = vmatmul.mubr.f32.gmra.mxu0 %v2887
      %v2889 = vpop.f32.mrf.mxu0
      %v2890 = vadd.f32 %v1776, %v2889
      %v2891 = vpop.f32.mrf.mxu0
      %v2892 = vand.u32 %v1947, 4294901760
      %v2893 = vsub.f32 %v1947, %v2892
      %v2894 = vand.u32 %v2893, 4294901760
      %v2895 = vsub.f32 %v2893, %v2894
      %v2896 = vand.u32 %v2895, 4294901760
      %2897 = vmatprep.mubr.f32.mxu0 %v2896
      %v2898 = vand.u32 %v1737, 4294901760
      %v2899 = vsub.f32 %v1737, %v2898
      %v2900 = vand.u32 %v2899, 4294901760
      %v2901 = vsub.f32 %v2899, %v2900
      %v2902 = vand.u32 %v2901, 4294901760
      %2903 = vmatmul.mubr.f32.gmra.mxu0 %v2902
      %v2904 = vpop.f32.mrf.mxu0
      %v2905 = vadd.f32 %v1776, %v2904
      %v2906 = vpop.f32.mrf.mxu0
      %v2907 = vand.u32 %v1950, 4294901760
      %v2908 = vsub.f32 %v1950, %v2907
      %v2909 = vand.u32 %v2908, 4294901760
      %v2910 = vsub.f32 %v2908, %v2909
      %v2911 = vand.u32 %v2910, 4294901760
      %2912 = vmatprep.mubr.f32.mxu0 %v2911
      %v2913 = vand.u32 %v1739, 4294901760
      %v2914 = vsub.f32 %v1739, %v2913
      %v2915 = vand.u32 %v2914, 4294901760
      %v2916 = vsub.f32 %v2914, %v2915
      %v2917 = vand.u32 %v2916, 4294901760
      %2918 = vmatmul.mubr.f32.gmra.mxu0 %v2917
      %v2919 = vpop.f32.mrf.mxu0
      %v2920 = vadd.f32 %v1776, %v2919
      %v2921 = vpop.f32.mrf.mxu0
      %v2922 = vand.u32 %v1953, 4294901760
      %v2923 = vsub.f32 %v1953, %v2922
      %v2924 = vand.u32 %v2923, 4294901760
      %v2925 = vsub.f32 %v2923, %v2924
      %v2926 = vand.u32 %v2925, 4294901760
      %2927 = vmatprep.mubr.f32.mxu0 %v2926
      %v2928 = vand.u32 %v1741, 4294901760
      %v2929 = vsub.f32 %v1741, %v2928
      %v2930 = vand.u32 %v2929, 4294901760
      %v2931 = vsub.f32 %v2929, %v2930
      %v2932 = vand.u32 %v2931, 4294901760
      %2933 = vmatmul.mubr.f32.gmra.mxu0 %v2932
      %v2934 = vpop.f32.mrf.mxu0
      %v2935 = vadd.f32 %v1776, %v2934
      %v2936 = vpop.f32.mrf.mxu0
      %v2937 = vand.u32 %v1956, 4294901760
      %v2938 = vsub.f32 %v1956, %v2937
      %v2939 = vand.u32 %v2938, 4294901760
      %v2940 = vsub.f32 %v2938, %v2939
      %v2941 = vand.u32 %v2940, 4294901760
      %2942 = vmatprep.mubr.f32.mxu0 %v2941
      %v2943 = vand.u32 %v1743, 4294901760
      %v2944 = vsub.f32 %v1743, %v2943
      %v2945 = vand.u32 %v2944, 4294901760
      %v2946 = vsub.f32 %v2944, %v2945
      %v2947 = vand.u32 %v2946, 4294901760
      %2948 = vmatmul.mubr.f32.gmra.mxu0 %v2947
      %v2949 = vpop.f32.mrf.mxu0
      %v2950 = vadd.f32 %v1776, %v2949
      %v2951 = vpop.f32.mrf.mxu0
      %v2952 = vand.u32 %v1959, 4294901760
      %v2953 = vsub.f32 %v1959, %v2952
      %v2954 = vand.u32 %v2953, 4294901760
      %v2955 = vsub.f32 %v2953, %v2954
      %v2956 = vand.u32 %v2955, 4294901760
      %2957 = vmatprep.mubr.f32.mxu0 %v2956
      %v2958 = vand.u32 %v1745, 4294901760
      %v2959 = vsub.f32 %v1745, %v2958
      %v2960 = vand.u32 %v2959, 4294901760
      %v2961 = vsub.f32 %v2959, %v2960
      %v2962 = vand.u32 %v2961, 4294901760
      %2963 = vmatmul.mubr.f32.gmra.mxu0 %v2962
      %v2964 = vpop.f32.mrf.mxu0
      %v2965 = vadd.f32 %v1776, %v2964
      %v2966 = vpop.f32.mrf.mxu0
      %v2967 = vand.u32 %v1962, 4294901760
      %v2968 = vsub.f32 %v1962, %v2967
      %v2969 = vand.u32 %v2968, 4294901760
      %v2970 = vsub.f32 %v2968, %v2969
      %v2971 = vand.u32 %v2970, 4294901760
      %2972 = vmatprep.mubr.f32.mxu0 %v2971
      %v2973 = vand.u32 %v1747, 4294901760
      %v2974 = vsub.f32 %v1747, %v2973
      %v2975 = vand.u32 %v2974, 4294901760
      %v2976 = vsub.f32 %v2974, %v2975
      %v2977 = vand.u32 %v2976, 4294901760
      %2978 = vmatmul.mubr.f32.gmra.mxu0 %v2977
      %v2979 = vpop.f32.mrf.mxu0
      %v2980 = vadd.f32 %v1776, %v2979
      %v2981 = vpop.f32.mrf.mxu0
      %v2982 = vand.u32 %v1965, 4294901760
      %v2983 = vsub.f32 %v1965, %v2982
      %v2984 = vand.u32 %v2983, 4294901760
      %v2985 = vsub.f32 %v2983, %v2984
      %v2986 = vand.u32 %v2985, 4294901760
      %2987 = vmatprep.mubr.f32.mxu0 %v2986
      %v2988 = vand.u32 %v1749, 4294901760
      %v2989 = vsub.f32 %v1749, %v2988
      %v2990 = vand.u32 %v2989, 4294901760
      %v2991 = vsub.f32 %v2989, %v2990
      %v2992 = vand.u32 %v2991, 4294901760
      %2993 = vmatmul.mubr.f32.gmra.mxu0 %v2992
      %v2994 = vpop.f32.mrf.mxu0
      %v2995 = vadd.f32 %v1776, %v2994
      %v2996 = vpop.f32.mrf.mxu0
      %v2997 = vand.u32 %v1968, 4294901760
      %v2998 = vsub.f32 %v1968, %v2997
      %v2999 = vand.u32 %v2998, 4294901760
      %v3000 = vsub.f32 %v2998, %v2999
      %v3001 = vand.u32 %v3000, 4294901760
      %3002 = vmatprep.mubr.f32.mxu0 %v3001
      %v3003 = vand.u32 %v1751, 4294901760
      %v3004 = vsub.f32 %v1751, %v3003
      %v3005 = vand.u32 %v3004, 4294901760
      %v3006 = vsub.f32 %v3004, %v3005
      %v3007 = vand.u32 %v3006, 4294901760
      %3008 = vmatmul.mubr.f32.gmra.mxu0 %v3007
      %v3009 = vpop.f32.mrf.mxu0
      %v3010 = vadd.f32 %v1776, %v3009
      %v3011 = vpop.f32.mrf.mxu0
      %3012 = vdwg.mxu0
      %3013 = vmatprep.subr.mxu0 0.0
      %v3014 = vand.u32 %v1768, 4294901760
      %v3015 = vsub.f32 %v1768, %v3014
      %v3016 = vand.u32 %v3015, 4294901760
      %v3017 = vsub.f32 %v3015, %v3016
      %v3018 = vand.u32 %v3017, 4294901760
      %3019 = vmatpush1.msra.mxu0 %v3018
      %3020 = vmatprep.subr.mxu0 0.0
      %v3021 = vand.u32 %v1767, 4294901760
      %v3022 = vsub.f32 %v1767, %v3021
      %v3023 = vand.u32 %v3022, 4294901760
      %v3024 = vsub.f32 %v3022, %v3023
      %v3025 = vand.u32 %v3024, 4294901760
      %3026 = vmatpush1.msra.mxu0 %v3025
      %3027 = vmatprep.subr.mxu0 0.0
      %v3028 = vand.u32 %v1766, 4294901760
      %v3029 = vsub.f32 %v1766, %v3028
      %v3030 = vand.u32 %v3029, 4294901760
      %v3031 = vsub.f32 %v3029, %v3030
      %v3032 = vand.u32 %v3031, 4294901760
      %3033 = vmatpush1.msra.mxu0 %v3032
      %3034 = vmatprep.subr.mxu0 0.0
      %v3035 = vand.u32 %v1765, 4294901760
      %v3036 = vsub.f32 %v1765, %v3035
      %v3037 = vand.u32 %v3036, 4294901760
      %v3038 = vsub.f32 %v3036, %v3037
      %v3039 = vand.u32 %v3038, 4294901760
      %3040 = vmatpush1.msra.mxu0 %v3039
      %3041 = vmatprep.subr.mxu0 0.0
      %v3042 = vand.u32 %v1764, 4294901760
      %v3043 = vsub.f32 %v1764, %v3042
      %v3044 = vand.u32 %v3043, 4294901760
      %v3045 = vsub.f32 %v3043, %v3044
      %v3046 = vand.u32 %v3045, 4294901760
      %3047 = vmatpush1.msra.mxu0 %v3046
      %3048 = vmatprep.subr.mxu0 0.0
      %v3049 = vand.u32 %v1763, 4294901760
      %v3050 = vsub.f32 %v1763, %v3049
      %v3051 = vand.u32 %v3050, 4294901760
      %v3052 = vsub.f32 %v3050, %v3051
      %v3053 = vand.u32 %v3052, 4294901760
      %3054 = vmatpush1.msra.mxu0 %v3053
      %3055 = vmatprep.subr.mxu0 0.0
      %v3056 = vand.u32 %v1762, 4294901760
      %v3057 = vsub.f32 %v1762, %v3056
      %v3058 = vand.u32 %v3057, 4294901760
      %v3059 = vsub.f32 %v3057, %v3058
      %v3060 = vand.u32 %v3059, 4294901760
      %3061 = vmatpush1.msra.mxu0 %v3060
      %3062 = vmatprep.subr.mxu0 0.0
      %v3063 = vand.u32 %v1761, 4294901760
      %v3064 = vsub.f32 %v1761, %v3063
      %v3065 = vand.u32 %v3064, 4294901760
      %v3066 = vsub.f32 %v3064, %v3065
      %v3067 = vand.u32 %v3066, 4294901760
      %3068 = vmatpush1.msra.mxu0 %v3067
      %3069 = vmatprep.subr.mxu0 0.0
      %v3070 = vand.u32 %v1760, 4294901760
      %v3071 = vsub.f32 %v1760, %v3070
      %v3072 = vand.u32 %v3071, 4294901760
      %v3073 = vsub.f32 %v3071, %v3072
      %v3074 = vand.u32 %v3073, 4294901760
      %3075 = vmatpush1.msra.mxu0 %v3074
      %3076 = vmatprep.subr.mxu0 0.0
      %v3077 = vand.u32 %v1759, 4294901760
      %v3078 = vsub.f32 %v1759, %v3077
      %v3079 = vand.u32 %v3078, 4294901760
      %v3080 = vsub.f32 %v3078, %v3079
      %v3081 = vand.u32 %v3080, 4294901760
      %3082 = vmatpush1.msra.mxu0 %v3081
      %3083 = vmatprep.subr.mxu0 0.0
      %v3084 = vand.u32 %v1758, 4294901760
      %v3085 = vsub.f32 %v1758, %v3084
      %v3086 = vand.u32 %v3085, 4294901760
      %v3087 = vsub.f32 %v3085, %v3086
      %v3088 = vand.u32 %v3087, 4294901760
      %3089 = vmatpush1.msra.mxu0 %v3088
      %3090 = vmatprep.subr.mxu0 0.0
      %v3091 = vand.u32 %v1757, 4294901760
      %v3092 = vsub.f32 %v1757, %v3091
      %v3093 = vand.u32 %v3092, 4294901760
      %v3094 = vsub.f32 %v3092, %v3093
      %v3095 = vand.u32 %v3094, 4294901760
      %3096 = vmatpush1.msra.mxu0 %v3095
      %3097 = vmatprep.subr.mxu0 0.0
      %v3098 = vand.u32 %v1756, 4294901760
      %v3099 = vsub.f32 %v1756, %v3098
      %v3100 = vand.u32 %v3099, 4294901760
      %v3101 = vsub.f32 %v3099, %v3100
      %v3102 = vand.u32 %v3101, 4294901760
      %3103 = vmatpush1.msra.mxu0 %v3102
      %3104 = vmatprep.subr.mxu0 0.0
      %v3105 = vand.u32 %v1755, 4294901760
      %v3106 = vsub.f32 %v1755, %v3105
      %v3107 = vand.u32 %v3106, 4294901760
      %v3108 = vsub.f32 %v3106, %v3107
      %v3109 = vand.u32 %v3108, 4294901760
      %3110 = vmatpush1.msra.mxu0 %v3109
      %3111 = vmatprep.subr.mxu0 0.0
      %v3112 = vand.u32 %v1754, 4294901760
      %v3113 = vsub.f32 %v1754, %v3112
      %v3114 = vand.u32 %v3113, 4294901760
      %v3115 = vsub.f32 %v3113, %v3114
      %v3116 = vand.u32 %v3115, 4294901760
      %3117 = vmatpush1.msra.mxu0 %v3116
      %3118 = vmatprep.subr.mxu0 0.0
      %v3119 = vand.u32 %v1753, 4294901760
      %v3120 = vsub.f32 %v1753, %v3119
      %v3121 = vand.u32 %v3120, 4294901760
      %v3122 = vsub.f32 %v3120, %v3121
      %v3123 = vand.u32 %v3122, 4294901760
      %3124 = vmatpush1.msra.mxu0 %v3123
      %3125 = vmatprep.subr.mxu0 0.0
      %3126 = vmatpush2.msra.mxu0 0.0
      %3127 = vmatprep.subr.mxu0 0.0
      %3128 = vmatpush2.msra.mxu0 0.0
      %3129 = vmatprep.subr.mxu0 0.0
      %3130 = vmatpush2.msra.mxu0 0.0
      %3131 = vmatprep.subr.mxu0 0.0
      %3132 = vmatpush2.msra.mxu0 0.0
      %3133 = vmatprep.subr.mxu0 0.0
      %3134 = vmatpush2.msra.mxu0 0.0
      %3135 = vmatprep.subr.mxu0 0.0
      %3136 = vmatpush2.msra.mxu0 0.0
      %3137 = vmatprep.subr.mxu0 0.0
      %3138 = vmatpush2.msra.mxu0 0.0
      %3139 = vmatprep.subr.mxu0 0.0
      %3140 = vmatpush2.msra.mxu0 0.0
      %3141 = vmatprep.subr.mxu0 0.0
      %3142 = vmatpush2.msra.mxu0 0.0
      %3143 = vmatprep.subr.mxu0 0.0
      %3144 = vmatpush2.msra.mxu0 0.0
      %3145 = vmatprep.subr.mxu0 0.0
      %3146 = vmatpush2.msra.mxu0 0.0
      %3147 = vmatprep.subr.mxu0 0.0
      %3148 = vmatpush2.msra.mxu0 0.0
      %3149 = vmatprep.subr.mxu0 0.0
      %3150 = vmatpush2.msra.mxu0 0.0
      %3151 = vmatprep.subr.mxu0 0.0
      %3152 = vmatpush2.msra.mxu0 0.0
      %3153 = vmatprep.subr.mxu0 0.0
      %v3154 = vand.u32 %v1770, 4294901760
      %v3155 = vsub.f32 %v1770, %v3154
      %v3156 = vand.u32 %v3155, 4294901760
      %v3157 = vsub.f32 %v3155, %v3156
      %v3158 = vand.u32 %v3157, 4294901760
      %3159 = vmatpush2.msra.mxu0 %v3158
      %3160 = vmatprep.subr.mxu0 0.0
      %v3161 = vand.u32 %v1769, 4294901760
      %v3162 = vsub.f32 %v1769, %v3161
      %v3163 = vand.u32 %v3162, 4294901760
      %v3164 = vsub.f32 %v3162, %v3163
      %v3165 = vand.u32 %v3164, 4294901760
      %3166 = vmatpush2.msra.mxu0 %v3165
      %v3167 = vand.u32 %v1779, 4294901760
      %3168 = vmatprep.mubr.f32.mxu0 %v3167
      %v3169 = vand.u32 %v1625, 4294901760
      %3170 = vmatmul.mubr.f32.gmra.mxu0 %v3169
      %v3171 = vpop.f32.mrf.mxu0
      %v3172 = vadd.f32 %v2065, %v3171
      %v3173 = vpop.f32.mrf.mxu0
      %v3174 = vand.u32 %v1782, 4294901760
      %3175 = vmatprep.mubr.f32.mxu0 %v3174
      %v3176 = vand.u32 %v1627, 4294901760
      %3177 = vmatmul.mubr.f32.gmra.mxu0 %v3176
      %v3178 = vpop.f32.mrf.mxu0
      %v3179 = vadd.f32 %v2080, %v3178
      %v3180 = vpop.f32.mrf.mxu0
      %v3181 = vand.u32 %v1785, 4294901760
      %3182 = vmatprep.mubr.f32.mxu0 %v3181
      %v3183 = vand.u32 %v1629, 4294901760
      %3184 = vmatmul.mubr.f32.gmra.mxu0 %v3183
      %v3185 = vpop.f32.mrf.mxu0
      %v3186 = vadd.f32 %v2095, %v3185
      %v3187 = vpop.f32.mrf.mxu0
      %v3188 = vand.u32 %v1788, 4294901760
      %3189 = vmatprep.mubr.f32.mxu0 %v3188
      %v3190 = vand.u32 %v1631, 4294901760
      %3191 = vmatmul.mubr.f32.gmra.mxu0 %v3190
      %v3192 = vpop.f32.mrf.mxu0
      %v3193 = vadd.f32 %v2110, %v3192
      %v3194 = vpop.f32.mrf.mxu0
      %v3195 = vand.u32 %v1791, 4294901760
      %3196 = vmatprep.mubr.f32.mxu0 %v3195
      %v3197 = vand.u32 %v1633, 4294901760
      %3198 = vmatmul.mubr.f32.gmra.mxu0 %v3197
      %v3199 = vpop.f32.mrf.mxu0
      %v3200 = vadd.f32 %v2125, %v3199
      %v3201 = vpop.f32.mrf.mxu0
      %v3202 = vand.u32 %v1794, 4294901760
      %3203 = vmatprep.mubr.f32.mxu0 %v3202
      %v3204 = vand.u32 %v1635, 4294901760
      %3205 = vmatmul.mubr.f32.gmra.mxu0 %v3204
      %v3206 = vpop.f32.mrf.mxu0
      %v3207 = vadd.f32 %v2140, %v3206
      %v3208 = vpop.f32.mrf.mxu0
      %v3209 = vand.u32 %v1797, 4294901760
      %3210 = vmatprep.mubr.f32.mxu0 %v3209
      %v3211 = vand.u32 %v1637, 4294901760
      %3212 = vmatmul.mubr.f32.gmra.mxu0 %v3211
      %v3213 = vpop.f32.mrf.mxu0
      %v3214 = vadd.f32 %v2155, %v3213
      %v3215 = vpop.f32.mrf.mxu0
      %v3216 = vand.u32 %v1800, 4294901760
      %3217 = vmatprep.mubr.f32.mxu0 %v3216
      %v3218 = vand.u32 %v1639, 4294901760
      %3219 = vmatmul.mubr.f32.gmra.mxu0 %v3218
      %v3220 = vpop.f32.mrf.mxu0
      %v3221 = vadd.f32 %v2170, %v3220
      %v3222 = vpop.f32.mrf.mxu0
      %v3223 = vand.u32 %v1803, 4294901760
      %3224 = vmatprep.mubr.f32.mxu0 %v3223
      %v3225 = vand.u32 %v1641, 4294901760
      %3226 = vmatmul.mubr.f32.gmra.mxu0 %v3225
      %v3227 = vpop.f32.mrf.mxu0
      %v3228 = vadd.f32 %v2185, %v3227
      %v3229 = vpop.f32.mrf.mxu0
      %v3230 = vand.u32 %v1806, 4294901760
      %3231 = vmatprep.mubr.f32.mxu0 %v3230
      %v3232 = vand.u32 %v1643, 4294901760
      %3233 = vmatmul.mubr.f32.gmra.mxu0 %v3232
      %v3234 = vpop.f32.mrf.mxu0
      %v3235 = vadd.f32 %v2200, %v3234
      %v3236 = vpop.f32.mrf.mxu0
      %v3237 = vand.u32 %v1809, 4294901760
      %3238 = vmatprep.mubr.f32.mxu0 %v3237
      %v3239 = vand.u32 %v1645, 4294901760
      %3240 = vmatmul.mubr.f32.gmra.mxu0 %v3239
      %v3241 = vpop.f32.mrf.mxu0
      %v3242 = vadd.f32 %v2215, %v3241
      %v3243 = vpop.f32.mrf.mxu0
      %v3244 = vand.u32 %v1812, 4294901760
      %3245 = vmatprep.mubr.f32.mxu0 %v3244
      %v3246 = vand.u32 %v1647, 4294901760
      %3247 = vmatmul.mubr.f32.gmra.mxu0 %v3246
      %v3248 = vpop.f32.mrf.mxu0
      %v3249 = vadd.f32 %v2230, %v3248
      %v3250 = vpop.f32.mrf.mxu0
      %v3251 = vand.u32 %v1815, 4294901760
      %3252 = vmatprep.mubr.f32.mxu0 %v3251
      %v3253 = vand.u32 %v1649, 4294901760
      %3254 = vmatmul.mubr.f32.gmra.mxu0 %v3253
      %v3255 = vpop.f32.mrf.mxu0
      %v3256 = vadd.f32 %v2245, %v3255
      %v3257 = vpop.f32.mrf.mxu0
      %v3258 = vand.u32 %v1818, 4294901760
      %3259 = vmatprep.mubr.f32.mxu0 %v3258
      %v3260 = vand.u32 %v1651, 4294901760
      %3261 = vmatmul.mubr.f32.gmra.mxu0 %v3260
      %v3262 = vpop.f32.mrf.mxu0
      %v3263 = vadd.f32 %v2260, %v3262
      %v3264 = vpop.f32.mrf.mxu0
      %v3265 = vand.u32 %v1821, 4294901760
      %3266 = vmatprep.mubr.f32.mxu0 %v3265
      %v3267 = vand.u32 %v1653, 4294901760
      %3268 = vmatmul.mubr.f32.gmra.mxu0 %v3267
      %v3269 = vpop.f32.mrf.mxu0
      %v3270 = vadd.f32 %v2275, %v3269
      %v3271 = vpop.f32.mrf.mxu0
      %v3272 = vand.u32 %v1824, 4294901760
      %3273 = vmatprep.mubr.f32.mxu0 %v3272
      %v3274 = vand.u32 %v1655, 4294901760
      %3275 = vmatmul.mubr.f32.gmra.mxu0 %v3274
      %v3276 = vpop.f32.mrf.mxu0
      %v3277 = vadd.f32 %v2290, %v3276
      %v3278 = vpop.f32.mrf.mxu0
      %v3279 = vand.u32 %v1827, 4294901760
      %3280 = vmatprep.mubr.f32.mxu0 %v3279
      %v3281 = vand.u32 %v1657, 4294901760
      %3282 = vmatmul.mubr.f32.gmra.mxu0 %v3281
      %v3283 = vpop.f32.mrf.mxu0
      %v3284 = vadd.f32 %v2305, %v3283
      %v3285 = vpop.f32.mrf.mxu0
      %v3286 = vand.u32 %v1830, 4294901760
      %3287 = vmatprep.mubr.f32.mxu0 %v3286
      %v3288 = vand.u32 %v1659, 4294901760
      %3289 = vmatmul.mubr.f32.gmra.mxu0 %v3288
      %v3290 = vpop.f32.mrf.mxu0
      %v3291 = vadd.f32 %v2320, %v3290
      %v3292 = vpop.f32.mrf.mxu0
      %v3293 = vand.u32 %v1833, 4294901760
      %3294 = vmatprep.mubr.f32.mxu0 %v3293
      %v3295 = vand.u32 %v1661, 4294901760
      %3296 = vmatmul.mubr.f32.gmra.mxu0 %v3295
      %v3297 = vpop.f32.mrf.mxu0
      %v3298 = vadd.f32 %v2335, %v3297
      %v3299 = vpop.f32.mrf.mxu0
      %v3300 = vand.u32 %v1836, 4294901760
      %3301 = vmatprep.mubr.f32.mxu0 %v3300
      %v3302 = vand.u32 %v1663, 4294901760
      %3303 = vmatmul.mubr.f32.gmra.mxu0 %v3302
      %v3304 = vpop.f32.mrf.mxu0
      %v3305 = vadd.f32 %v2350, %v3304
      %v3306 = vpop.f32.mrf.mxu0
      %v3307 = vand.u32 %v1839, 4294901760
      %3308 = vmatprep.mubr.f32.mxu0 %v3307
      %v3309 = vand.u32 %v1665, 4294901760
      %3310 = vmatmul.mubr.f32.gmra.mxu0 %v3309
      %v3311 = vpop.f32.mrf.mxu0
      %v3312 = vadd.f32 %v2365, %v3311
      %v3313 = vpop.f32.mrf.mxu0
      %v3314 = vand.u32 %v1842, 4294901760
      %3315 = vmatprep.mubr.f32.mxu0 %v3314
      %v3316 = vand.u32 %v1667, 4294901760
      %3317 = vmatmul.mubr.f32.gmra.mxu0 %v3316
      %v3318 = vpop.f32.mrf.mxu0
      %v3319 = vadd.f32 %v2380, %v3318
      %v3320 = vpop.f32.mrf.mxu0
      %v3321 = vand.u32 %v1845, 4294901760
      %3322 = vmatprep.mubr.f32.mxu0 %v3321
      %v3323 = vand.u32 %v1669, 4294901760
      %3324 = vmatmul.mubr.f32.gmra.mxu0 %v3323
      %v3325 = vpop.f32.mrf.mxu0
      %v3326 = vadd.f32 %v2395, %v3325
      %v3327 = vpop.f32.mrf.mxu0
      %v3328 = vand.u32 %v1848, 4294901760
      %3329 = vmatprep.mubr.f32.mxu0 %v3328
      %v3330 = vand.u32 %v1671, 4294901760
      %3331 = vmatmul.mubr.f32.gmra.mxu0 %v3330
      %v3332 = vpop.f32.mrf.mxu0
      %v3333 = vadd.f32 %v2410, %v3332
      %v3334 = vpop.f32.mrf.mxu0
      %v3335 = vand.u32 %v1851, 4294901760
      %3336 = vmatprep.mubr.f32.mxu0 %v3335
      %v3337 = vand.u32 %v1673, 4294901760
      %3338 = vmatmul.mubr.f32.gmra.mxu0 %v3337
      %v3339 = vpop.f32.mrf.mxu0
      %v3340 = vadd.f32 %v2425, %v3339
      %v3341 = vpop.f32.mrf.mxu0
      %v3342 = vand.u32 %v1854, 4294901760
      %3343 = vmatprep.mubr.f32.mxu0 %v3342
      %v3344 = vand.u32 %v1675, 4294901760
      %3345 = vmatmul.mubr.f32.gmra.mxu0 %v3344
      %v3346 = vpop.f32.mrf.mxu0
      %v3347 = vadd.f32 %v2440, %v3346
      %v3348 = vpop.f32.mrf.mxu0
      %v3349 = vand.u32 %v1857, 4294901760
      %3350 = vmatprep.mubr.f32.mxu0 %v3349
      %v3351 = vand.u32 %v1677, 4294901760
      %3352 = vmatmul.mubr.f32.gmra.mxu0 %v3351
      %v3353 = vpop.f32.mrf.mxu0
      %v3354 = vadd.f32 %v2455, %v3353
      %v3355 = vpop.f32.mrf.mxu0
      %v3356 = vand.u32 %v1860, 4294901760
      %3357 = vmatprep.mubr.f32.mxu0 %v3356
      %v3358 = vand.u32 %v1679, 4294901760
      %3359 = vmatmul.mubr.f32.gmra.mxu0 %v3358
      %v3360 = vpop.f32.mrf.mxu0
      %v3361 = vadd.f32 %v2470, %v3360
      %v3362 = vpop.f32.mrf.mxu0
      %v3363 = vand.u32 %v1863, 4294901760
      %3364 = vmatprep.mubr.f32.mxu0 %v3363
      %v3365 = vand.u32 %v1681, 4294901760
      %3366 = vmatmul.mubr.f32.gmra.mxu0 %v3365
      %v3367 = vpop.f32.mrf.mxu0
      %v3368 = vadd.f32 %v2485, %v3367
      %v3369 = vpop.f32.mrf.mxu0
      %v3370 = vand.u32 %v1866, 4294901760
      %3371 = vmatprep.mubr.f32.mxu0 %v3370
      %v3372 = vand.u32 %v1683, 4294901760
      %3373 = vmatmul.mubr.f32.gmra.mxu0 %v3372
      %v3374 = vpop.f32.mrf.mxu0
      %v3375 = vadd.f32 %v2500, %v3374
      %v3376 = vpop.f32.mrf.mxu0
      %v3377 = vand.u32 %v1869, 4294901760
      %3378 = vmatprep.mubr.f32.mxu0 %v3377
      %v3379 = vand.u32 %v1685, 4294901760
      %3380 = vmatmul.mubr.f32.gmra.mxu0 %v3379
      %v3381 = vpop.f32.mrf.mxu0
      %v3382 = vadd.f32 %v2515, %v3381
      %v3383 = vpop.f32.mrf.mxu0
      %v3384 = vand.u32 %v1872, 4294901760
      %3385 = vmatprep.mubr.f32.mxu0 %v3384
      %v3386 = vand.u32 %v1687, 4294901760
      %3387 = vmatmul.mubr.f32.gmra.mxu0 %v3386
      %v3388 = vpop.f32.mrf.mxu0
      %v3389 = vadd.f32 %v2530, %v3388
      %v3390 = vpop.f32.mrf.mxu0
      %v3391 = vand.u32 %v1875, 4294901760
      %3392 = vmatprep.mubr.f32.mxu0 %v3391
      %v3393 = vand.u32 %v1689, 4294901760
      %3394 = vmatmul.mubr.f32.gmra.mxu0 %v3393
      %v3395 = vpop.f32.mrf.mxu0
      %v3396 = vadd.f32 %v2545, %v3395
      %v3397 = vpop.f32.mrf.mxu0
      %v3398 = vand.u32 %v1878, 4294901760
      %3399 = vmatprep.mubr.f32.mxu0 %v3398
      %v3400 = vand.u32 %v1691, 4294901760
      %3401 = vmatmul.mubr.f32.gmra.mxu0 %v3400
      %v3402 = vpop.f32.mrf.mxu0
      %v3403 = vadd.f32 %v2560, %v3402
      %v3404 = vpop.f32.mrf.mxu0
      %v3405 = vand.u32 %v1881, 4294901760
      %3406 = vmatprep.mubr.f32.mxu0 %v3405
      %v3407 = vand.u32 %v1693, 4294901760
      %3408 = vmatmul.mubr.f32.gmra.mxu0 %v3407
      %v3409 = vpop.f32.mrf.mxu0
      %v3410 = vadd.f32 %v2575, %v3409
      %v3411 = vpop.f32.mrf.mxu0
      %v3412 = vand.u32 %v1884, 4294901760
      %3413 = vmatprep.mubr.f32.mxu0 %v3412
      %v3414 = vand.u32 %v1695, 4294901760
      %3415 = vmatmul.mubr.f32.gmra.mxu0 %v3414
      %v3416 = vpop.f32.mrf.mxu0
      %v3417 = vadd.f32 %v2590, %v3416
      %v3418 = vpop.f32.mrf.mxu0
      %v3419 = vand.u32 %v1887, 4294901760
      %3420 = vmatprep.mubr.f32.mxu0 %v3419
      %v3421 = vand.u32 %v1697, 4294901760
      %3422 = vmatmul.mubr.f32.gmra.mxu0 %v3421
      %v3423 = vpop.f32.mrf.mxu0
      %v3424 = vadd.f32 %v2605, %v3423
      %v3425 = vpop.f32.mrf.mxu0
      %v3426 = vand.u32 %v1890, 4294901760
      %3427 = vmatprep.mubr.f32.mxu0 %v3426
      %v3428 = vand.u32 %v1699, 4294901760
      %3429 = vmatmul.mubr.f32.gmra.mxu0 %v3428
      %v3430 = vpop.f32.mrf.mxu0
      %v3431 = vadd.f32 %v2620, %v3430
      %v3432 = vpop.f32.mrf.mxu0
      %v3433 = vand.u32 %v1893, 4294901760
      %3434 = vmatprep.mubr.f32.mxu0 %v3433
      %v3435 = vand.u32 %v1701, 4294901760
      %3436 = vmatmul.mubr.f32.gmra.mxu0 %v3435
      %v3437 = vpop.f32.mrf.mxu0
      %v3438 = vadd.f32 %v2635, %v3437
      %v3439 = vpop.f32.mrf.mxu0
      %v3440 = vand.u32 %v1896, 4294901760
      %3441 = vmatprep.mubr.f32.mxu0 %v3440
      %v3442 = vand.u32 %v1703, 4294901760
      %3443 = vmatmul.mubr.f32.gmra.mxu0 %v3442
      %v3444 = vpop.f32.mrf.mxu0
      %v3445 = vadd.f32 %v2650, %v3444
      %v3446 = vpop.f32.mrf.mxu0
      %v3447 = vand.u32 %v1899, 4294901760
      %3448 = vmatprep.mubr.f32.mxu0 %v3447
      %v3449 = vand.u32 %v1705, 4294901760
      %3450 = vmatmul.mubr.f32.gmra.mxu0 %v3449
      %v3451 = vpop.f32.mrf.mxu0
      %v3452 = vadd.f32 %v2665, %v3451
      %v3453 = vpop.f32.mrf.mxu0
      %v3454 = vand.u32 %v1902, 4294901760
      %3455 = vmatprep.mubr.f32.mxu0 %v3454
      %v3456 = vand.u32 %v1707, 4294901760
      %3457 = vmatmul.mubr.f32.gmra.mxu0 %v3456
      %v3458 = vpop.f32.mrf.mxu0
      %v3459 = vadd.f32 %v2680, %v3458
      %v3460 = vpop.f32.mrf.mxu0
      %v3461 = vand.u32 %v1905, 4294901760
      %3462 = vmatprep.mubr.f32.mxu0 %v3461
      %v3463 = vand.u32 %v1709, 4294901760
      %3464 = vmatmul.mubr.f32.gmra.mxu0 %v3463
      %v3465 = vpop.f32.mrf.mxu0
      %v3466 = vadd.f32 %v2695, %v3465
      %v3467 = vpop.f32.mrf.mxu0
      %v3468 = vand.u32 %v1908, 4294901760
      %3469 = vmatprep.mubr.f32.mxu0 %v3468
      %v3470 = vand.u32 %v1711, 4294901760
      %3471 = vmatmul.mubr.f32.gmra.mxu0 %v3470
      %v3472 = vpop.f32.mrf.mxu0
      %v3473 = vadd.f32 %v2710, %v3472
      %v3474 = vpop.f32.mrf.mxu0
      %v3475 = vand.u32 %v1911, 4294901760
      %3476 = vmatprep.mubr.f32.mxu0 %v3475
      %v3477 = vand.u32 %v1713, 4294901760
      %3478 = vmatmul.mubr.f32.gmra.mxu0 %v3477
      %v3479 = vpop.f32.mrf.mxu0
      %v3480 = vadd.f32 %v2725, %v3479
      %v3481 = vpop.f32.mrf.mxu0
      %v3482 = vand.u32 %v1914, 4294901760
      %3483 = vmatprep.mubr.f32.mxu0 %v3482
      %v3484 = vand.u32 %v1715, 4294901760
      %3485 = vmatmul.mubr.f32.gmra.mxu0 %v3484
      %v3486 = vpop.f32.mrf.mxu0
      %v3487 = vadd.f32 %v2740, %v3486
      %v3488 = vpop.f32.mrf.mxu0
      %v3489 = vand.u32 %v1917, 4294901760
      %3490 = vmatprep.mubr.f32.mxu0 %v3489
      %v3491 = vand.u32 %v1717, 4294901760
      %3492 = vmatmul.mubr.f32.gmra.mxu0 %v3491
      %v3493 = vpop.f32.mrf.mxu0
      %v3494 = vadd.f32 %v2755, %v3493
      %v3495 = vpop.f32.mrf.mxu0
      %v3496 = vand.u32 %v1920, 4294901760
      %3497 = vmatprep.mubr.f32.mxu0 %v3496
      %v3498 = vand.u32 %v1719, 4294901760
      %3499 = vmatmul.mubr.f32.gmra.mxu0 %v3498
      %v3500 = vpop.f32.mrf.mxu0
      %v3501 = vadd.f32 %v2770, %v3500
      %v3502 = vpop.f32.mrf.mxu0
      %v3503 = vand.u32 %v1923, 4294901760
      %3504 = vmatprep.mubr.f32.mxu0 %v3503
      %v3505 = vand.u32 %v1721, 4294901760
      %3506 = vmatmul.mubr.f32.gmra.mxu0 %v3505
      %v3507 = vpop.f32.mrf.mxu0
      %v3508 = vadd.f32 %v2785, %v3507
      %v3509 = vpop.f32.mrf.mxu0
      %v3510 = vand.u32 %v1926, 4294901760
      %3511 = vmatprep.mubr.f32.mxu0 %v3510
      %v3512 = vand.u32 %v1723, 4294901760
      %3513 = vmatmul.mubr.f32.gmra.mxu0 %v3512
      %v3514 = vpop.f32.mrf.mxu0
      %v3515 = vadd.f32 %v2800, %v3514
      %v3516 = vpop.f32.mrf.mxu0
      %v3517 = vand.u32 %v1929, 4294901760
      %3518 = vmatprep.mubr.f32.mxu0 %v3517
      %v3519 = vand.u32 %v1725, 4294901760
      %3520 = vmatmul.mubr.f32.gmra.mxu0 %v3519
      %v3521 = vpop.f32.mrf.mxu0
      %v3522 = vadd.f32 %v2815, %v3521
      %v3523 = vpop.f32.mrf.mxu0
      %v3524 = vand.u32 %v1932, 4294901760
      %3525 = vmatprep.mubr.f32.mxu0 %v3524
      %v3526 = vand.u32 %v1727, 4294901760
      %3527 = vmatmul.mubr.f32.gmra.mxu0 %v3526
      %v3528 = vpop.f32.mrf.mxu0
      %v3529 = vadd.f32 %v2830, %v3528
      %v3530 = vpop.f32.mrf.mxu0
      %v3531 = vand.u32 %v1935, 4294901760
      %3532 = vmatprep.mubr.f32.mxu0 %v3531
      %v3533 = vand.u32 %v1729, 4294901760
      %3534 = vmatmul.mubr.f32.gmra.mxu0 %v3533
      %v3535 = vpop.f32.mrf.mxu0
      %v3536 = vadd.f32 %v2845, %v3535
      %v3537 = vpop.f32.mrf.mxu0
      %v3538 = vand.u32 %v1938, 4294901760
      %3539 = vmatprep.mubr.f32.mxu0 %v3538
      %v3540 = vand.u32 %v1731, 4294901760
      %3541 = vmatmul.mubr.f32.gmra.mxu0 %v3540
      %v3542 = vpop.f32.mrf.mxu0
      %v3543 = vadd.f32 %v2860, %v3542
      %v3544 = vpop.f32.mrf.mxu0
      %v3545 = vand.u32 %v1941, 4294901760
      %3546 = vmatprep.mubr.f32.mxu0 %v3545
      %v3547 = vand.u32 %v1733, 4294901760
      %3548 = vmatmul.mubr.f32.gmra.mxu0 %v3547
      %v3549 = vpop.f32.mrf.mxu0
      %v3550 = vadd.f32 %v2875, %v3549
      %v3551 = vpop.f32.mrf.mxu0
      %v3552 = vand.u32 %v1944, 4294901760
      %3553 = vmatprep.mubr.f32.mxu0 %v3552
      %v3554 = vand.u32 %v1735, 4294901760
      %3555 = vmatmul.mubr.f32.gmra.mxu0 %v3554
      %v3556 = vpop.f32.mrf.mxu0
      %v3557 = vadd.f32 %v2890, %v3556
      %v3558 = vpop.f32.mrf.mxu0
      %v3559 = vand.u32 %v1947, 4294901760
      %3560 = vmatprep.mubr.f32.mxu0 %v3559
      %v3561 = vand.u32 %v1737, 4294901760
      %3562 = vmatmul.mubr.f32.gmra.mxu0 %v3561
      %v3563 = vpop.f32.mrf.mxu0
      %v3564 = vadd.f32 %v2905, %v3563
      %v3565 = vpop.f32.mrf.mxu0
      %v3566 = vand.u32 %v1950, 4294901760
      %3567 = vmatprep.mubr.f32.mxu0 %v3566
      %v3568 = vand.u32 %v1739, 4294901760
      %3569 = vmatmul.mubr.f32.gmra.mxu0 %v3568
      %v3570 = vpop.f32.mrf.mxu0
      %v3571 = vadd.f32 %v2920, %v3570
      %v3572 = vpop.f32.mrf.mxu0
      %v3573 = vand.u32 %v1953, 4294901760
      %3574 = vmatprep.mubr.f32.mxu0 %v3573
      %v3575 = vand.u32 %v1741, 4294901760
      %3576 = vmatmul.mubr.f32.gmra.mxu0 %v3575
      %v3577 = vpop.f32.mrf.mxu0
      %v3578 = vadd.f32 %v2935, %v3577
      %v3579 = vpop.f32.mrf.mxu0
      %v3580 = vand.u32 %v1956, 4294901760
      %3581 = vmatprep.mubr.f32.mxu0 %v3580
      %v3582 = vand.u32 %v1743, 4294901760
      %3583 = vmatmul.mubr.f32.gmra.mxu0 %v3582
      %v3584 = vpop.f32.mrf.mxu0
      %v3585 = vadd.f32 %v2950, %v3584
      %v3586 = vpop.f32.mrf.mxu0
      %v3587 = vand.u32 %v1959, 4294901760
      %3588 = vmatprep.mubr.f32.mxu0 %v3587
      %v3589 = vand.u32 %v1745, 4294901760
      %3590 = vmatmul.mubr.f32.gmra.mxu0 %v3589
      %v3591 = vpop.f32.mrf.mxu0
      %v3592 = vadd.f32 %v2965, %v3591
      %v3593 = vpop.f32.mrf.mxu0
      %v3594 = vand.u32 %v1962, 4294901760
      %3595 = vmatprep.mubr.f32.mxu0 %v3594
      %v3596 = vand.u32 %v1747, 4294901760
      %3597 = vmatmul.mubr.f32.gmra.mxu0 %v3596
      %v3598 = vpop.f32.mrf.mxu0
      %v3599 = vadd.f32 %v2980, %v3598
      %v3600 = vpop.f32.mrf.mxu0
      %v3601 = vand.u32 %v1965, 4294901760
      %3602 = vmatprep.mubr.f32.mxu0 %v3601
      %v3603 = vand.u32 %v1749, 4294901760
      %3604 = vmatmul.mubr.f32.gmra.mxu0 %v3603
      %v3605 = vpop.f32.mrf.mxu0
      %v3606 = vadd.f32 %v2995, %v3605
      %v3607 = vpop.f32.mrf.mxu0
      %v3608 = vand.u32 %v1968, 4294901760
      %3609 = vmatprep.mubr.f32.mxu0 %v3608
      %v3610 = vand.u32 %v1751, 4294901760
      %3611 = vmatmul.mubr.f32.gmra.mxu0 %v3610
      %v3612 = vpop.f32.mrf.mxu0
      %v3613 = vadd.f32 %v3010, %v3612
      %v3614 = vpop.f32.mrf.mxu0
      %3615 = vdwg.mxu0
      %3616 = vmatprep.subr.mxu0 0.0
      %v3617 = vand.u32 %v1768, 4294901760
      %v3618 = vsub.f32 %v1768, %v3617
      %3619 = vmatpush1.msra.mxu0 %v3618
      %3620 = vmatprep.subr.mxu0 0.0
      %v3621 = vand.u32 %v1767, 4294901760
      %v3622 = vsub.f32 %v1767, %v3621
      %3623 = vmatpush1.msra.mxu0 %v3622
      %3624 = vmatprep.subr.mxu0 0.0
      %v3625 = vand.u32 %v1766, 4294901760
      %v3626 = vsub.f32 %v1766, %v3625
      %3627 = vmatpush1.msra.mxu0 %v3626
      %3628 = vmatprep.subr.mxu0 0.0
      %v3629 = vand.u32 %v1765, 4294901760
      %v3630 = vsub.f32 %v1765, %v3629
      %3631 = vmatpush1.msra.mxu0 %v3630
      %3632 = vmatprep.subr.mxu0 0.0
      %v3633 = vand.u32 %v1764, 4294901760
      %v3634 = vsub.f32 %v1764, %v3633
      %3635 = vmatpush1.msra.mxu0 %v3634
      %3636 = vmatprep.subr.mxu0 0.0
      %v3637 = vand.u32 %v1763, 4294901760
      %v3638 = vsub.f32 %v1763, %v3637
      %3639 = vmatpush1.msra.mxu0 %v3638
      %3640 = vmatprep.subr.mxu0 0.0
      %v3641 = vand.u32 %v1762, 4294901760
      %v3642 = vsub.f32 %v1762, %v3641
      %3643 = vmatpush1.msra.mxu0 %v3642
      %3644 = vmatprep.subr.mxu0 0.0
      %v3645 = vand.u32 %v1761, 4294901760
      %v3646 = vsub.f32 %v1761, %v3645
      %3647 = vmatpush1.msra.mxu0 %v3646
      %3648 = vmatprep.subr.mxu0 0.0
      %v3649 = vand.u32 %v1760, 4294901760
      %v3650 = vsub.f32 %v1760, %v3649
      %3651 = vmatpush1.msra.mxu0 %v3650
      %3652 = vmatprep.subr.mxu0 0.0
      %v3653 = vand.u32 %v1759, 4294901760
      %v3654 = vsub.f32 %v1759, %v3653
      %3655 = vmatpush1.msra.mxu0 %v3654
      %3656 = vmatprep.subr.mxu0 0.0
      %v3657 = vand.u32 %v1758, 4294901760
      %v3658 = vsub.f32 %v1758, %v3657
      %3659 = vmatpush1.msra.mxu0 %v3658
      %3660 = vmatprep.subr.mxu0 0.0
      %v3661 = vand.u32 %v1757, 4294901760
      %v3662 = vsub.f32 %v1757, %v3661
      %3663 = vmatpush1.msra.mxu0 %v3662
      %3664 = vmatprep.subr.mxu0 0.0
      %v3665 = vand.u32 %v1756, 4294901760
      %v3666 = vsub.f32 %v1756, %v3665
      %3667 = vmatpush1.msra.mxu0 %v3666
      %3668 = vmatprep.subr.mxu0 0.0
      %v3669 = vand.u32 %v1755, 4294901760
      %v3670 = vsub.f32 %v1755, %v3669
      %3671 = vmatpush1.msra.mxu0 %v3670
      %3672 = vmatprep.subr.mxu0 0.0
      %v3673 = vand.u32 %v1754, 4294901760
      %v3674 = vsub.f32 %v1754, %v3673
      %3675 = vmatpush1.msra.mxu0 %v3674
      %3676 = vmatprep.subr.mxu0 0.0
      %v3677 = vand.u32 %v1753, 4294901760
      %v3678 = vsub.f32 %v1753, %v3677
      %3679 = vmatpush1.msra.mxu0 %v3678
      %3680 = vmatprep.subr.mxu0 0.0
      %3681 = vmatpush2.msra.mxu0 0.0
      %3682 = vmatprep.subr.mxu0 0.0
      %3683 = vmatpush2.msra.mxu0 0.0
      %3684 = vmatprep.subr.mxu0 0.0
      %3685 = vmatpush2.msra.mxu0 0.0
      %3686 = vmatprep.subr.mxu0 0.0
      %3687 = vmatpush2.msra.mxu0 0.0
      %3688 = vmatprep.subr.mxu0 0.0
      %3689 = vmatpush2.msra.mxu0 0.0
      %3690 = vmatprep.subr.mxu0 0.0
      %3691 = vmatpush2.msra.mxu0 0.0
      %3692 = vmatprep.subr.mxu0 0.0
      %3693 = vmatpush2.msra.mxu0 0.0
      %3694 = vmatprep.subr.mxu0 0.0
      %3695 = vmatpush2.msra.mxu0 0.0
      %3696 = vmatprep.subr.mxu0 0.0
      %3697 = vmatpush2.msra.mxu0 0.0
      %3698 = vmatprep.subr.mxu0 0.0
      %3699 = vmatpush2.msra.mxu0 0.0
      %3700 = vmatprep.subr.mxu0 0.0
      %3701 = vmatpush2.msra.mxu0 0.0
      %3702 = vmatprep.subr.mxu0 0.0
      %3703 = vmatpush2.msra.mxu0 0.0
      %3704 = vmatprep.subr.mxu0 0.0
      %3705 = vmatpush2.msra.mxu0 0.0
      %3706 = vmatprep.subr.mxu0 0.0
      %3707 = vmatpush2.msra.mxu0 0.0
      %3708 = vmatprep.subr.mxu0 0.0
      %v3709 = vand.u32 %v1770, 4294901760
      %v3710 = vsub.f32 %v1770, %v3709
      %3711 = vmatpush2.msra.mxu0 %v3710
      %3712 = vmatprep.subr.mxu0 0.0
      %v3713 = vand.u32 %v1769, 4294901760
      %v3714 = vsub.f32 %v1769, %v3713
      %3715 = vmatpush2.msra.mxu0 %v3714
      %v3716 = vand.u32 %v1779, 4294901760
      %v3717 = vsub.f32 %v1779, %v3716
      %3718 = vmatprep.mubr.f32.mxu0 %v3717
      %v3719 = vand.u32 %v1625, 4294901760
      %v3720 = vsub.f32 %v1625, %v3719
      %3721 = vmatmul.mubr.f32.gmra.mxu0 %v3720
      %v3722 = vpop.f32.mrf.mxu0
      %v3723 = vadd.f32 %v3172, %v3722
      %v3724 = vpop.f32.mrf.mxu0
      %v3725 = vand.u32 %v1782, 4294901760
      %v3726 = vsub.f32 %v1782, %v3725
      %3727 = vmatprep.mubr.f32.mxu0 %v3726
      %v3728 = vand.u32 %v1627, 4294901760
      %v3729 = vsub.f32 %v1627, %v3728
      %3730 = vmatmul.mubr.f32.gmra.mxu0 %v3729
      %v3731 = vpop.f32.mrf.mxu0
      %v3732 = vadd.f32 %v3179, %v3731
      %v3733 = vpop.f32.mrf.mxu0
      %v3734 = vand.u32 %v1785, 4294901760
      %v3735 = vsub.f32 %v1785, %v3734
      %3736 = vmatprep.mubr.f32.mxu0 %v3735
      %v3737 = vand.u32 %v1629, 4294901760
      %v3738 = vsub.f32 %v1629, %v3737
      %3739 = vmatmul.mubr.f32.gmra.mxu0 %v3738
      %v3740 = vpop.f32.mrf.mxu0
      %v3741 = vadd.f32 %v3186, %v3740
      %v3742 = vpop.f32.mrf.mxu0
      %v3743 = vand.u32 %v1788, 4294901760
      %v3744 = vsub.f32 %v1788, %v3743
      %3745 = vmatprep.mubr.f32.mxu0 %v3744
      %v3746 = vand.u32 %v1631, 4294901760
      %v3747 = vsub.f32 %v1631, %v3746
      %3748 = vmatmul.mubr.f32.gmra.mxu0 %v3747
      %v3749 = vpop.f32.mrf.mxu0
      %v3750 = vadd.f32 %v3193, %v3749
      %v3751 = vpop.f32.mrf.mxu0
      %v3752 = vand.u32 %v1791, 4294901760
      %v3753 = vsub.f32 %v1791, %v3752
      %3754 = vmatprep.mubr.f32.mxu0 %v3753
      %v3755 = vand.u32 %v1633, 4294901760
      %v3756 = vsub.f32 %v1633, %v3755
      %3757 = vmatmul.mubr.f32.gmra.mxu0 %v3756
      %v3758 = vpop.f32.mrf.mxu0
      %v3759 = vadd.f32 %v3200, %v3758
      %v3760 = vpop.f32.mrf.mxu0
      %v3761 = vand.u32 %v1794, 4294901760
      %v3762 = vsub.f32 %v1794, %v3761
      %3763 = vmatprep.mubr.f32.mxu0 %v3762
      %v3764 = vand.u32 %v1635, 4294901760
      %v3765 = vsub.f32 %v1635, %v3764
      %3766 = vmatmul.mubr.f32.gmra.mxu0 %v3765
      %v3767 = vpop.f32.mrf.mxu0
      %v3768 = vadd.f32 %v3207, %v3767
      %v3769 = vpop.f32.mrf.mxu0
      %v3770 = vand.u32 %v1797, 4294901760
      %v3771 = vsub.f32 %v1797, %v3770
      %3772 = vmatprep.mubr.f32.mxu0 %v3771
      %v3773 = vand.u32 %v1637, 4294901760
      %v3774 = vsub.f32 %v1637, %v3773
      %3775 = vmatmul.mubr.f32.gmra.mxu0 %v3774
      %v3776 = vpop.f32.mrf.mxu0
      %v3777 = vadd.f32 %v3214, %v3776
      %v3778 = vpop.f32.mrf.mxu0
      %v3779 = vand.u32 %v1800, 4294901760
      %v3780 = vsub.f32 %v1800, %v3779
      %3781 = vmatprep.mubr.f32.mxu0 %v3780
      %v3782 = vand.u32 %v1639, 4294901760
      %v3783 = vsub.f32 %v1639, %v3782
      %3784 = vmatmul.mubr.f32.gmra.mxu0 %v3783
      %v3785 = vpop.f32.mrf.mxu0
      %v3786 = vadd.f32 %v3221, %v3785
      %v3787 = vpop.f32.mrf.mxu0
      %v3788 = vand.u32 %v1803, 4294901760
      %v3789 = vsub.f32 %v1803, %v3788
      %3790 = vmatprep.mubr.f32.mxu0 %v3789
      %v3791 = vand.u32 %v1641, 4294901760
      %v3792 = vsub.f32 %v1641, %v3791
      %3793 = vmatmul.mubr.f32.gmra.mxu0 %v3792
      %v3794 = vpop.f32.mrf.mxu0
      %v3795 = vadd.f32 %v3228, %v3794
      %v3796 = vpop.f32.mrf.mxu0
      %v3797 = vand.u32 %v1806, 4294901760
      %v3798 = vsub.f32 %v1806, %v3797
      %3799 = vmatprep.mubr.f32.mxu0 %v3798
      %v3800 = vand.u32 %v1643, 4294901760
      %v3801 = vsub.f32 %v1643, %v3800
      %3802 = vmatmul.mubr.f32.gmra.mxu0 %v3801
      %v3803 = vpop.f32.mrf.mxu0
      %v3804 = vadd.f32 %v3235, %v3803
      %v3805 = vpop.f32.mrf.mxu0
      %v3806 = vand.u32 %v1809, 4294901760
      %v3807 = vsub.f32 %v1809, %v3806
      %3808 = vmatprep.mubr.f32.mxu0 %v3807
      %v3809 = vand.u32 %v1645, 4294901760
      %v3810 = vsub.f32 %v1645, %v3809
      %3811 = vmatmul.mubr.f32.gmra.mxu0 %v3810
      %v3812 = vpop.f32.mrf.mxu0
      %v3813 = vadd.f32 %v3242, %v3812
      %v3814 = vpop.f32.mrf.mxu0
      %v3815 = vand.u32 %v1812, 4294901760
      %v3816 = vsub.f32 %v1812, %v3815
      %3817 = vmatprep.mubr.f32.mxu0 %v3816
      %v3818 = vand.u32 %v1647, 4294901760
      %v3819 = vsub.f32 %v1647, %v3818
      %3820 = vmatmul.mubr.f32.gmra.mxu0 %v3819
      %v3821 = vpop.f32.mrf.mxu0
      %v3822 = vadd.f32 %v3249, %v3821
      %v3823 = vpop.f32.mrf.mxu0
      %v3824 = vand.u32 %v1815, 4294901760
      %v3825 = vsub.f32 %v1815, %v3824
      %3826 = vmatprep.mubr.f32.mxu0 %v3825
      %v3827 = vand.u32 %v1649, 4294901760
      %v3828 = vsub.f32 %v1649, %v3827
      %3829 = vmatmul.mubr.f32.gmra.mxu0 %v3828
      %v3830 = vpop.f32.mrf.mxu0
      %v3831 = vadd.f32 %v3256, %v3830
      %v3832 = vpop.f32.mrf.mxu0
      %v3833 = vand.u32 %v1818, 4294901760
      %v3834 = vsub.f32 %v1818, %v3833
      %3835 = vmatprep.mubr.f32.mxu0 %v3834
      %v3836 = vand.u32 %v1651, 4294901760
      %v3837 = vsub.f32 %v1651, %v3836
      %3838 = vmatmul.mubr.f32.gmra.mxu0 %v3837
      %v3839 = vpop.f32.mrf.mxu0
      %v3840 = vadd.f32 %v3263, %v3839
      %v3841 = vpop.f32.mrf.mxu0
      %v3842 = vand.u32 %v1821, 4294901760
      %v3843 = vsub.f32 %v1821, %v3842
      %3844 = vmatprep.mubr.f32.mxu0 %v3843
      %v3845 = vand.u32 %v1653, 4294901760
      %v3846 = vsub.f32 %v1653, %v3845
      %3847 = vmatmul.mubr.f32.gmra.mxu0 %v3846
      %v3848 = vpop.f32.mrf.mxu0
      %v3849 = vadd.f32 %v3270, %v3848
      %v3850 = vpop.f32.mrf.mxu0
      %v3851 = vand.u32 %v1824, 4294901760
      %v3852 = vsub.f32 %v1824, %v3851
      %3853 = vmatprep.mubr.f32.mxu0 %v3852
      %v3854 = vand.u32 %v1655, 4294901760
      %v3855 = vsub.f32 %v1655, %v3854
      %3856 = vmatmul.mubr.f32.gmra.mxu0 %v3855
      %v3857 = vpop.f32.mrf.mxu0
      %v3858 = vadd.f32 %v3277, %v3857
      %v3859 = vpop.f32.mrf.mxu0
      %v3860 = vand.u32 %v1827, 4294901760
      %v3861 = vsub.f32 %v1827, %v3860
      %3862 = vmatprep.mubr.f32.mxu0 %v3861
      %v3863 = vand.u32 %v1657, 4294901760
      %v3864 = vsub.f32 %v1657, %v3863
      %3865 = vmatmul.mubr.f32.gmra.mxu0 %v3864
      %v3866 = vpop.f32.mrf.mxu0
      %v3867 = vadd.f32 %v3284, %v3866
      %v3868 = vpop.f32.mrf.mxu0
      %v3869 = vand.u32 %v1830, 4294901760
      %v3870 = vsub.f32 %v1830, %v3869
      %3871 = vmatprep.mubr.f32.mxu0 %v3870
      %v3872 = vand.u32 %v1659, 4294901760
      %v3873 = vsub.f32 %v1659, %v3872
      %3874 = vmatmul.mubr.f32.gmra.mxu0 %v3873
      %v3875 = vpop.f32.mrf.mxu0
      %v3876 = vadd.f32 %v3291, %v3875
      %v3877 = vpop.f32.mrf.mxu0
      %v3878 = vand.u32 %v1833, 4294901760
      %v3879 = vsub.f32 %v1833, %v3878
      %3880 = vmatprep.mubr.f32.mxu0 %v3879
      %v3881 = vand.u32 %v1661, 4294901760
      %v3882 = vsub.f32 %v1661, %v3881
      %3883 = vmatmul.mubr.f32.gmra.mxu0 %v3882
      %v3884 = vpop.f32.mrf.mxu0
      %v3885 = vadd.f32 %v3298, %v3884
      %v3886 = vpop.f32.mrf.mxu0
      %v3887 = vand.u32 %v1836, 4294901760
      %v3888 = vsub.f32 %v1836, %v3887
      %3889 = vmatprep.mubr.f32.mxu0 %v3888
      %v3890 = vand.u32 %v1663, 4294901760
      %v3891 = vsub.f32 %v1663, %v3890
      %3892 = vmatmul.mubr.f32.gmra.mxu0 %v3891
      %v3893 = vpop.f32.mrf.mxu0
      %v3894 = vadd.f32 %v3305, %v3893
      %v3895 = vpop.f32.mrf.mxu0
      %v3896 = vand.u32 %v1839, 4294901760
      %v3897 = vsub.f32 %v1839, %v3896
      %3898 = vmatprep.mubr.f32.mxu0 %v3897
      %v3899 = vand.u32 %v1665, 4294901760
      %v3900 = vsub.f32 %v1665, %v3899
      %3901 = vmatmul.mubr.f32.gmra.mxu0 %v3900
      %v3902 = vpop.f32.mrf.mxu0
      %v3903 = vadd.f32 %v3312, %v3902
      %v3904 = vpop.f32.mrf.mxu0
      %v3905 = vand.u32 %v1842, 4294901760
      %v3906 = vsub.f32 %v1842, %v3905
      %3907 = vmatprep.mubr.f32.mxu0 %v3906
      %v3908 = vand.u32 %v1667, 4294901760
      %v3909 = vsub.f32 %v1667, %v3908
      %3910 = vmatmul.mubr.f32.gmra.mxu0 %v3909
      %v3911 = vpop.f32.mrf.mxu0
      %v3912 = vadd.f32 %v3319, %v3911
      %v3913 = vpop.f32.mrf.mxu0
      %v3914 = vand.u32 %v1845, 4294901760
      %v3915 = vsub.f32 %v1845, %v3914
      %3916 = vmatprep.mubr.f32.mxu0 %v3915
      %v3917 = vand.u32 %v1669, 4294901760
      %v3918 = vsub.f32 %v1669, %v3917
      %3919 = vmatmul.mubr.f32.gmra.mxu0 %v3918
      %v3920 = vpop.f32.mrf.mxu0
      %v3921 = vadd.f32 %v3326, %v3920
      %v3922 = vpop.f32.mrf.mxu0
      %v3923 = vand.u32 %v1848, 4294901760
      %v3924 = vsub.f32 %v1848, %v3923
      %3925 = vmatprep.mubr.f32.mxu0 %v3924
      %v3926 = vand.u32 %v1671, 4294901760
      %v3927 = vsub.f32 %v1671, %v3926
      %3928 = vmatmul.mubr.f32.gmra.mxu0 %v3927
      %v3929 = vpop.f32.mrf.mxu0
      %v3930 = vadd.f32 %v3333, %v3929
      %v3931 = vpop.f32.mrf.mxu0
      %v3932 = vand.u32 %v1851, 4294901760
      %v3933 = vsub.f32 %v1851, %v3932
      %3934 = vmatprep.mubr.f32.mxu0 %v3933
      %v3935 = vand.u32 %v1673, 4294901760
      %v3936 = vsub.f32 %v1673, %v3935
      %3937 = vmatmul.mubr.f32.gmra.mxu0 %v3936
      %v3938 = vpop.f32.mrf.mxu0
      %v3939 = vadd.f32 %v3340, %v3938
      %v3940 = vpop.f32.mrf.mxu0
      %v3941 = vand.u32 %v1854, 4294901760
      %v3942 = vsub.f32 %v1854, %v3941
      %3943 = vmatprep.mubr.f32.mxu0 %v3942
      %v3944 = vand.u32 %v1675, 4294901760
      %v3945 = vsub.f32 %v1675, %v3944
      %3946 = vmatmul.mubr.f32.gmra.mxu0 %v3945
      %v3947 = vpop.f32.mrf.mxu0
      %v3948 = vadd.f32 %v3347, %v3947
      %v3949 = vpop.f32.mrf.mxu0
      %v3950 = vand.u32 %v1857, 4294901760
      %v3951 = vsub.f32 %v1857, %v3950
      %3952 = vmatprep.mubr.f32.mxu0 %v3951
      %v3953 = vand.u32 %v1677, 4294901760
      %v3954 = vsub.f32 %v1677, %v3953
      %3955 = vmatmul.mubr.f32.gmra.mxu0 %v3954
      %v3956 = vpop.f32.mrf.mxu0
      %v3957 = vadd.f32 %v3354, %v3956
      %v3958 = vpop.f32.mrf.mxu0
      %v3959 = vand.u32 %v1860, 4294901760
      %v3960 = vsub.f32 %v1860, %v3959
      %3961 = vmatprep.mubr.f32.mxu0 %v3960
      %v3962 = vand.u32 %v1679, 4294901760
      %v3963 = vsub.f32 %v1679, %v3962
      %3964 = vmatmul.mubr.f32.gmra.mxu0 %v3963
      %v3965 = vpop.f32.mrf.mxu0
      %v3966 = vadd.f32 %v3361, %v3965
      %v3967 = vpop.f32.mrf.mxu0
      %v3968 = vand.u32 %v1863, 4294901760
      %v3969 = vsub.f32 %v1863, %v3968
      %3970 = vmatprep.mubr.f32.mxu0 %v3969
      %v3971 = vand.u32 %v1681, 4294901760
      %v3972 = vsub.f32 %v1681, %v3971
      %3973 = vmatmul.mubr.f32.gmra.mxu0 %v3972
      %v3974 = vpop.f32.mrf.mxu0
      %v3975 = vadd.f32 %v3368, %v3974
      %v3976 = vpop.f32.mrf.mxu0
      %v3977 = vand.u32 %v1866, 4294901760
      %v3978 = vsub.f32 %v1866, %v3977
      %3979 = vmatprep.mubr.f32.mxu0 %v3978
      %v3980 = vand.u32 %v1683, 4294901760
      %v3981 = vsub.f32 %v1683, %v3980
      %3982 = vmatmul.mubr.f32.gmra.mxu0 %v3981
      %v3983 = vpop.f32.mrf.mxu0
      %v3984 = vadd.f32 %v3375, %v3983
      %v3985 = vpop.f32.mrf.mxu0
      %v3986 = vand.u32 %v1869, 4294901760
      %v3987 = vsub.f32 %v1869, %v3986
      %3988 = vmatprep.mubr.f32.mxu0 %v3987
      %v3989 = vand.u32 %v1685, 4294901760
      %v3990 = vsub.f32 %v1685, %v3989
      %3991 = vmatmul.mubr.f32.gmra.mxu0 %v3990
      %v3992 = vpop.f32.mrf.mxu0
      %v3993 = vadd.f32 %v3382, %v3992
      %v3994 = vpop.f32.mrf.mxu0
      %v3995 = vand.u32 %v1872, 4294901760
      %v3996 = vsub.f32 %v1872, %v3995
      %3997 = vmatprep.mubr.f32.mxu0 %v3996
      %v3998 = vand.u32 %v1687, 4294901760
      %v3999 = vsub.f32 %v1687, %v3998
      %4000 = vmatmul.mubr.f32.gmra.mxu0 %v3999
      %v4001 = vpop.f32.mrf.mxu0
      %v4002 = vadd.f32 %v3389, %v4001
      %v4003 = vpop.f32.mrf.mxu0
      %v4004 = vand.u32 %v1875, 4294901760
      %v4005 = vsub.f32 %v1875, %v4004
      %4006 = vmatprep.mubr.f32.mxu0 %v4005
      %v4007 = vand.u32 %v1689, 4294901760
      %v4008 = vsub.f32 %v1689, %v4007
      %4009 = vmatmul.mubr.f32.gmra.mxu0 %v4008
      %v4010 = vpop.f32.mrf.mxu0
      %v4011 = vadd.f32 %v3396, %v4010
      %v4012 = vpop.f32.mrf.mxu0
      %v4013 = vand.u32 %v1878, 4294901760
      %v4014 = vsub.f32 %v1878, %v4013
      %4015 = vmatprep.mubr.f32.mxu0 %v4014
      %v4016 = vand.u32 %v1691, 4294901760
      %v4017 = vsub.f32 %v1691, %v4016
      %4018 = vmatmul.mubr.f32.gmra.mxu0 %v4017
      %v4019 = vpop.f32.mrf.mxu0
      %v4020 = vadd.f32 %v3403, %v4019
      %v4021 = vpop.f32.mrf.mxu0
      %v4022 = vand.u32 %v1881, 4294901760
      %v4023 = vsub.f32 %v1881, %v4022
      %4024 = vmatprep.mubr.f32.mxu0 %v4023
      %v4025 = vand.u32 %v1693, 4294901760
      %v4026 = vsub.f32 %v1693, %v4025
      %4027 = vmatmul.mubr.f32.gmra.mxu0 %v4026
      %v4028 = vpop.f32.mrf.mxu0
      %v4029 = vadd.f32 %v3410, %v4028
      %v4030 = vpop.f32.mrf.mxu0
      %v4031 = vand.u32 %v1884, 4294901760
      %v4032 = vsub.f32 %v1884, %v4031
      %4033 = vmatprep.mubr.f32.mxu0 %v4032
      %v4034 = vand.u32 %v1695, 4294901760
      %v4035 = vsub.f32 %v1695, %v4034
      %4036 = vmatmul.mubr.f32.gmra.mxu0 %v4035
      %v4037 = vpop.f32.mrf.mxu0
      %v4038 = vadd.f32 %v3417, %v4037
      %v4039 = vpop.f32.mrf.mxu0
      %v4040 = vand.u32 %v1887, 4294901760
      %v4041 = vsub.f32 %v1887, %v4040
      %4042 = vmatprep.mubr.f32.mxu0 %v4041
      %v4043 = vand.u32 %v1697, 4294901760
      %v4044 = vsub.f32 %v1697, %v4043
      %4045 = vmatmul.mubr.f32.gmra.mxu0 %v4044
      %v4046 = vpop.f32.mrf.mxu0
      %v4047 = vadd.f32 %v3424, %v4046
      %v4048 = vpop.f32.mrf.mxu0
      %v4049 = vand.u32 %v1890, 4294901760
      %v4050 = vsub.f32 %v1890, %v4049
      %4051 = vmatprep.mubr.f32.mxu0 %v4050
      %v4052 = vand.u32 %v1699, 4294901760
      %v4053 = vsub.f32 %v1699, %v4052
      %4054 = vmatmul.mubr.f32.gmra.mxu0 %v4053
      %v4055 = vpop.f32.mrf.mxu0
      %v4056 = vadd.f32 %v3431, %v4055
      %v4057 = vpop.f32.mrf.mxu0
      %v4058 = vand.u32 %v1893, 4294901760
      %v4059 = vsub.f32 %v1893, %v4058
      %4060 = vmatprep.mubr.f32.mxu0 %v4059
      %v4061 = vand.u32 %v1701, 4294901760
      %v4062 = vsub.f32 %v1701, %v4061
      %4063 = vmatmul.mubr.f32.gmra.mxu0 %v4062
      %v4064 = vpop.f32.mrf.mxu0
      %v4065 = vadd.f32 %v3438, %v4064
      %v4066 = vpop.f32.mrf.mxu0
      %v4067 = vand.u32 %v1896, 4294901760
      %v4068 = vsub.f32 %v1896, %v4067
      %4069 = vmatprep.mubr.f32.mxu0 %v4068
      %v4070 = vand.u32 %v1703, 4294901760
      %v4071 = vsub.f32 %v1703, %v4070
      %4072 = vmatmul.mubr.f32.gmra.mxu0 %v4071
      %v4073 = vpop.f32.mrf.mxu0
      %v4074 = vadd.f32 %v3445, %v4073
      %v4075 = vpop.f32.mrf.mxu0
      %v4076 = vand.u32 %v1899, 4294901760
      %v4077 = vsub.f32 %v1899, %v4076
      %4078 = vmatprep.mubr.f32.mxu0 %v4077
      %v4079 = vand.u32 %v1705, 4294901760
      %v4080 = vsub.f32 %v1705, %v4079
      %4081 = vmatmul.mubr.f32.gmra.mxu0 %v4080
      %v4082 = vpop.f32.mrf.mxu0
      %v4083 = vadd.f32 %v3452, %v4082
      %v4084 = vpop.f32.mrf.mxu0
      %v4085 = vand.u32 %v1902, 4294901760
      %v4086 = vsub.f32 %v1902, %v4085
      %4087 = vmatprep.mubr.f32.mxu0 %v4086
      %v4088 = vand.u32 %v1707, 4294901760
      %v4089 = vsub.f32 %v1707, %v4088
      %4090 = vmatmul.mubr.f32.gmra.mxu0 %v4089
      %v4091 = vpop.f32.mrf.mxu0
      %v4092 = vadd.f32 %v3459, %v4091
      %v4093 = vpop.f32.mrf.mxu0
      %v4094 = vand.u32 %v1905, 4294901760
      %v4095 = vsub.f32 %v1905, %v4094
      %4096 = vmatprep.mubr.f32.mxu0 %v4095
      %v4097 = vand.u32 %v1709, 4294901760
      %v4098 = vsub.f32 %v1709, %v4097
      %4099 = vmatmul.mubr.f32.gmra.mxu0 %v4098
      %v4100 = vpop.f32.mrf.mxu0
      %v4101 = vadd.f32 %v3466, %v4100
      %v4102 = vpop.f32.mrf.mxu0
      %v4103 = vand.u32 %v1908, 4294901760
      %v4104 = vsub.f32 %v1908, %v4103
      %4105 = vmatprep.mubr.f32.mxu0 %v4104
      %v4106 = vand.u32 %v1711, 4294901760
      %v4107 = vsub.f32 %v1711, %v4106
      %4108 = vmatmul.mubr.f32.gmra.mxu0 %v4107
      %v4109 = vpop.f32.mrf.mxu0
      %v4110 = vadd.f32 %v3473, %v4109
      %v4111 = vpop.f32.mrf.mxu0
      %v4112 = vand.u32 %v1911, 4294901760
      %v4113 = vsub.f32 %v1911, %v4112
      %4114 = vmatprep.mubr.f32.mxu0 %v4113
      %v4115 = vand.u32 %v1713, 4294901760
      %v4116 = vsub.f32 %v1713, %v4115
      %4117 = vmatmul.mubr.f32.gmra.mxu0 %v4116
      %v4118 = vpop.f32.mrf.mxu0
      %v4119 = vadd.f32 %v3480, %v4118
      %v4120 = vpop.f32.mrf.mxu0
      %v4121 = vand.u32 %v1914, 4294901760
      %v4122 = vsub.f32 %v1914, %v4121
      %4123 = vmatprep.mubr.f32.mxu0 %v4122
      %v4124 = vand.u32 %v1715, 4294901760
      %v4125 = vsub.f32 %v1715, %v4124
      %4126 = vmatmul.mubr.f32.gmra.mxu0 %v4125
      %v4127 = vpop.f32.mrf.mxu0
      %v4128 = vadd.f32 %v3487, %v4127
      %v4129 = vpop.f32.mrf.mxu0
      %v4130 = vand.u32 %v1917, 4294901760
      %v4131 = vsub.f32 %v1917, %v4130
      %4132 = vmatprep.mubr.f32.mxu0 %v4131
      %v4133 = vand.u32 %v1717, 4294901760
      %v4134 = vsub.f32 %v1717, %v4133
      %4135 = vmatmul.mubr.f32.gmra.mxu0 %v4134
      %v4136 = vpop.f32.mrf.mxu0
      %v4137 = vadd.f32 %v3494, %v4136
      %v4138 = vpop.f32.mrf.mxu0
      %v4139 = vand.u32 %v1920, 4294901760
      %v4140 = vsub.f32 %v1920, %v4139
      %4141 = vmatprep.mubr.f32.mxu0 %v4140
      %v4142 = vand.u32 %v1719, 4294901760
      %v4143 = vsub.f32 %v1719, %v4142
      %4144 = vmatmul.mubr.f32.gmra.mxu0 %v4143
      %v4145 = vpop.f32.mrf.mxu0
      %v4146 = vadd.f32 %v3501, %v4145
      %v4147 = vpop.f32.mrf.mxu0
      %v4148 = vand.u32 %v1923, 4294901760
      %v4149 = vsub.f32 %v1923, %v4148
      %4150 = vmatprep.mubr.f32.mxu0 %v4149
      %v4151 = vand.u32 %v1721, 4294901760
      %v4152 = vsub.f32 %v1721, %v4151
      %4153 = vmatmul.mubr.f32.gmra.mxu0 %v4152
      %v4154 = vpop.f32.mrf.mxu0
      %v4155 = vadd.f32 %v3508, %v4154
      %v4156 = vpop.f32.mrf.mxu0
      %v4157 = vand.u32 %v1926, 4294901760
      %v4158 = vsub.f32 %v1926, %v4157
      %4159 = vmatprep.mubr.f32.mxu0 %v4158
      %v4160 = vand.u32 %v1723, 4294901760
      %v4161 = vsub.f32 %v1723, %v4160
      %4162 = vmatmul.mubr.f32.gmra.mxu0 %v4161
      %v4163 = vpop.f32.mrf.mxu0
      %v4164 = vadd.f32 %v3515, %v4163
      %v4165 = vpop.f32.mrf.mxu0
      %v4166 = vand.u32 %v1929, 4294901760
      %v4167 = vsub.f32 %v1929, %v4166
      %4168 = vmatprep.mubr.f32.mxu0 %v4167
      %v4169 = vand.u32 %v1725, 4294901760
      %v4170 = vsub.f32 %v1725, %v4169
      %4171 = vmatmul.mubr.f32.gmra.mxu0 %v4170
      %v4172 = vpop.f32.mrf.mxu0
      %v4173 = vadd.f32 %v3522, %v4172
      %v4174 = vpop.f32.mrf.mxu0
      %v4175 = vand.u32 %v1932, 4294901760
      %v4176 = vsub.f32 %v1932, %v4175
      %4177 = vmatprep.mubr.f32.mxu0 %v4176
      %v4178 = vand.u32 %v1727, 4294901760
      %v4179 = vsub.f32 %v1727, %v4178
      %4180 = vmatmul.mubr.f32.gmra.mxu0 %v4179
      %v4181 = vpop.f32.mrf.mxu0
      %v4182 = vadd.f32 %v3529, %v4181
      %v4183 = vpop.f32.mrf.mxu0
      %v4184 = vand.u32 %v1935, 4294901760
      %v4185 = vsub.f32 %v1935, %v4184
      %4186 = vmatprep.mubr.f32.mxu0 %v4185
      %v4187 = vand.u32 %v1729, 4294901760
      %v4188 = vsub.f32 %v1729, %v4187
      %4189 = vmatmul.mubr.f32.gmra.mxu0 %v4188
      %v4190 = vpop.f32.mrf.mxu0
      %v4191 = vadd.f32 %v3536, %v4190
      %v4192 = vpop.f32.mrf.mxu0
      %v4193 = vand.u32 %v1938, 4294901760
      %v4194 = vsub.f32 %v1938, %v4193
      %4195 = vmatprep.mubr.f32.mxu0 %v4194
      %v4196 = vand.u32 %v1731, 4294901760
      %v4197 = vsub.f32 %v1731, %v4196
      %4198 = vmatmul.mubr.f32.gmra.mxu0 %v4197
      %v4199 = vpop.f32.mrf.mxu0
      %v4200 = vadd.f32 %v3543, %v4199
      %v4201 = vpop.f32.mrf.mxu0
      %v4202 = vand.u32 %v1941, 4294901760
      %v4203 = vsub.f32 %v1941, %v4202
      %4204 = vmatprep.mubr.f32.mxu0 %v4203
      %v4205 = vand.u32 %v1733, 4294901760
      %v4206 = vsub.f32 %v1733, %v4205
      %4207 = vmatmul.mubr.f32.gmra.mxu0 %v4206
      %v4208 = vpop.f32.mrf.mxu0
      %v4209 = vadd.f32 %v3550, %v4208
      %v4210 = vpop.f32.mrf.mxu0
      %v4211 = vand.u32 %v1944, 4294901760
      %v4212 = vsub.f32 %v1944, %v4211
      %4213 = vmatprep.mubr.f32.mxu0 %v4212
      %v4214 = vand.u32 %v1735, 4294901760
      %v4215 = vsub.f32 %v1735, %v4214
      %4216 = vmatmul.mubr.f32.gmra.mxu0 %v4215
      %v4217 = vpop.f32.mrf.mxu0
      %v4218 = vadd.f32 %v3557, %v4217
      %v4219 = vpop.f32.mrf.mxu0
      %v4220 = vand.u32 %v1947, 4294901760
      %v4221 = vsub.f32 %v1947, %v4220
      %4222 = vmatprep.mubr.f32.mxu0 %v4221
      %v4223 = vand.u32 %v1737, 4294901760
      %v4224 = vsub.f32 %v1737, %v4223
      %4225 = vmatmul.mubr.f32.gmra.mxu0 %v4224
      %v4226 = vpop.f32.mrf.mxu0
      %v4227 = vadd.f32 %v3564, %v4226
      %v4228 = vpop.f32.mrf.mxu0
      %v4229 = vand.u32 %v1950, 4294901760
      %v4230 = vsub.f32 %v1950, %v4229
      %4231 = vmatprep.mubr.f32.mxu0 %v4230
      %v4232 = vand.u32 %v1739, 4294901760
      %v4233 = vsub.f32 %v1739, %v4232
      %4234 = vmatmul.mubr.f32.gmra.mxu0 %v4233
      %v4235 = vpop.f32.mrf.mxu0
      %v4236 = vadd.f32 %v3571, %v4235
      %v4237 = vpop.f32.mrf.mxu0
      %v4238 = vand.u32 %v1953, 4294901760
      %v4239 = vsub.f32 %v1953, %v4238
      %4240 = vmatprep.mubr.f32.mxu0 %v4239
      %v4241 = vand.u32 %v1741, 4294901760
      %v4242 = vsub.f32 %v1741, %v4241
      %4243 = vmatmul.mubr.f32.gmra.mxu0 %v4242
      %v4244 = vpop.f32.mrf.mxu0
      %v4245 = vadd.f32 %v3578, %v4244
      %v4246 = vpop.f32.mrf.mxu0
      %v4247 = vand.u32 %v1956, 4294901760
      %v4248 = vsub.f32 %v1956, %v4247
      %4249 = vmatprep.mubr.f32.mxu0 %v4248
      %v4250 = vand.u32 %v1743, 4294901760
      %v4251 = vsub.f32 %v1743, %v4250
      %4252 = vmatmul.mubr.f32.gmra.mxu0 %v4251
      %v4253 = vpop.f32.mrf.mxu0
      %v4254 = vadd.f32 %v3585, %v4253
      %v4255 = vpop.f32.mrf.mxu0
      %v4256 = vand.u32 %v1959, 4294901760
      %v4257 = vsub.f32 %v1959, %v4256
      %4258 = vmatprep.mubr.f32.mxu0 %v4257
      %v4259 = vand.u32 %v1745, 4294901760
      %v4260 = vsub.f32 %v1745, %v4259
      %4261 = vmatmul.mubr.f32.gmra.mxu0 %v4260
      %v4262 = vpop.f32.mrf.mxu0
      %v4263 = vadd.f32 %v3592, %v4262
      %v4264 = vpop.f32.mrf.mxu0
      %v4265 = vand.u32 %v1962, 4294901760
      %v4266 = vsub.f32 %v1962, %v4265
      %4267 = vmatprep.mubr.f32.mxu0 %v4266
      %v4268 = vand.u32 %v1747, 4294901760
      %v4269 = vsub.f32 %v1747, %v4268
      %4270 = vmatmul.mubr.f32.gmra.mxu0 %v4269
      %v4271 = vpop.f32.mrf.mxu0
      %v4272 = vadd.f32 %v3599, %v4271
      %v4273 = vpop.f32.mrf.mxu0
      %v4274 = vand.u32 %v1965, 4294901760
      %v4275 = vsub.f32 %v1965, %v4274
      %4276 = vmatprep.mubr.f32.mxu0 %v4275
      %v4277 = vand.u32 %v1749, 4294901760
      %v4278 = vsub.f32 %v1749, %v4277
      %4279 = vmatmul.mubr.f32.gmra.mxu0 %v4278
      %v4280 = vpop.f32.mrf.mxu0
      %v4281 = vadd.f32 %v3606, %v4280
      %v4282 = vpop.f32.mrf.mxu0
      %v4283 = vand.u32 %v1968, 4294901760
      %v4284 = vsub.f32 %v1968, %v4283
      %4285 = vmatprep.mubr.f32.mxu0 %v4284
      %v4286 = vand.u32 %v1751, 4294901760
      %v4287 = vsub.f32 %v1751, %v4286
      %4288 = vmatmul.mubr.f32.gmra.mxu0 %v4287
      %v4289 = vpop.f32.mrf.mxu0
      %v4290 = vadd.f32 %v3613, %v4289
      %v4291 = vpop.f32.mrf.mxu0
      %4292 = vdwg.mxu0
      %4293 = vmatprep.subr.mxu0 0.0
      %v4294 = vand.u32 %v1768, 4294901760
      %4295 = vmatpush1.msra.mxu0 %v4294
      %4296 = vmatprep.subr.mxu0 0.0
      %v4297 = vand.u32 %v1767, 4294901760
      %4298 = vmatpush1.msra.mxu0 %v4297
      %4299 = vmatprep.subr.mxu0 0.0
      %v4300 = vand.u32 %v1766, 4294901760
      %4301 = vmatpush1.msra.mxu0 %v4300
      %4302 = vmatprep.subr.mxu0 0.0
      %v4303 = vand.u32 %v1765, 4294901760
      %4304 = vmatpush1.msra.mxu0 %v4303
      %4305 = vmatprep.subr.mxu0 0.0
      %v4306 = vand.u32 %v1764, 4294901760
      %4307 = vmatpush1.msra.mxu0 %v4306
      %4308 = vmatprep.subr.mxu0 0.0
      %v4309 = vand.u32 %v1763, 4294901760
      %4310 = vmatpush1.msra.mxu0 %v4309
      %4311 = vmatprep.subr.mxu0 0.0
      %v4312 = vand.u32 %v1762, 4294901760
      %4313 = vmatpush1.msra.mxu0 %v4312
      %4314 = vmatprep.subr.mxu0 0.0
      %v4315 = vand.u32 %v1761, 4294901760
      %4316 = vmatpush1.msra.mxu0 %v4315
      %4317 = vmatprep.subr.mxu0 0.0
      %v4318 = vand.u32 %v1760, 4294901760
      %4319 = vmatpush1.msra.mxu0 %v4318
      %4320 = vmatprep.subr.mxu0 0.0
      %v4321 = vand.u32 %v1759, 4294901760
      %4322 = vmatpush1.msra.mxu0 %v4321
      %4323 = vmatprep.subr.mxu0 0.0
      %v4324 = vand.u32 %v1758, 4294901760
      %4325 = vmatpush1.msra.mxu0 %v4324
      %4326 = vmatprep.subr.mxu0 0.0
      %v4327 = vand.u32 %v1757, 4294901760
      %4328 = vmatpush1.msra.mxu0 %v4327
      %4329 = vmatprep.subr.mxu0 0.0
      %v4330 = vand.u32 %v1756, 4294901760
      %4331 = vmatpush1.msra.mxu0 %v4330
      %4332 = vmatprep.subr.mxu0 0.0
      %v4333 = vand.u32 %v1755, 4294901760
      %4334 = vmatpush1.msra.mxu0 %v4333
      %4335 = vmatprep.subr.mxu0 0.0
      %v4336 = vand.u32 %v1754, 4294901760
      %4337 = vmatpush1.msra.mxu0 %v4336
      %4338 = vmatprep.subr.mxu0 0.0
      %v4339 = vand.u32 %v1753, 4294901760
      %4340 = vmatpush1.msra.mxu0 %v4339
      %4341 = vmatprep.subr.mxu0 0.0
      %4342 = vmatpush2.msra.mxu0 0.0
      %4343 = vmatprep.subr.mxu0 0.0
      %4344 = vmatpush2.msra.mxu0 0.0
      %4345 = vmatprep.subr.mxu0 0.0
      %4346 = vmatpush2.msra.mxu0 0.0
      %4347 = vmatprep.subr.mxu0 0.0
      %4348 = vmatpush2.msra.mxu0 0.0
      %4349 = vmatprep.subr.mxu0 0.0
      %4350 = vmatpush2.msra.mxu0 0.0
      %4351 = vmatprep.subr.mxu0 0.0
      %4352 = vmatpush2.msra.mxu0 0.0
      %4353 = vmatprep.subr.mxu0 0.0
      %4354 = vmatpush2.msra.mxu0 0.0
      %4355 = vmatprep.subr.mxu0 0.0
      %4356 = vmatpush2.msra.mxu0 0.0
      %4357 = vmatprep.subr.mxu0 0.0
      %4358 = vmatpush2.msra.mxu0 0.0
      %4359 = vmatprep.subr.mxu0 0.0
      %4360 = vmatpush2.msra.mxu0 0.0
      %4361 = vmatprep.subr.mxu0 0.0
      %4362 = vmatpush2.msra.mxu0 0.0
      %4363 = vmatprep.subr.mxu0 0.0
      %4364 = vmatpush2.msra.mxu0 0.0
      %4365 = vmatprep.subr.mxu0 0.0
      %4366 = vmatpush2.msra.mxu0 0.0
      %4367 = vmatprep.subr.mxu0 0.0
      %4368 = vmatpush2.msra.mxu0 0.0
      %4369 = vmatprep.subr.mxu0 0.0
      %v4370 = vand.u32 %v1770, 4294901760
      %4371 = vmatpush2.msra.mxu0 %v4370
      %4372 = vmatprep.subr.mxu0 0.0
      %v4373 = vand.u32 %v1769, 4294901760
      %4374 = vmatpush2.msra.mxu0 %v4373
      %v4375 = vand.u32 %v1779, 4294901760
      %v4376 = vsub.f32 %v1779, %v4375
      %v4377 = vand.u32 %v4376, 4294901760
      %4378 = vmatprep.mubr.f32.mxu0 %v4377
      %v4379 = vand.u32 %v1625, 4294901760
      %v4380 = vsub.f32 %v1625, %v4379
      %v4381 = vand.u32 %v4380, 4294901760
      %4382 = vmatmul.mubr.f32.gmra.mxu0 %v4381
      %v4383 = vpop.f32.mrf.mxu0
      %v4384 = vadd.f32 %v3723, %v4383
      %v4385 = vpop.f32.mrf.mxu0
      %v4386 = vand.u32 %v1782, 4294901760
      %v4387 = vsub.f32 %v1782, %v4386
      %v4388 = vand.u32 %v4387, 4294901760
      %4389 = vmatprep.mubr.f32.mxu0 %v4388
      %v4390 = vand.u32 %v1627, 4294901760
      %v4391 = vsub.f32 %v1627, %v4390
      %v4392 = vand.u32 %v4391, 4294901760
      %4393 = vmatmul.mubr.f32.gmra.mxu0 %v4392
      %v4394 = vpop.f32.mrf.mxu0
      %v4395 = vadd.f32 %v3732, %v4394
      %v4396 = vpop.f32.mrf.mxu0
      %v4397 = vand.u32 %v1785, 4294901760
      %v4398 = vsub.f32 %v1785, %v4397
      %v4399 = vand.u32 %v4398, 4294901760
      %4400 = vmatprep.mubr.f32.mxu0 %v4399
      %v4401 = vand.u32 %v1629, 4294901760
      %v4402 = vsub.f32 %v1629, %v4401
      %v4403 = vand.u32 %v4402, 4294901760
      %4404 = vmatmul.mubr.f32.gmra.mxu0 %v4403
      %v4405 = vpop.f32.mrf.mxu0
      %v4406 = vadd.f32 %v3741, %v4405
      %v4407 = vpop.f32.mrf.mxu0
      %v4408 = vand.u32 %v1788, 4294901760
      %v4409 = vsub.f32 %v1788, %v4408
      %v4410 = vand.u32 %v4409, 4294901760
      %4411 = vmatprep.mubr.f32.mxu0 %v4410
      %v4412 = vand.u32 %v1631, 4294901760
      %v4413 = vsub.f32 %v1631, %v4412
      %v4414 = vand.u32 %v4413, 4294901760
      %4415 = vmatmul.mubr.f32.gmra.mxu0 %v4414
      %v4416 = vpop.f32.mrf.mxu0
      %v4417 = vadd.f32 %v3750, %v4416
      %v4418 = vpop.f32.mrf.mxu0
      %v4419 = vand.u32 %v1791, 4294901760
      %v4420 = vsub.f32 %v1791, %v4419
      %v4421 = vand.u32 %v4420, 4294901760
      %4422 = vmatprep.mubr.f32.mxu0 %v4421
      %v4423 = vand.u32 %v1633, 4294901760
      %v4424 = vsub.f32 %v1633, %v4423
      %v4425 = vand.u32 %v4424, 4294901760
      %4426 = vmatmul.mubr.f32.gmra.mxu0 %v4425
      %v4427 = vpop.f32.mrf.mxu0
      %v4428 = vadd.f32 %v3759, %v4427
      %v4429 = vpop.f32.mrf.mxu0
      %v4430 = vand.u32 %v1794, 4294901760
      %v4431 = vsub.f32 %v1794, %v4430
      %v4432 = vand.u32 %v4431, 4294901760
      %4433 = vmatprep.mubr.f32.mxu0 %v4432
      %v4434 = vand.u32 %v1635, 4294901760
      %v4435 = vsub.f32 %v1635, %v4434
      %v4436 = vand.u32 %v4435, 4294901760
      %4437 = vmatmul.mubr.f32.gmra.mxu0 %v4436
      %v4438 = vpop.f32.mrf.mxu0
      %v4439 = vadd.f32 %v3768, %v4438
      %v4440 = vpop.f32.mrf.mxu0
      %v4441 = vand.u32 %v1797, 4294901760
      %v4442 = vsub.f32 %v1797, %v4441
      %v4443 = vand.u32 %v4442, 4294901760
      %4444 = vmatprep.mubr.f32.mxu0 %v4443
      %v4445 = vand.u32 %v1637, 4294901760
      %v4446 = vsub.f32 %v1637, %v4445
      %v4447 = vand.u32 %v4446, 4294901760
      %4448 = vmatmul.mubr.f32.gmra.mxu0 %v4447
      %v4449 = vpop.f32.mrf.mxu0
      %v4450 = vadd.f32 %v3777, %v4449
      %v4451 = vpop.f32.mrf.mxu0
      %v4452 = vand.u32 %v1800, 4294901760
      %v4453 = vsub.f32 %v1800, %v4452
      %v4454 = vand.u32 %v4453, 4294901760
      %4455 = vmatprep.mubr.f32.mxu0 %v4454
      %v4456 = vand.u32 %v1639, 4294901760
      %v4457 = vsub.f32 %v1639, %v4456
      %v4458 = vand.u32 %v4457, 4294901760
      %4459 = vmatmul.mubr.f32.gmra.mxu0 %v4458
      %v4460 = vpop.f32.mrf.mxu0
      %v4461 = vadd.f32 %v3786, %v4460
      %v4462 = vpop.f32.mrf.mxu0
      %v4463 = vand.u32 %v1803, 4294901760
      %v4464 = vsub.f32 %v1803, %v4463
      %v4465 = vand.u32 %v4464, 4294901760
      %4466 = vmatprep.mubr.f32.mxu0 %v4465
      %v4467 = vand.u32 %v1641, 4294901760
      %v4468 = vsub.f32 %v1641, %v4467
      %v4469 = vand.u32 %v4468, 4294901760
      %4470 = vmatmul.mubr.f32.gmra.mxu0 %v4469
      %v4471 = vpop.f32.mrf.mxu0
      %v4472 = vadd.f32 %v3795, %v4471
      %v4473 = vpop.f32.mrf.mxu0
      %v4474 = vand.u32 %v1806, 4294901760
      %v4475 = vsub.f32 %v1806, %v4474
      %v4476 = vand.u32 %v4475, 4294901760
      %4477 = vmatprep.mubr.f32.mxu0 %v4476
      %v4478 = vand.u32 %v1643, 4294901760
      %v4479 = vsub.f32 %v1643, %v4478
      %v4480 = vand.u32 %v4479, 4294901760
      %4481 = vmatmul.mubr.f32.gmra.mxu0 %v4480
      %v4482 = vpop.f32.mrf.mxu0
      %v4483 = vadd.f32 %v3804, %v4482
      %v4484 = vpop.f32.mrf.mxu0
      %v4485 = vand.u32 %v1809, 4294901760
      %v4486 = vsub.f32 %v1809, %v4485
      %v4487 = vand.u32 %v4486, 4294901760
      %4488 = vmatprep.mubr.f32.mxu0 %v4487
      %v4489 = vand.u32 %v1645, 4294901760
      %v4490 = vsub.f32 %v1645, %v4489
      %v4491 = vand.u32 %v4490, 4294901760
      %4492 = vmatmul.mubr.f32.gmra.mxu0 %v4491
      %v4493 = vpop.f32.mrf.mxu0
      %v4494 = vadd.f32 %v3813, %v4493
      %v4495 = vpop.f32.mrf.mxu0
      %v4496 = vand.u32 %v1812, 4294901760
      %v4497 = vsub.f32 %v1812, %v4496
      %v4498 = vand.u32 %v4497, 4294901760
      %4499 = vmatprep.mubr.f32.mxu0 %v4498
      %v4500 = vand.u32 %v1647, 4294901760
      %v4501 = vsub.f32 %v1647, %v4500
      %v4502 = vand.u32 %v4501, 4294901760
      %4503 = vmatmul.mubr.f32.gmra.mxu0 %v4502
      %v4504 = vpop.f32.mrf.mxu0
      %v4505 = vadd.f32 %v3822, %v4504
      %v4506 = vpop.f32.mrf.mxu0
      %v4507 = vand.u32 %v1815, 4294901760
      %v4508 = vsub.f32 %v1815, %v4507
      %v4509 = vand.u32 %v4508, 4294901760
      %4510 = vmatprep.mubr.f32.mxu0 %v4509
      %v4511 = vand.u32 %v1649, 4294901760
      %v4512 = vsub.f32 %v1649, %v4511
      %v4513 = vand.u32 %v4512, 4294901760
      %4514 = vmatmul.mubr.f32.gmra.mxu0 %v4513
      %v4515 = vpop.f32.mrf.mxu0
      %v4516 = vadd.f32 %v3831, %v4515
      %v4517 = vpop.f32.mrf.mxu0
      %v4518 = vand.u32 %v1818, 4294901760
      %v4519 = vsub.f32 %v1818, %v4518
      %v4520 = vand.u32 %v4519, 4294901760
      %4521 = vmatprep.mubr.f32.mxu0 %v4520
      %v4522 = vand.u32 %v1651, 4294901760
      %v4523 = vsub.f32 %v1651, %v4522
      %v4524 = vand.u32 %v4523, 4294901760
      %4525 = vmatmul.mubr.f32.gmra.mxu0 %v4524
      %v4526 = vpop.f32.mrf.mxu0
      %v4527 = vadd.f32 %v3840, %v4526
      %v4528 = vpop.f32.mrf.mxu0
      %v4529 = vand.u32 %v1821, 4294901760
      %v4530 = vsub.f32 %v1821, %v4529
      %v4531 = vand.u32 %v4530, 4294901760
      %4532 = vmatprep.mubr.f32.mxu0 %v4531
      %v4533 = vand.u32 %v1653, 4294901760
      %v4534 = vsub.f32 %v1653, %v4533
      %v4535 = vand.u32 %v4534, 4294901760
      %4536 = vmatmul.mubr.f32.gmra.mxu0 %v4535
      %v4537 = vpop.f32.mrf.mxu0
      %v4538 = vadd.f32 %v3849, %v4537
      %v4539 = vpop.f32.mrf.mxu0
      %v4540 = vand.u32 %v1824, 4294901760
      %v4541 = vsub.f32 %v1824, %v4540
      %v4542 = vand.u32 %v4541, 4294901760
      %4543 = vmatprep.mubr.f32.mxu0 %v4542
      %v4544 = vand.u32 %v1655, 4294901760
      %v4545 = vsub.f32 %v1655, %v4544
      %v4546 = vand.u32 %v4545, 4294901760
      %4547 = vmatmul.mubr.f32.gmra.mxu0 %v4546
      %v4548 = vpop.f32.mrf.mxu0
      %v4549 = vadd.f32 %v3858, %v4548
      %v4550 = vpop.f32.mrf.mxu0
      %v4551 = vand.u32 %v1827, 4294901760
      %v4552 = vsub.f32 %v1827, %v4551
      %v4553 = vand.u32 %v4552, 4294901760
      %4554 = vmatprep.mubr.f32.mxu0 %v4553
      %v4555 = vand.u32 %v1657, 4294901760
      %v4556 = vsub.f32 %v1657, %v4555
      %v4557 = vand.u32 %v4556, 4294901760
      %4558 = vmatmul.mubr.f32.gmra.mxu0 %v4557
      %v4559 = vpop.f32.mrf.mxu0
      %v4560 = vadd.f32 %v3867, %v4559
      %v4561 = vpop.f32.mrf.mxu0
      %v4562 = vand.u32 %v1830, 4294901760
      %v4563 = vsub.f32 %v1830, %v4562
      %v4564 = vand.u32 %v4563, 4294901760
      %4565 = vmatprep.mubr.f32.mxu0 %v4564
      %v4566 = vand.u32 %v1659, 4294901760
      %v4567 = vsub.f32 %v1659, %v4566
      %v4568 = vand.u32 %v4567, 4294901760
      %4569 = vmatmul.mubr.f32.gmra.mxu0 %v4568
      %v4570 = vpop.f32.mrf.mxu0
      %v4571 = vadd.f32 %v3876, %v4570
      %v4572 = vpop.f32.mrf.mxu0
      %v4573 = vand.u32 %v1833, 4294901760
      %v4574 = vsub.f32 %v1833, %v4573
      %v4575 = vand.u32 %v4574, 4294901760
      %4576 = vmatprep.mubr.f32.mxu0 %v4575
      %v4577 = vand.u32 %v1661, 4294901760
      %v4578 = vsub.f32 %v1661, %v4577
      %v4579 = vand.u32 %v4578, 4294901760
      %4580 = vmatmul.mubr.f32.gmra.mxu0 %v4579
      %v4581 = vpop.f32.mrf.mxu0
      %v4582 = vadd.f32 %v3885, %v4581
      %v4583 = vpop.f32.mrf.mxu0
      %v4584 = vand.u32 %v1836, 4294901760
      %v4585 = vsub.f32 %v1836, %v4584
      %v4586 = vand.u32 %v4585, 4294901760
      %4587 = vmatprep.mubr.f32.mxu0 %v4586
      %v4588 = vand.u32 %v1663, 4294901760
      %v4589 = vsub.f32 %v1663, %v4588
      %v4590 = vand.u32 %v4589, 4294901760
      %4591 = vmatmul.mubr.f32.gmra.mxu0 %v4590
      %v4592 = vpop.f32.mrf.mxu0
      %v4593 = vadd.f32 %v3894, %v4592
      %v4594 = vpop.f32.mrf.mxu0
      %v4595 = vand.u32 %v1839, 4294901760
      %v4596 = vsub.f32 %v1839, %v4595
      %v4597 = vand.u32 %v4596, 4294901760
      %4598 = vmatprep.mubr.f32.mxu0 %v4597
      %v4599 = vand.u32 %v1665, 4294901760
      %v4600 = vsub.f32 %v1665, %v4599
      %v4601 = vand.u32 %v4600, 4294901760
      %4602 = vmatmul.mubr.f32.gmra.mxu0 %v4601
      %v4603 = vpop.f32.mrf.mxu0
      %v4604 = vadd.f32 %v3903, %v4603
      %v4605 = vpop.f32.mrf.mxu0
      %v4606 = vand.u32 %v1842, 4294901760
      %v4607 = vsub.f32 %v1842, %v4606
      %v4608 = vand.u32 %v4607, 4294901760
      %4609 = vmatprep.mubr.f32.mxu0 %v4608
      %v4610 = vand.u32 %v1667, 4294901760
      %v4611 = vsub.f32 %v1667, %v4610
      %v4612 = vand.u32 %v4611, 4294901760
      %4613 = vmatmul.mubr.f32.gmra.mxu0 %v4612
      %v4614 = vpop.f32.mrf.mxu0
      %v4615 = vadd.f32 %v3912, %v4614
      %v4616 = vpop.f32.mrf.mxu0
      %v4617 = vand.u32 %v1845, 4294901760
      %v4618 = vsub.f32 %v1845, %v4617
      %v4619 = vand.u32 %v4618, 4294901760
      %4620 = vmatprep.mubr.f32.mxu0 %v4619
      %v4621 = vand.u32 %v1669, 4294901760
      %v4622 = vsub.f32 %v1669, %v4621
      %v4623 = vand.u32 %v4622, 4294901760
      %4624 = vmatmul.mubr.f32.gmra.mxu0 %v4623
      %v4625 = vpop.f32.mrf.mxu0
      %v4626 = vadd.f32 %v3921, %v4625
      %v4627 = vpop.f32.mrf.mxu0
      %v4628 = vand.u32 %v1848, 4294901760
      %v4629 = vsub.f32 %v1848, %v4628
      %v4630 = vand.u32 %v4629, 4294901760
      %4631 = vmatprep.mubr.f32.mxu0 %v4630
      %v4632 = vand.u32 %v1671, 4294901760
      %v4633 = vsub.f32 %v1671, %v4632
      %v4634 = vand.u32 %v4633, 4294901760
      %4635 = vmatmul.mubr.f32.gmra.mxu0 %v4634
      %v4636 = vpop.f32.mrf.mxu0
      %v4637 = vadd.f32 %v3930, %v4636
      %v4638 = vpop.f32.mrf.mxu0
      %v4639 = vand.u32 %v1851, 4294901760
      %v4640 = vsub.f32 %v1851, %v4639
      %v4641 = vand.u32 %v4640, 4294901760
      %4642 = vmatprep.mubr.f32.mxu0 %v4641
      %v4643 = vand.u32 %v1673, 4294901760
      %v4644 = vsub.f32 %v1673, %v4643
      %v4645 = vand.u32 %v4644, 4294901760
      %4646 = vmatmul.mubr.f32.gmra.mxu0 %v4645
      %v4647 = vpop.f32.mrf.mxu0
      %v4648 = vadd.f32 %v3939, %v4647
      %v4649 = vpop.f32.mrf.mxu0
      %v4650 = vand.u32 %v1854, 4294901760
      %v4651 = vsub.f32 %v1854, %v4650
      %v4652 = vand.u32 %v4651, 4294901760
      %4653 = vmatprep.mubr.f32.mxu0 %v4652
      %v4654 = vand.u32 %v1675, 4294901760
      %v4655 = vsub.f32 %v1675, %v4654
      %v4656 = vand.u32 %v4655, 4294901760
      %4657 = vmatmul.mubr.f32.gmra.mxu0 %v4656
      %v4658 = vpop.f32.mrf.mxu0
      %v4659 = vadd.f32 %v3948, %v4658
      %v4660 = vpop.f32.mrf.mxu0
      %v4661 = vand.u32 %v1857, 4294901760
      %v4662 = vsub.f32 %v1857, %v4661
      %v4663 = vand.u32 %v4662, 4294901760
      %4664 = vmatprep.mubr.f32.mxu0 %v4663
      %v4665 = vand.u32 %v1677, 4294901760
      %v4666 = vsub.f32 %v1677, %v4665
      %v4667 = vand.u32 %v4666, 4294901760
      %4668 = vmatmul.mubr.f32.gmra.mxu0 %v4667
      %v4669 = vpop.f32.mrf.mxu0
      %v4670 = vadd.f32 %v3957, %v4669
      %v4671 = vpop.f32.mrf.mxu0
      %v4672 = vand.u32 %v1860, 4294901760
      %v4673 = vsub.f32 %v1860, %v4672
      %v4674 = vand.u32 %v4673, 4294901760
      %4675 = vmatprep.mubr.f32.mxu0 %v4674
      %v4676 = vand.u32 %v1679, 4294901760
      %v4677 = vsub.f32 %v1679, %v4676
      %v4678 = vand.u32 %v4677, 4294901760
      %4679 = vmatmul.mubr.f32.gmra.mxu0 %v4678
      %v4680 = vpop.f32.mrf.mxu0
      %v4681 = vadd.f32 %v3966, %v4680
      %v4682 = vpop.f32.mrf.mxu0
      %v4683 = vand.u32 %v1863, 4294901760
      %v4684 = vsub.f32 %v1863, %v4683
      %v4685 = vand.u32 %v4684, 4294901760
      %4686 = vmatprep.mubr.f32.mxu0 %v4685
      %v4687 = vand.u32 %v1681, 4294901760
      %v4688 = vsub.f32 %v1681, %v4687
      %v4689 = vand.u32 %v4688, 4294901760
      %4690 = vmatmul.mubr.f32.gmra.mxu0 %v4689
      %v4691 = vpop.f32.mrf.mxu0
      %v4692 = vadd.f32 %v3975, %v4691
      %v4693 = vpop.f32.mrf.mxu0
      %v4694 = vand.u32 %v1866, 4294901760
      %v4695 = vsub.f32 %v1866, %v4694
      %v4696 = vand.u32 %v4695, 4294901760
      %4697 = vmatprep.mubr.f32.mxu0 %v4696
      %v4698 = vand.u32 %v1683, 4294901760
      %v4699 = vsub.f32 %v1683, %v4698
      %v4700 = vand.u32 %v4699, 4294901760
      %4701 = vmatmul.mubr.f32.gmra.mxu0 %v4700
      %v4702 = vpop.f32.mrf.mxu0
      %v4703 = vadd.f32 %v3984, %v4702
      %v4704 = vpop.f32.mrf.mxu0
      %v4705 = vand.u32 %v1869, 4294901760
      %v4706 = vsub.f32 %v1869, %v4705
      %v4707 = vand.u32 %v4706, 4294901760
      %4708 = vmatprep.mubr.f32.mxu0 %v4707
      %v4709 = vand.u32 %v1685, 4294901760
      %v4710 = vsub.f32 %v1685, %v4709
      %v4711 = vand.u32 %v4710, 4294901760
      %4712 = vmatmul.mubr.f32.gmra.mxu0 %v4711
      %v4713 = vpop.f32.mrf.mxu0
      %v4714 = vadd.f32 %v3993, %v4713
      %v4715 = vpop.f32.mrf.mxu0
      %v4716 = vand.u32 %v1872, 4294901760
      %v4717 = vsub.f32 %v1872, %v4716
      %v4718 = vand.u32 %v4717, 4294901760
      %4719 = vmatprep.mubr.f32.mxu0 %v4718
      %v4720 = vand.u32 %v1687, 4294901760
      %v4721 = vsub.f32 %v1687, %v4720
      %v4722 = vand.u32 %v4721, 4294901760
      %4723 = vmatmul.mubr.f32.gmra.mxu0 %v4722
      %v4724 = vpop.f32.mrf.mxu0
      %v4725 = vadd.f32 %v4002, %v4724
      %v4726 = vpop.f32.mrf.mxu0
      %v4727 = vand.u32 %v1875, 4294901760
      %v4728 = vsub.f32 %v1875, %v4727
      %v4729 = vand.u32 %v4728, 4294901760
      %4730 = vmatprep.mubr.f32.mxu0 %v4729
      %v4731 = vand.u32 %v1689, 4294901760
      %v4732 = vsub.f32 %v1689, %v4731
      %v4733 = vand.u32 %v4732, 4294901760
      %4734 = vmatmul.mubr.f32.gmra.mxu0 %v4733
      %v4735 = vpop.f32.mrf.mxu0
      %v4736 = vadd.f32 %v4011, %v4735
      %v4737 = vpop.f32.mrf.mxu0
      %v4738 = vand.u32 %v1878, 4294901760
      %v4739 = vsub.f32 %v1878, %v4738
      %v4740 = vand.u32 %v4739, 4294901760
      %4741 = vmatprep.mubr.f32.mxu0 %v4740
      %v4742 = vand.u32 %v1691, 4294901760
      %v4743 = vsub.f32 %v1691, %v4742
      %v4744 = vand.u32 %v4743, 4294901760
      %4745 = vmatmul.mubr.f32.gmra.mxu0 %v4744
      %v4746 = vpop.f32.mrf.mxu0
      %v4747 = vadd.f32 %v4020, %v4746
      %v4748 = vpop.f32.mrf.mxu0
      %v4749 = vand.u32 %v1881, 4294901760
      %v4750 = vsub.f32 %v1881, %v4749
      %v4751 = vand.u32 %v4750, 4294901760
      %4752 = vmatprep.mubr.f32.mxu0 %v4751
      %v4753 = vand.u32 %v1693, 4294901760
      %v4754 = vsub.f32 %v1693, %v4753
      %v4755 = vand.u32 %v4754, 4294901760
      %4756 = vmatmul.mubr.f32.gmra.mxu0 %v4755
      %v4757 = vpop.f32.mrf.mxu0
      %v4758 = vadd.f32 %v4029, %v4757
      %v4759 = vpop.f32.mrf.mxu0
      %v4760 = vand.u32 %v1884, 4294901760
      %v4761 = vsub.f32 %v1884, %v4760
      %v4762 = vand.u32 %v4761, 4294901760
      %4763 = vmatprep.mubr.f32.mxu0 %v4762
      %v4764 = vand.u32 %v1695, 4294901760
      %v4765 = vsub.f32 %v1695, %v4764
      %v4766 = vand.u32 %v4765, 4294901760
      %4767 = vmatmul.mubr.f32.gmra.mxu0 %v4766
      %v4768 = vpop.f32.mrf.mxu0
      %v4769 = vadd.f32 %v4038, %v4768
      %v4770 = vpop.f32.mrf.mxu0
      %v4771 = vand.u32 %v1887, 4294901760
      %v4772 = vsub.f32 %v1887, %v4771
      %v4773 = vand.u32 %v4772, 4294901760
      %4774 = vmatprep.mubr.f32.mxu0 %v4773
      %v4775 = vand.u32 %v1697, 4294901760
      %v4776 = vsub.f32 %v1697, %v4775
      %v4777 = vand.u32 %v4776, 4294901760
      %4778 = vmatmul.mubr.f32.gmra.mxu0 %v4777
      %v4779 = vpop.f32.mrf.mxu0
      %v4780 = vadd.f32 %v4047, %v4779
      %v4781 = vpop.f32.mrf.mxu0
      %v4782 = vand.u32 %v1890, 4294901760
      %v4783 = vsub.f32 %v1890, %v4782
      %v4784 = vand.u32 %v4783, 4294901760
      %4785 = vmatprep.mubr.f32.mxu0 %v4784
      %v4786 = vand.u32 %v1699, 4294901760
      %v4787 = vsub.f32 %v1699, %v4786
      %v4788 = vand.u32 %v4787, 4294901760
      %4789 = vmatmul.mubr.f32.gmra.mxu0 %v4788
      %v4790 = vpop.f32.mrf.mxu0
      %v4791 = vadd.f32 %v4056, %v4790
      %v4792 = vpop.f32.mrf.mxu0
      %v4793 = vand.u32 %v1893, 4294901760
      %v4794 = vsub.f32 %v1893, %v4793
      %v4795 = vand.u32 %v4794, 4294901760
      %4796 = vmatprep.mubr.f32.mxu0 %v4795
      %v4797 = vand.u32 %v1701, 4294901760
      %v4798 = vsub.f32 %v1701, %v4797
      %v4799 = vand.u32 %v4798, 4294901760
      %4800 = vmatmul.mubr.f32.gmra.mxu0 %v4799
      %v4801 = vpop.f32.mrf.mxu0
      %v4802 = vadd.f32 %v4065, %v4801
      %v4803 = vpop.f32.mrf.mxu0
      %v4804 = vand.u32 %v1896, 4294901760
      %v4805 = vsub.f32 %v1896, %v4804
      %v4806 = vand.u32 %v4805, 4294901760
      %4807 = vmatprep.mubr.f32.mxu0 %v4806
      %v4808 = vand.u32 %v1703, 4294901760
      %v4809 = vsub.f32 %v1703, %v4808
      %v4810 = vand.u32 %v4809, 4294901760
      %4811 = vmatmul.mubr.f32.gmra.mxu0 %v4810
      %v4812 = vpop.f32.mrf.mxu0
      %v4813 = vadd.f32 %v4074, %v4812
      %v4814 = vpop.f32.mrf.mxu0
      %v4815 = vand.u32 %v1899, 4294901760
      %v4816 = vsub.f32 %v1899, %v4815
      %v4817 = vand.u32 %v4816, 4294901760
      %4818 = vmatprep.mubr.f32.mxu0 %v4817
      %v4819 = vand.u32 %v1705, 4294901760
      %v4820 = vsub.f32 %v1705, %v4819
      %v4821 = vand.u32 %v4820, 4294901760
      %4822 = vmatmul.mubr.f32.gmra.mxu0 %v4821
      %v4823 = vpop.f32.mrf.mxu0
      %v4824 = vadd.f32 %v4083, %v4823
      %v4825 = vpop.f32.mrf.mxu0
      %v4826 = vand.u32 %v1902, 4294901760
      %v4827 = vsub.f32 %v1902, %v4826
      %v4828 = vand.u32 %v4827, 4294901760
      %4829 = vmatprep.mubr.f32.mxu0 %v4828
      %v4830 = vand.u32 %v1707, 4294901760
      %v4831 = vsub.f32 %v1707, %v4830
      %v4832 = vand.u32 %v4831, 4294901760
      %4833 = vmatmul.mubr.f32.gmra.mxu0 %v4832
      %v4834 = vpop.f32.mrf.mxu0
      %v4835 = vadd.f32 %v4092, %v4834
      %v4836 = vpop.f32.mrf.mxu0
      %v4837 = vand.u32 %v1905, 4294901760
      %v4838 = vsub.f32 %v1905, %v4837
      %v4839 = vand.u32 %v4838, 4294901760
      %4840 = vmatprep.mubr.f32.mxu0 %v4839
      %v4841 = vand.u32 %v1709, 4294901760
      %v4842 = vsub.f32 %v1709, %v4841
      %v4843 = vand.u32 %v4842, 4294901760
      %4844 = vmatmul.mubr.f32.gmra.mxu0 %v4843
      %v4845 = vpop.f32.mrf.mxu0
      %v4846 = vadd.f32 %v4101, %v4845
      %v4847 = vpop.f32.mrf.mxu0
      %v4848 = vand.u32 %v1908, 4294901760
      %v4849 = vsub.f32 %v1908, %v4848
      %v4850 = vand.u32 %v4849, 4294901760
      %4851 = vmatprep.mubr.f32.mxu0 %v4850
      %v4852 = vand.u32 %v1711, 4294901760
      %v4853 = vsub.f32 %v1711, %v4852
      %v4854 = vand.u32 %v4853, 4294901760
      %4855 = vmatmul.mubr.f32.gmra.mxu0 %v4854
      %v4856 = vpop.f32.mrf.mxu0
      %v4857 = vadd.f32 %v4110, %v4856
      %v4858 = vpop.f32.mrf.mxu0
      %v4859 = vand.u32 %v1911, 4294901760
      %v4860 = vsub.f32 %v1911, %v4859
      %v4861 = vand.u32 %v4860, 4294901760
      %4862 = vmatprep.mubr.f32.mxu0 %v4861
      %v4863 = vand.u32 %v1713, 4294901760
      %v4864 = vsub.f32 %v1713, %v4863
      %v4865 = vand.u32 %v4864, 4294901760
      %4866 = vmatmul.mubr.f32.gmra.mxu0 %v4865
      %v4867 = vpop.f32.mrf.mxu0
      %v4868 = vadd.f32 %v4119, %v4867
      %v4869 = vpop.f32.mrf.mxu0
      %v4870 = vand.u32 %v1914, 4294901760
      %v4871 = vsub.f32 %v1914, %v4870
      %v4872 = vand.u32 %v4871, 4294901760
      %4873 = vmatprep.mubr.f32.mxu0 %v4872
      %v4874 = vand.u32 %v1715, 4294901760
      %v4875 = vsub.f32 %v1715, %v4874
      %v4876 = vand.u32 %v4875, 4294901760
      %4877 = vmatmul.mubr.f32.gmra.mxu0 %v4876
      %v4878 = vpop.f32.mrf.mxu0
      %v4879 = vadd.f32 %v4128, %v4878
      %v4880 = vpop.f32.mrf.mxu0
      %v4881 = vand.u32 %v1917, 4294901760
      %v4882 = vsub.f32 %v1917, %v4881
      %v4883 = vand.u32 %v4882, 4294901760
      %4884 = vmatprep.mubr.f32.mxu0 %v4883
      %v4885 = vand.u32 %v1717, 4294901760
      %v4886 = vsub.f32 %v1717, %v4885
      %v4887 = vand.u32 %v4886, 4294901760
      %4888 = vmatmul.mubr.f32.gmra.mxu0 %v4887
      %v4889 = vpop.f32.mrf.mxu0
      %v4890 = vadd.f32 %v4137, %v4889
      %v4891 = vpop.f32.mrf.mxu0
      %v4892 = vand.u32 %v1920, 4294901760
      %v4893 = vsub.f32 %v1920, %v4892
      %v4894 = vand.u32 %v4893, 4294901760
      %4895 = vmatprep.mubr.f32.mxu0 %v4894
      %v4896 = vand.u32 %v1719, 4294901760
      %v4897 = vsub.f32 %v1719, %v4896
      %v4898 = vand.u32 %v4897, 4294901760
      %4899 = vmatmul.mubr.f32.gmra.mxu0 %v4898
      %v4900 = vpop.f32.mrf.mxu0
      %v4901 = vadd.f32 %v4146, %v4900
      %v4902 = vpop.f32.mrf.mxu0
      %v4903 = vand.u32 %v1923, 4294901760
      %v4904 = vsub.f32 %v1923, %v4903
      %v4905 = vand.u32 %v4904, 4294901760
      %4906 = vmatprep.mubr.f32.mxu0 %v4905
      %v4907 = vand.u32 %v1721, 4294901760
      %v4908 = vsub.f32 %v1721, %v4907
      %v4909 = vand.u32 %v4908, 4294901760
      %4910 = vmatmul.mubr.f32.gmra.mxu0 %v4909
      %v4911 = vpop.f32.mrf.mxu0
      %v4912 = vadd.f32 %v4155, %v4911
      %v4913 = vpop.f32.mrf.mxu0
      %v4914 = vand.u32 %v1926, 4294901760
      %v4915 = vsub.f32 %v1926, %v4914
      %v4916 = vand.u32 %v4915, 4294901760
      %4917 = vmatprep.mubr.f32.mxu0 %v4916
      %v4918 = vand.u32 %v1723, 4294901760
      %v4919 = vsub.f32 %v1723, %v4918
      %v4920 = vand.u32 %v4919, 4294901760
      %4921 = vmatmul.mubr.f32.gmra.mxu0 %v4920
      %v4922 = vpop.f32.mrf.mxu0
      %v4923 = vadd.f32 %v4164, %v4922
      %v4924 = vpop.f32.mrf.mxu0
      %v4925 = vand.u32 %v1929, 4294901760
      %v4926 = vsub.f32 %v1929, %v4925
      %v4927 = vand.u32 %v4926, 4294901760
      %4928 = vmatprep.mubr.f32.mxu0 %v4927
      %v4929 = vand.u32 %v1725, 4294901760
      %v4930 = vsub.f32 %v1725, %v4929
      %v4931 = vand.u32 %v4930, 4294901760
      %4932 = vmatmul.mubr.f32.gmra.mxu0 %v4931
      %v4933 = vpop.f32.mrf.mxu0
      %v4934 = vadd.f32 %v4173, %v4933
      %v4935 = vpop.f32.mrf.mxu0
      %v4936 = vand.u32 %v1932, 4294901760
      %v4937 = vsub.f32 %v1932, %v4936
      %v4938 = vand.u32 %v4937, 4294901760
      %4939 = vmatprep.mubr.f32.mxu0 %v4938
      %v4940 = vand.u32 %v1727, 4294901760
      %v4941 = vsub.f32 %v1727, %v4940
      %v4942 = vand.u32 %v4941, 4294901760
      %4943 = vmatmul.mubr.f32.gmra.mxu0 %v4942
      %v4944 = vpop.f32.mrf.mxu0
      %v4945 = vadd.f32 %v4182, %v4944
      %v4946 = vpop.f32.mrf.mxu0
      %v4947 = vand.u32 %v1935, 4294901760
      %v4948 = vsub.f32 %v1935, %v4947
      %v4949 = vand.u32 %v4948, 4294901760
      %4950 = vmatprep.mubr.f32.mxu0 %v4949
      %v4951 = vand.u32 %v1729, 4294901760
      %v4952 = vsub.f32 %v1729, %v4951
      %v4953 = vand.u32 %v4952, 4294901760
      %4954 = vmatmul.mubr.f32.gmra.mxu0 %v4953
      %v4955 = vpop.f32.mrf.mxu0
      %v4956 = vadd.f32 %v4191, %v4955
      %v4957 = vpop.f32.mrf.mxu0
      %v4958 = vand.u32 %v1938, 4294901760
      %v4959 = vsub.f32 %v1938, %v4958
      %v4960 = vand.u32 %v4959, 4294901760
      %4961 = vmatprep.mubr.f32.mxu0 %v4960
      %v4962 = vand.u32 %v1731, 4294901760
      %v4963 = vsub.f32 %v1731, %v4962
      %v4964 = vand.u32 %v4963, 4294901760
      %4965 = vmatmul.mubr.f32.gmra.mxu0 %v4964
      %v4966 = vpop.f32.mrf.mxu0
      %v4967 = vadd.f32 %v4200, %v4966
      %v4968 = vpop.f32.mrf.mxu0
      %v4969 = vand.u32 %v1941, 4294901760
      %v4970 = vsub.f32 %v1941, %v4969
      %v4971 = vand.u32 %v4970, 4294901760
      %4972 = vmatprep.mubr.f32.mxu0 %v4971
      %v4973 = vand.u32 %v1733, 4294901760
      %v4974 = vsub.f32 %v1733, %v4973
      %v4975 = vand.u32 %v4974, 4294901760
      %4976 = vmatmul.mubr.f32.gmra.mxu0 %v4975
      %v4977 = vpop.f32.mrf.mxu0
      %v4978 = vadd.f32 %v4209, %v4977
      %v4979 = vpop.f32.mrf.mxu0
      %v4980 = vand.u32 %v1944, 4294901760
      %v4981 = vsub.f32 %v1944, %v4980
      %v4982 = vand.u32 %v4981, 4294901760
      %4983 = vmatprep.mubr.f32.mxu0 %v4982
      %v4984 = vand.u32 %v1735, 4294901760
      %v4985 = vsub.f32 %v1735, %v4984
      %v4986 = vand.u32 %v4985, 4294901760
      %4987 = vmatmul.mubr.f32.gmra.mxu0 %v4986
      %v4988 = vpop.f32.mrf.mxu0
      %v4989 = vadd.f32 %v4218, %v4988
      %v4990 = vpop.f32.mrf.mxu0
      %v4991 = vand.u32 %v1947, 4294901760
      %v4992 = vsub.f32 %v1947, %v4991
      %v4993 = vand.u32 %v4992, 4294901760
      %4994 = vmatprep.mubr.f32.mxu0 %v4993
      %v4995 = vand.u32 %v1737, 4294901760
      %v4996 = vsub.f32 %v1737, %v4995
      %v4997 = vand.u32 %v4996, 4294901760
      %4998 = vmatmul.mubr.f32.gmra.mxu0 %v4997
      %v4999 = vpop.f32.mrf.mxu0
      %v5000 = vadd.f32 %v4227, %v4999
      %v5001 = vpop.f32.mrf.mxu0
      %v5002 = vand.u32 %v1950, 4294901760
      %v5003 = vsub.f32 %v1950, %v5002
      %v5004 = vand.u32 %v5003, 4294901760
      %5005 = vmatprep.mubr.f32.mxu0 %v5004
      %v5006 = vand.u32 %v1739, 4294901760
      %v5007 = vsub.f32 %v1739, %v5006
      %v5008 = vand.u32 %v5007, 4294901760
      %5009 = vmatmul.mubr.f32.gmra.mxu0 %v5008
      %v5010 = vpop.f32.mrf.mxu0
      %v5011 = vadd.f32 %v4236, %v5010
      %v5012 = vpop.f32.mrf.mxu0
      %v5013 = vand.u32 %v1953, 4294901760
      %v5014 = vsub.f32 %v1953, %v5013
      %v5015 = vand.u32 %v5014, 4294901760
      %5016 = vmatprep.mubr.f32.mxu0 %v5015
      %v5017 = vand.u32 %v1741, 4294901760
      %v5018 = vsub.f32 %v1741, %v5017
      %v5019 = vand.u32 %v5018, 4294901760
      %5020 = vmatmul.mubr.f32.gmra.mxu0 %v5019
      %v5021 = vpop.f32.mrf.mxu0
      %v5022 = vadd.f32 %v4245, %v5021
      %v5023 = vpop.f32.mrf.mxu0
      %v5024 = vand.u32 %v1956, 4294901760
      %v5025 = vsub.f32 %v1956, %v5024
      %v5026 = vand.u32 %v5025, 4294901760
      %5027 = vmatprep.mubr.f32.mxu0 %v5026
      %v5028 = vand.u32 %v1743, 4294901760
      %v5029 = vsub.f32 %v1743, %v5028
      %v5030 = vand.u32 %v5029, 4294901760
      %5031 = vmatmul.mubr.f32.gmra.mxu0 %v5030
      %v5032 = vpop.f32.mrf.mxu0
      %v5033 = vadd.f32 %v4254, %v5032
      %v5034 = vpop.f32.mrf.mxu0
      %v5035 = vand.u32 %v1959, 4294901760
      %v5036 = vsub.f32 %v1959, %v5035
      %v5037 = vand.u32 %v5036, 4294901760
      %5038 = vmatprep.mubr.f32.mxu0 %v5037
      %v5039 = vand.u32 %v1745, 4294901760
      %v5040 = vsub.f32 %v1745, %v5039
      %v5041 = vand.u32 %v5040, 4294901760
      %5042 = vmatmul.mubr.f32.gmra.mxu0 %v5041
      %v5043 = vpop.f32.mrf.mxu0
      %v5044 = vadd.f32 %v4263, %v5043
      %v5045 = vpop.f32.mrf.mxu0
      %v5046 = vand.u32 %v1962, 4294901760
      %v5047 = vsub.f32 %v1962, %v5046
      %v5048 = vand.u32 %v5047, 4294901760
      %5049 = vmatprep.mubr.f32.mxu0 %v5048
      %v5050 = vand.u32 %v1747, 4294901760
      %v5051 = vsub.f32 %v1747, %v5050
      %v5052 = vand.u32 %v5051, 4294901760
      %5053 = vmatmul.mubr.f32.gmra.mxu0 %v5052
      %v5054 = vpop.f32.mrf.mxu0
      %v5055 = vadd.f32 %v4272, %v5054
      %v5056 = vpop.f32.mrf.mxu0
      %v5057 = vand.u32 %v1965, 4294901760
      %v5058 = vsub.f32 %v1965, %v5057
      %v5059 = vand.u32 %v5058, 4294901760
      %5060 = vmatprep.mubr.f32.mxu0 %v5059
      %v5061 = vand.u32 %v1749, 4294901760
      %v5062 = vsub.f32 %v1749, %v5061
      %v5063 = vand.u32 %v5062, 4294901760
      %5064 = vmatmul.mubr.f32.gmra.mxu0 %v5063
      %v5065 = vpop.f32.mrf.mxu0
      %v5066 = vadd.f32 %v4281, %v5065
      %v5067 = vpop.f32.mrf.mxu0
      %v5068 = vand.u32 %v1968, 4294901760
      %v5069 = vsub.f32 %v1968, %v5068
      %v5070 = vand.u32 %v5069, 4294901760
      %5071 = vmatprep.mubr.f32.mxu0 %v5070
      %v5072 = vand.u32 %v1751, 4294901760
      %v5073 = vsub.f32 %v1751, %v5072
      %v5074 = vand.u32 %v5073, 4294901760
      %5075 = vmatmul.mubr.f32.gmra.mxu0 %v5074
      %v5076 = vpop.f32.mrf.mxu0
      %v5077 = vadd.f32 %v4290, %v5076
      %v5078 = vpop.f32.mrf.mxu0
      %5079 = vdwg.mxu0
      %5080 = vmatprep.subr.mxu0 0.0
      %v5081 = vand.u32 %v1768, 4294901760
      %v5082 = vsub.f32 %v1768, %v5081
      %v5083 = vand.u32 %v5082, 4294901760
      %5084 = vmatpush1.msra.mxu0 %v5083
      %5085 = vmatprep.subr.mxu0 0.0
      %v5086 = vand.u32 %v1767, 4294901760
      %v5087 = vsub.f32 %v1767, %v5086
      %v5088 = vand.u32 %v5087, 4294901760
      %5089 = vmatpush1.msra.mxu0 %v5088
      %5090 = vmatprep.subr.mxu0 0.0
      %v5091 = vand.u32 %v1766, 4294901760
      %v5092 = vsub.f32 %v1766, %v5091
      %v5093 = vand.u32 %v5092, 4294901760
      %5094 = vmatpush1.msra.mxu0 %v5093
      %5095 = vmatprep.subr.mxu0 0.0
      %v5096 = vand.u32 %v1765, 4294901760
      %v5097 = vsub.f32 %v1765, %v5096
      %v5098 = vand.u32 %v5097, 4294901760
      %5099 = vmatpush1.msra.mxu0 %v5098
      %5100 = vmatprep.subr.mxu0 0.0
      %v5101 = vand.u32 %v1764, 4294901760
      %v5102 = vsub.f32 %v1764, %v5101
      %v5103 = vand.u32 %v5102, 4294901760
      %5104 = vmatpush1.msra.mxu0 %v5103
      %5105 = vmatprep.subr.mxu0 0.0
      %v5106 = vand.u32 %v1763, 4294901760
      %v5107 = vsub.f32 %v1763, %v5106
      %v5108 = vand.u32 %v5107, 4294901760
      %5109 = vmatpush1.msra.mxu0 %v5108
      %5110 = vmatprep.subr.mxu0 0.0
      %v5111 = vand.u32 %v1762, 4294901760
      %v5112 = vsub.f32 %v1762, %v5111
      %v5113 = vand.u32 %v5112, 4294901760
      %5114 = vmatpush1.msra.mxu0 %v5113
      %5115 = vmatprep.subr.mxu0 0.0
      %v5116 = vand.u32 %v1761, 4294901760
      %v5117 = vsub.f32 %v1761, %v5116
      %v5118 = vand.u32 %v5117, 4294901760
      %5119 = vmatpush1.msra.mxu0 %v5118
      %5120 = vmatprep.subr.mxu0 0.0
      %v5121 = vand.u32 %v1760, 4294901760
      %v5122 = vsub.f32 %v1760, %v5121
      %v5123 = vand.u32 %v5122, 4294901760
      %5124 = vmatpush1.msra.mxu0 %v5123
      %5125 = vmatprep.subr.mxu0 0.0
      %v5126 = vand.u32 %v1759, 4294901760
      %v5127 = vsub.f32 %v1759, %v5126
      %v5128 = vand.u32 %v5127, 4294901760
      %5129 = vmatpush1.msra.mxu0 %v5128
      %5130 = vmatprep.subr.mxu0 0.0
      %v5131 = vand.u32 %v1758, 4294901760
      %v5132 = vsub.f32 %v1758, %v5131
      %v5133 = vand.u32 %v5132, 4294901760
      %5134 = vmatpush1.msra.mxu0 %v5133
      %5135 = vmatprep.subr.mxu0 0.0
      %v5136 = vand.u32 %v1757, 4294901760
      %v5137 = vsub.f32 %v1757, %v5136
      %v5138 = vand.u32 %v5137, 4294901760
      %5139 = vmatpush1.msra.mxu0 %v5138
      %5140 = vmatprep.subr.mxu0 0.0
      %v5141 = vand.u32 %v1756, 4294901760
      %v5142 = vsub.f32 %v1756, %v5141
      %v5143 = vand.u32 %v5142, 4294901760
      %5144 = vmatpush1.msra.mxu0 %v5143
      %5145 = vmatprep.subr.mxu0 0.0
      %v5146 = vand.u32 %v1755, 4294901760
      %v5147 = vsub.f32 %v1755, %v5146
      %v5148 = vand.u32 %v5147, 4294901760
      %5149 = vmatpush1.msra.mxu0 %v5148
      %5150 = vmatprep.subr.mxu0 0.0
      %v5151 = vand.u32 %v1754, 4294901760
      %v5152 = vsub.f32 %v1754, %v5151
      %v5153 = vand.u32 %v5152, 4294901760
      %5154 = vmatpush1.msra.mxu0 %v5153
      %5155 = vmatprep.subr.mxu0 0.0
      %v5156 = vand.u32 %v1753, 4294901760
      %v5157 = vsub.f32 %v1753, %v5156
      %v5158 = vand.u32 %v5157, 4294901760
      %5159 = vmatpush1.msra.mxu0 %v5158
      %5160 = vmatprep.subr.mxu0 0.0
      %5161 = vmatpush2.msra.mxu0 0.0
      %5162 = vmatprep.subr.mxu0 0.0
      %5163 = vmatpush2.msra.mxu0 0.0
      %5164 = vmatprep.subr.mxu0 0.0
      %5165 = vmatpush2.msra.mxu0 0.0
      %5166 = vmatprep.subr.mxu0 0.0
      %5167 = vmatpush2.msra.mxu0 0.0
      %5168 = vmatprep.subr.mxu0 0.0
      %5169 = vmatpush2.msra.mxu0 0.0
      %5170 = vmatprep.subr.mxu0 0.0
      %5171 = vmatpush2.msra.mxu0 0.0
      %5172 = vmatprep.subr.mxu0 0.0
      %5173 = vmatpush2.msra.mxu0 0.0
      %5174 = vmatprep.subr.mxu0 0.0
      %5175 = vmatpush2.msra.mxu0 0.0
      %5176 = vmatprep.subr.mxu0 0.0
      %5177 = vmatpush2.msra.mxu0 0.0
      %5178 = vmatprep.subr.mxu0 0.0
      %5179 = vmatpush2.msra.mxu0 0.0
      %5180 = vmatprep.subr.mxu0 0.0
      %5181 = vmatpush2.msra.mxu0 0.0
      %5182 = vmatprep.subr.mxu0 0.0
      %5183 = vmatpush2.msra.mxu0 0.0
      %5184 = vmatprep.subr.mxu0 0.0
      %5185 = vmatpush2.msra.mxu0 0.0
      %5186 = vmatprep.subr.mxu0 0.0
      %5187 = vmatpush2.msra.mxu0 0.0
      %5188 = vmatprep.subr.mxu0 0.0
      %v5189 = vand.u32 %v1770, 4294901760
      %v5190 = vsub.f32 %v1770, %v5189
      %v5191 = vand.u32 %v5190, 4294901760
      %5192 = vmatpush2.msra.mxu0 %v5191
      %5193 = vmatprep.subr.mxu0 0.0
      %v5194 = vand.u32 %v1769, 4294901760
      %v5195 = vsub.f32 %v1769, %v5194
      %v5196 = vand.u32 %v5195, 4294901760
      %5197 = vmatpush2.msra.mxu0 %v5196
      %v5198 = vand.u32 %v1779, 4294901760
      %5199 = vmatprep.mubr.f32.mxu0 %v5198
      %v5200 = vand.u32 %v1625, 4294901760
      %5201 = vmatmul.mubr.f32.gmra.mxu0 %v5200
      %v5202 = vpop.f32.mrf.mxu0
      %v5203 = vadd.f32 %v4384, %v5202
      %v5204 = vpop.f32.mrf.mxu0
      %v5205 = vand.u32 %v1782, 4294901760
      %5206 = vmatprep.mubr.f32.mxu0 %v5205
      %v5207 = vand.u32 %v1627, 4294901760
      %5208 = vmatmul.mubr.f32.gmra.mxu0 %v5207
      %v5209 = vpop.f32.mrf.mxu0
      %v5210 = vadd.f32 %v4395, %v5209
      %v5211 = vpop.f32.mrf.mxu0
      %v5212 = vand.u32 %v1785, 4294901760
      %5213 = vmatprep.mubr.f32.mxu0 %v5212
      %v5214 = vand.u32 %v1629, 4294901760
      %5215 = vmatmul.mubr.f32.gmra.mxu0 %v5214
      %v5216 = vpop.f32.mrf.mxu0
      %v5217 = vadd.f32 %v4406, %v5216
      %v5218 = vpop.f32.mrf.mxu0
      %v5219 = vand.u32 %v1788, 4294901760
      %5220 = vmatprep.mubr.f32.mxu0 %v5219
      %v5221 = vand.u32 %v1631, 4294901760
      %5222 = vmatmul.mubr.f32.gmra.mxu0 %v5221
      %v5223 = vpop.f32.mrf.mxu0
      %v5224 = vadd.f32 %v4417, %v5223
      %v5225 = vpop.f32.mrf.mxu0
      %v5226 = vand.u32 %v1791, 4294901760
      %5227 = vmatprep.mubr.f32.mxu0 %v5226
      %v5228 = vand.u32 %v1633, 4294901760
      %5229 = vmatmul.mubr.f32.gmra.mxu0 %v5228
      %v5230 = vpop.f32.mrf.mxu0
      %v5231 = vadd.f32 %v4428, %v5230
      %v5232 = vpop.f32.mrf.mxu0
      %v5233 = vand.u32 %v1794, 4294901760
      %5234 = vmatprep.mubr.f32.mxu0 %v5233
      %v5235 = vand.u32 %v1635, 4294901760
      %5236 = vmatmul.mubr.f32.gmra.mxu0 %v5235
      %v5237 = vpop.f32.mrf.mxu0
      %v5238 = vadd.f32 %v4439, %v5237
      %v5239 = vpop.f32.mrf.mxu0
      %v5240 = vand.u32 %v1797, 4294901760
      %5241 = vmatprep.mubr.f32.mxu0 %v5240
      %v5242 = vand.u32 %v1637, 4294901760
      %5243 = vmatmul.mubr.f32.gmra.mxu0 %v5242
      %v5244 = vpop.f32.mrf.mxu0
      %v5245 = vadd.f32 %v4450, %v5244
      %v5246 = vpop.f32.mrf.mxu0
      %v5247 = vand.u32 %v1800, 4294901760
      %5248 = vmatprep.mubr.f32.mxu0 %v5247
      %v5249 = vand.u32 %v1639, 4294901760
      %5250 = vmatmul.mubr.f32.gmra.mxu0 %v5249
      %v5251 = vpop.f32.mrf.mxu0
      %v5252 = vadd.f32 %v4461, %v5251
      %v5253 = vpop.f32.mrf.mxu0
      %v5254 = vand.u32 %v1803, 4294901760
      %5255 = vmatprep.mubr.f32.mxu0 %v5254
      %v5256 = vand.u32 %v1641, 4294901760
      %5257 = vmatmul.mubr.f32.gmra.mxu0 %v5256
      %v5258 = vpop.f32.mrf.mxu0
      %v5259 = vadd.f32 %v4472, %v5258
      %v5260 = vpop.f32.mrf.mxu0
      %v5261 = vand.u32 %v1806, 4294901760
      %5262 = vmatprep.mubr.f32.mxu0 %v5261
      %v5263 = vand.u32 %v1643, 4294901760
      %5264 = vmatmul.mubr.f32.gmra.mxu0 %v5263
      %v5265 = vpop.f32.mrf.mxu0
      %v5266 = vadd.f32 %v4483, %v5265
      %v5267 = vpop.f32.mrf.mxu0
      %v5268 = vand.u32 %v1809, 4294901760
      %5269 = vmatprep.mubr.f32.mxu0 %v5268
      %v5270 = vand.u32 %v1645, 4294901760
      %5271 = vmatmul.mubr.f32.gmra.mxu0 %v5270
      %v5272 = vpop.f32.mrf.mxu0
      %v5273 = vadd.f32 %v4494, %v5272
      %v5274 = vpop.f32.mrf.mxu0
      %v5275 = vand.u32 %v1812, 4294901760
      %5276 = vmatprep.mubr.f32.mxu0 %v5275
      %v5277 = vand.u32 %v1647, 4294901760
      %5278 = vmatmul.mubr.f32.gmra.mxu0 %v5277
      %v5279 = vpop.f32.mrf.mxu0
      %v5280 = vadd.f32 %v4505, %v5279
      %v5281 = vpop.f32.mrf.mxu0
      %v5282 = vand.u32 %v1815, 4294901760
      %5283 = vmatprep.mubr.f32.mxu0 %v5282
      %v5284 = vand.u32 %v1649, 4294901760
      %5285 = vmatmul.mubr.f32.gmra.mxu0 %v5284
      %v5286 = vpop.f32.mrf.mxu0
      %v5287 = vadd.f32 %v4516, %v5286
      %v5288 = vpop.f32.mrf.mxu0
      %v5289 = vand.u32 %v1818, 4294901760
      %5290 = vmatprep.mubr.f32.mxu0 %v5289
      %v5291 = vand.u32 %v1651, 4294901760
      %5292 = vmatmul.mubr.f32.gmra.mxu0 %v5291
      %v5293 = vpop.f32.mrf.mxu0
      %v5294 = vadd.f32 %v4527, %v5293
      %v5295 = vpop.f32.mrf.mxu0
      %v5296 = vand.u32 %v1821, 4294901760
      %5297 = vmatprep.mubr.f32.mxu0 %v5296
      %v5298 = vand.u32 %v1653, 4294901760
      %5299 = vmatmul.mubr.f32.gmra.mxu0 %v5298
      %v5300 = vpop.f32.mrf.mxu0
      %v5301 = vadd.f32 %v4538, %v5300
      %v5302 = vpop.f32.mrf.mxu0
      %v5303 = vand.u32 %v1824, 4294901760
      %5304 = vmatprep.mubr.f32.mxu0 %v5303
      %v5305 = vand.u32 %v1655, 4294901760
      %5306 = vmatmul.mubr.f32.gmra.mxu0 %v5305
      %v5307 = vpop.f32.mrf.mxu0
      %v5308 = vadd.f32 %v4549, %v5307
      %v5309 = vpop.f32.mrf.mxu0
      %v5310 = vand.u32 %v1827, 4294901760
      %5311 = vmatprep.mubr.f32.mxu0 %v5310
      %v5312 = vand.u32 %v1657, 4294901760
      %5313 = vmatmul.mubr.f32.gmra.mxu0 %v5312
      %v5314 = vpop.f32.mrf.mxu0
      %v5315 = vadd.f32 %v4560, %v5314
      %v5316 = vpop.f32.mrf.mxu0
      %v5317 = vand.u32 %v1830, 4294901760
      %5318 = vmatprep.mubr.f32.mxu0 %v5317
      %v5319 = vand.u32 %v1659, 4294901760
      %5320 = vmatmul.mubr.f32.gmra.mxu0 %v5319
      %v5321 = vpop.f32.mrf.mxu0
      %v5322 = vadd.f32 %v4571, %v5321
      %v5323 = vpop.f32.mrf.mxu0
      %v5324 = vand.u32 %v1833, 4294901760
      %5325 = vmatprep.mubr.f32.mxu0 %v5324
      %v5326 = vand.u32 %v1661, 4294901760
      %5327 = vmatmul.mubr.f32.gmra.mxu0 %v5326
      %v5328 = vpop.f32.mrf.mxu0
      %v5329 = vadd.f32 %v4582, %v5328
      %v5330 = vpop.f32.mrf.mxu0
      %v5331 = vand.u32 %v1836, 4294901760
      %5332 = vmatprep.mubr.f32.mxu0 %v5331
      %v5333 = vand.u32 %v1663, 4294901760
      %5334 = vmatmul.mubr.f32.gmra.mxu0 %v5333
      %v5335 = vpop.f32.mrf.mxu0
      %v5336 = vadd.f32 %v4593, %v5335
      %v5337 = vpop.f32.mrf.mxu0
      %v5338 = vand.u32 %v1839, 4294901760
      %5339 = vmatprep.mubr.f32.mxu0 %v5338
      %v5340 = vand.u32 %v1665, 4294901760
      %5341 = vmatmul.mubr.f32.gmra.mxu0 %v5340
      %v5342 = vpop.f32.mrf.mxu0
      %v5343 = vadd.f32 %v4604, %v5342
      %v5344 = vpop.f32.mrf.mxu0
      %v5345 = vand.u32 %v1842, 4294901760
      %5346 = vmatprep.mubr.f32.mxu0 %v5345
      %v5347 = vand.u32 %v1667, 4294901760
      %5348 = vmatmul.mubr.f32.gmra.mxu0 %v5347
      %v5349 = vpop.f32.mrf.mxu0
      %v5350 = vadd.f32 %v4615, %v5349
      %v5351 = vpop.f32.mrf.mxu0
      %v5352 = vand.u32 %v1845, 4294901760
      %5353 = vmatprep.mubr.f32.mxu0 %v5352
      %v5354 = vand.u32 %v1669, 4294901760
      %5355 = vmatmul.mubr.f32.gmra.mxu0 %v5354
      %v5356 = vpop.f32.mrf.mxu0
      %v5357 = vadd.f32 %v4626, %v5356
      %v5358 = vpop.f32.mrf.mxu0
      %v5359 = vand.u32 %v1848, 4294901760
      %5360 = vmatprep.mubr.f32.mxu0 %v5359
      %v5361 = vand.u32 %v1671, 4294901760
      %5362 = vmatmul.mubr.f32.gmra.mxu0 %v5361
      %v5363 = vpop.f32.mrf.mxu0
      %v5364 = vadd.f32 %v4637, %v5363
      %v5365 = vpop.f32.mrf.mxu0
      %v5366 = vand.u32 %v1851, 4294901760
      %5367 = vmatprep.mubr.f32.mxu0 %v5366
      %v5368 = vand.u32 %v1673, 4294901760
      %5369 = vmatmul.mubr.f32.gmra.mxu0 %v5368
      %v5370 = vpop.f32.mrf.mxu0
      %v5371 = vadd.f32 %v4648, %v5370
      %v5372 = vpop.f32.mrf.mxu0
      %v5373 = vand.u32 %v1854, 4294901760
      %5374 = vmatprep.mubr.f32.mxu0 %v5373
      %v5375 = vand.u32 %v1675, 4294901760
      %5376 = vmatmul.mubr.f32.gmra.mxu0 %v5375
      %v5377 = vpop.f32.mrf.mxu0
      %v5378 = vadd.f32 %v4659, %v5377
      %v5379 = vpop.f32.mrf.mxu0
      %v5380 = vand.u32 %v1857, 4294901760
      %5381 = vmatprep.mubr.f32.mxu0 %v5380
      %v5382 = vand.u32 %v1677, 4294901760
      %5383 = vmatmul.mubr.f32.gmra.mxu0 %v5382
      %v5384 = vpop.f32.mrf.mxu0
      %v5385 = vadd.f32 %v4670, %v5384
      %v5386 = vpop.f32.mrf.mxu0
      %v5387 = vand.u32 %v1860, 4294901760
      %5388 = vmatprep.mubr.f32.mxu0 %v5387
      %v5389 = vand.u32 %v1679, 4294901760
      %5390 = vmatmul.mubr.f32.gmra.mxu0 %v5389
      %v5391 = vpop.f32.mrf.mxu0
      %v5392 = vadd.f32 %v4681, %v5391
      %v5393 = vpop.f32.mrf.mxu0
      %v5394 = vand.u32 %v1863, 4294901760
      %5395 = vmatprep.mubr.f32.mxu0 %v5394
      %v5396 = vand.u32 %v1681, 4294901760
      %5397 = vmatmul.mubr.f32.gmra.mxu0 %v5396
      %v5398 = vpop.f32.mrf.mxu0
      %v5399 = vadd.f32 %v4692, %v5398
      %v5400 = vpop.f32.mrf.mxu0
      %v5401 = vand.u32 %v1866, 4294901760
      %5402 = vmatprep.mubr.f32.mxu0 %v5401
      %v5403 = vand.u32 %v1683, 4294901760
      %5404 = vmatmul.mubr.f32.gmra.mxu0 %v5403
      %v5405 = vpop.f32.mrf.mxu0
      %v5406 = vadd.f32 %v4703, %v5405
      %v5407 = vpop.f32.mrf.mxu0
      %v5408 = vand.u32 %v1869, 4294901760
      %5409 = vmatprep.mubr.f32.mxu0 %v5408
      %v5410 = vand.u32 %v1685, 4294901760
      %5411 = vmatmul.mubr.f32.gmra.mxu0 %v5410
      %v5412 = vpop.f32.mrf.mxu0
      %v5413 = vadd.f32 %v4714, %v5412
      %v5414 = vpop.f32.mrf.mxu0
      %v5415 = vand.u32 %v1872, 4294901760
      %5416 = vmatprep.mubr.f32.mxu0 %v5415
      %v5417 = vand.u32 %v1687, 4294901760
      %5418 = vmatmul.mubr.f32.gmra.mxu0 %v5417
      %v5419 = vpop.f32.mrf.mxu0
      %v5420 = vadd.f32 %v4725, %v5419
      %v5421 = vpop.f32.mrf.mxu0
      %v5422 = vand.u32 %v1875, 4294901760
      %5423 = vmatprep.mubr.f32.mxu0 %v5422
      %v5424 = vand.u32 %v1689, 4294901760
      %5425 = vmatmul.mubr.f32.gmra.mxu0 %v5424
      %v5426 = vpop.f32.mrf.mxu0
      %v5427 = vadd.f32 %v4736, %v5426
      %v5428 = vpop.f32.mrf.mxu0
      %v5429 = vand.u32 %v1878, 4294901760
      %5430 = vmatprep.mubr.f32.mxu0 %v5429
      %v5431 = vand.u32 %v1691, 4294901760
      %5432 = vmatmul.mubr.f32.gmra.mxu0 %v5431
      %v5433 = vpop.f32.mrf.mxu0
      %v5434 = vadd.f32 %v4747, %v5433
      %v5435 = vpop.f32.mrf.mxu0
      %v5436 = vand.u32 %v1881, 4294901760
      %5437 = vmatprep.mubr.f32.mxu0 %v5436
      %v5438 = vand.u32 %v1693, 4294901760
      %5439 = vmatmul.mubr.f32.gmra.mxu0 %v5438
      %v5440 = vpop.f32.mrf.mxu0
      %v5441 = vadd.f32 %v4758, %v5440
      %v5442 = vpop.f32.mrf.mxu0
      %v5443 = vand.u32 %v1884, 4294901760
      %5444 = vmatprep.mubr.f32.mxu0 %v5443
      %v5445 = vand.u32 %v1695, 4294901760
      %5446 = vmatmul.mubr.f32.gmra.mxu0 %v5445
      %v5447 = vpop.f32.mrf.mxu0
      %v5448 = vadd.f32 %v4769, %v5447
      %v5449 = vpop.f32.mrf.mxu0
      %v5450 = vand.u32 %v1887, 4294901760
      %5451 = vmatprep.mubr.f32.mxu0 %v5450
      %v5452 = vand.u32 %v1697, 4294901760
      %5453 = vmatmul.mubr.f32.gmra.mxu0 %v5452
      %v5454 = vpop.f32.mrf.mxu0
      %v5455 = vadd.f32 %v4780, %v5454
      %v5456 = vpop.f32.mrf.mxu0
      %v5457 = vand.u32 %v1890, 4294901760
      %5458 = vmatprep.mubr.f32.mxu0 %v5457
      %v5459 = vand.u32 %v1699, 4294901760
      %5460 = vmatmul.mubr.f32.gmra.mxu0 %v5459
      %v5461 = vpop.f32.mrf.mxu0
      %v5462 = vadd.f32 %v4791, %v5461
      %v5463 = vpop.f32.mrf.mxu0
      %v5464 = vand.u32 %v1893, 4294901760
      %5465 = vmatprep.mubr.f32.mxu0 %v5464
      %v5466 = vand.u32 %v1701, 4294901760
      %5467 = vmatmul.mubr.f32.gmra.mxu0 %v5466
      %v5468 = vpop.f32.mrf.mxu0
      %v5469 = vadd.f32 %v4802, %v5468
      %v5470 = vpop.f32.mrf.mxu0
      %v5471 = vand.u32 %v1896, 4294901760
      %5472 = vmatprep.mubr.f32.mxu0 %v5471
      %v5473 = vand.u32 %v1703, 4294901760
      %5474 = vmatmul.mubr.f32.gmra.mxu0 %v5473
      %v5475 = vpop.f32.mrf.mxu0
      %v5476 = vadd.f32 %v4813, %v5475
      %v5477 = vpop.f32.mrf.mxu0
      %v5478 = vand.u32 %v1899, 4294901760
      %5479 = vmatprep.mubr.f32.mxu0 %v5478
      %v5480 = vand.u32 %v1705, 4294901760
      %5481 = vmatmul.mubr.f32.gmra.mxu0 %v5480
      %v5482 = vpop.f32.mrf.mxu0
      %v5483 = vadd.f32 %v4824, %v5482
      %v5484 = vpop.f32.mrf.mxu0
      %v5485 = vand.u32 %v1902, 4294901760
      %5486 = vmatprep.mubr.f32.mxu0 %v5485
      %v5487 = vand.u32 %v1707, 4294901760
      %5488 = vmatmul.mubr.f32.gmra.mxu0 %v5487
      %v5489 = vpop.f32.mrf.mxu0
      %v5490 = vadd.f32 %v4835, %v5489
      %v5491 = vpop.f32.mrf.mxu0
      %v5492 = vand.u32 %v1905, 4294901760
      %5493 = vmatprep.mubr.f32.mxu0 %v5492
      %v5494 = vand.u32 %v1709, 4294901760
      %5495 = vmatmul.mubr.f32.gmra.mxu0 %v5494
      %v5496 = vpop.f32.mrf.mxu0
      %v5497 = vadd.f32 %v4846, %v5496
      %v5498 = vpop.f32.mrf.mxu0
      %v5499 = vand.u32 %v1908, 4294901760
      %5500 = vmatprep.mubr.f32.mxu0 %v5499
      %v5501 = vand.u32 %v1711, 4294901760
      %5502 = vmatmul.mubr.f32.gmra.mxu0 %v5501
      %v5503 = vpop.f32.mrf.mxu0
      %v5504 = vadd.f32 %v4857, %v5503
      %v5505 = vpop.f32.mrf.mxu0
      %v5506 = vand.u32 %v1911, 4294901760
      %5507 = vmatprep.mubr.f32.mxu0 %v5506
      %v5508 = vand.u32 %v1713, 4294901760
      %5509 = vmatmul.mubr.f32.gmra.mxu0 %v5508
      %v5510 = vpop.f32.mrf.mxu0
      %v5511 = vadd.f32 %v4868, %v5510
      %v5512 = vpop.f32.mrf.mxu0
      %v5513 = vand.u32 %v1914, 4294901760
      %5514 = vmatprep.mubr.f32.mxu0 %v5513
      %v5515 = vand.u32 %v1715, 4294901760
      %5516 = vmatmul.mubr.f32.gmra.mxu0 %v5515
      %v5517 = vpop.f32.mrf.mxu0
      %v5518 = vadd.f32 %v4879, %v5517
      %v5519 = vpop.f32.mrf.mxu0
      %v5520 = vand.u32 %v1917, 4294901760
      %5521 = vmatprep.mubr.f32.mxu0 %v5520
      %v5522 = vand.u32 %v1717, 4294901760
      %5523 = vmatmul.mubr.f32.gmra.mxu0 %v5522
      %v5524 = vpop.f32.mrf.mxu0
      %v5525 = vadd.f32 %v4890, %v5524
      %v5526 = vpop.f32.mrf.mxu0
      %v5527 = vand.u32 %v1920, 4294901760
      %5528 = vmatprep.mubr.f32.mxu0 %v5527
      %v5529 = vand.u32 %v1719, 4294901760
      %5530 = vmatmul.mubr.f32.gmra.mxu0 %v5529
      %v5531 = vpop.f32.mrf.mxu0
      %v5532 = vadd.f32 %v4901, %v5531
      %v5533 = vpop.f32.mrf.mxu0
      %v5534 = vand.u32 %v1923, 4294901760
      %5535 = vmatprep.mubr.f32.mxu0 %v5534
      %v5536 = vand.u32 %v1721, 4294901760
      %5537 = vmatmul.mubr.f32.gmra.mxu0 %v5536
      %v5538 = vpop.f32.mrf.mxu0
      %v5539 = vadd.f32 %v4912, %v5538
      %v5540 = vpop.f32.mrf.mxu0
      %v5541 = vand.u32 %v1926, 4294901760
      %5542 = vmatprep.mubr.f32.mxu0 %v5541
      %v5543 = vand.u32 %v1723, 4294901760
      %5544 = vmatmul.mubr.f32.gmra.mxu0 %v5543
      %v5545 = vpop.f32.mrf.mxu0
      %v5546 = vadd.f32 %v4923, %v5545
      %v5547 = vpop.f32.mrf.mxu0
      %v5548 = vand.u32 %v1929, 4294901760
      %5549 = vmatprep.mubr.f32.mxu0 %v5548
      %v5550 = vand.u32 %v1725, 4294901760
      %5551 = vmatmul.mubr.f32.gmra.mxu0 %v5550
      %v5552 = vpop.f32.mrf.mxu0
      %v5553 = vadd.f32 %v4934, %v5552
      %v5554 = vpop.f32.mrf.mxu0
      %v5555 = vand.u32 %v1932, 4294901760
      %5556 = vmatprep.mubr.f32.mxu0 %v5555
      %v5557 = vand.u32 %v1727, 4294901760
      %5558 = vmatmul.mubr.f32.gmra.mxu0 %v5557
      %v5559 = vpop.f32.mrf.mxu0
      %v5560 = vadd.f32 %v4945, %v5559
      %v5561 = vpop.f32.mrf.mxu0
      %v5562 = vand.u32 %v1935, 4294901760
      %5563 = vmatprep.mubr.f32.mxu0 %v5562
      %v5564 = vand.u32 %v1729, 4294901760
      %5565 = vmatmul.mubr.f32.gmra.mxu0 %v5564
      %v5566 = vpop.f32.mrf.mxu0
      %v5567 = vadd.f32 %v4956, %v5566
      %v5568 = vpop.f32.mrf.mxu0
      %v5569 = vand.u32 %v1938, 4294901760
      %5570 = vmatprep.mubr.f32.mxu0 %v5569
      %v5571 = vand.u32 %v1731, 4294901760
      %5572 = vmatmul.mubr.f32.gmra.mxu0 %v5571
      %v5573 = vpop.f32.mrf.mxu0
      %v5574 = vadd.f32 %v4967, %v5573
      %v5575 = vpop.f32.mrf.mxu0
      %v5576 = vand.u32 %v1941, 4294901760
      %5577 = vmatprep.mubr.f32.mxu0 %v5576
      %v5578 = vand.u32 %v1733, 4294901760
      %5579 = vmatmul.mubr.f32.gmra.mxu0 %v5578
      %v5580 = vpop.f32.mrf.mxu0
      %v5581 = vadd.f32 %v4978, %v5580
      %v5582 = vpop.f32.mrf.mxu0
      %v5583 = vand.u32 %v1944, 4294901760
      %5584 = vmatprep.mubr.f32.mxu0 %v5583
      %v5585 = vand.u32 %v1735, 4294901760
      %5586 = vmatmul.mubr.f32.gmra.mxu0 %v5585
      %v5587 = vpop.f32.mrf.mxu0
      %v5588 = vadd.f32 %v4989, %v5587
      %v5589 = vpop.f32.mrf.mxu0
      %v5590 = vand.u32 %v1947, 4294901760
      %5591 = vmatprep.mubr.f32.mxu0 %v5590
      %v5592 = vand.u32 %v1737, 4294901760
      %5593 = vmatmul.mubr.f32.gmra.mxu0 %v5592
      %v5594 = vpop.f32.mrf.mxu0
      %v5595 = vadd.f32 %v5000, %v5594
      %v5596 = vpop.f32.mrf.mxu0
      %v5597 = vand.u32 %v1950, 4294901760
      %5598 = vmatprep.mubr.f32.mxu0 %v5597
      %v5599 = vand.u32 %v1739, 4294901760
      %5600 = vmatmul.mubr.f32.gmra.mxu0 %v5599
      %v5601 = vpop.f32.mrf.mxu0
      %v5602 = vadd.f32 %v5011, %v5601
      %v5603 = vpop.f32.mrf.mxu0
      %v5604 = vand.u32 %v1953, 4294901760
      %5605 = vmatprep.mubr.f32.mxu0 %v5604
      %v5606 = vand.u32 %v1741, 4294901760
      %5607 = vmatmul.mubr.f32.gmra.mxu0 %v5606
      %v5608 = vpop.f32.mrf.mxu0
      %v5609 = vadd.f32 %v5022, %v5608
      %v5610 = vpop.f32.mrf.mxu0
      %v5611 = vand.u32 %v1956, 4294901760
      %5612 = vmatprep.mubr.f32.mxu0 %v5611
      %v5613 = vand.u32 %v1743, 4294901760
      %5614 = vmatmul.mubr.f32.gmra.mxu0 %v5613
      %v5615 = vpop.f32.mrf.mxu0
      %v5616 = vadd.f32 %v5033, %v5615
      %v5617 = vpop.f32.mrf.mxu0
      %v5618 = vand.u32 %v1959, 4294901760
      %5619 = vmatprep.mubr.f32.mxu0 %v5618
      %v5620 = vand.u32 %v1745, 4294901760
      %5621 = vmatmul.mubr.f32.gmra.mxu0 %v5620
      %v5622 = vpop.f32.mrf.mxu0
      %v5623 = vadd.f32 %v5044, %v5622
      %v5624 = vpop.f32.mrf.mxu0
      %v5625 = vand.u32 %v1962, 4294901760
      %5626 = vmatprep.mubr.f32.mxu0 %v5625
      %v5627 = vand.u32 %v1747, 4294901760
      %5628 = vmatmul.mubr.f32.gmra.mxu0 %v5627
      %v5629 = vpop.f32.mrf.mxu0
      %v5630 = vadd.f32 %v5055, %v5629
      %v5631 = vpop.f32.mrf.mxu0
      %v5632 = vand.u32 %v1965, 4294901760
      %5633 = vmatprep.mubr.f32.mxu0 %v5632
      %v5634 = vand.u32 %v1749, 4294901760
      %5635 = vmatmul.mubr.f32.gmra.mxu0 %v5634
      %v5636 = vpop.f32.mrf.mxu0
      %v5637 = vadd.f32 %v5066, %v5636
      %v5638 = vpop.f32.mrf.mxu0
      %v5639 = vand.u32 %v1968, 4294901760
      %5640 = vmatprep.mubr.f32.mxu0 %v5639
      %v5641 = vand.u32 %v1751, 4294901760
      %5642 = vmatmul.mubr.f32.gmra.mxu0 %v5641
      %v5643 = vpop.f32.mrf.mxu0
      %v5644 = vadd.f32 %v5077, %v5643
      %v5645 = vpop.f32.mrf.mxu0
      %5646 = vdwg.mxu0
      %5647 = vmatprep.subr.mxu0 0.0
      %v5648 = vand.u32 %v1768, 4294901760
      %5649 = vmatpush1.msra.mxu0 %v5648
      %5650 = vmatprep.subr.mxu0 0.0
      %v5651 = vand.u32 %v1767, 4294901760
      %5652 = vmatpush1.msra.mxu0 %v5651
      %5653 = vmatprep.subr.mxu0 0.0
      %v5654 = vand.u32 %v1766, 4294901760
      %5655 = vmatpush1.msra.mxu0 %v5654
      %5656 = vmatprep.subr.mxu0 0.0
      %v5657 = vand.u32 %v1765, 4294901760
      %5658 = vmatpush1.msra.mxu0 %v5657
      %5659 = vmatprep.subr.mxu0 0.0
      %v5660 = vand.u32 %v1764, 4294901760
      %5661 = vmatpush1.msra.mxu0 %v5660
      %5662 = vmatprep.subr.mxu0 0.0
      %v5663 = vand.u32 %v1763, 4294901760
      %5664 = vmatpush1.msra.mxu0 %v5663
      %5665 = vmatprep.subr.mxu0 0.0
      %v5666 = vand.u32 %v1762, 4294901760
      %5667 = vmatpush1.msra.mxu0 %v5666
      %5668 = vmatprep.subr.mxu0 0.0
      %v5669 = vand.u32 %v1761, 4294901760
      %5670 = vmatpush1.msra.mxu0 %v5669
      %5671 = vmatprep.subr.mxu0 0.0
      %v5672 = vand.u32 %v1760, 4294901760
      %5673 = vmatpush1.msra.mxu0 %v5672
      %5674 = vmatprep.subr.mxu0 0.0
      %v5675 = vand.u32 %v1759, 4294901760
      %5676 = vmatpush1.msra.mxu0 %v5675
      %5677 = vmatprep.subr.mxu0 0.0
      %v5678 = vand.u32 %v1758, 4294901760
      %5679 = vmatpush1.msra.mxu0 %v5678
      %5680 = vmatprep.subr.mxu0 0.0
      %v5681 = vand.u32 %v1757, 4294901760
      %5682 = vmatpush1.msra.mxu0 %v5681
      %5683 = vmatprep.subr.mxu0 0.0
      %v5684 = vand.u32 %v1756, 4294901760
      %5685 = vmatpush1.msra.mxu0 %v5684
      %5686 = vmatprep.subr.mxu0 0.0
      %v5687 = vand.u32 %v1755, 4294901760
      %5688 = vmatpush1.msra.mxu0 %v5687
      %5689 = vmatprep.subr.mxu0 0.0
      %v5690 = vand.u32 %v1754, 4294901760
      %5691 = vmatpush1.msra.mxu0 %v5690
      %5692 = vmatprep.subr.mxu0 0.0
      %v5693 = vand.u32 %v1753, 4294901760
      %5694 = vmatpush1.msra.mxu0 %v5693
      %5695 = vmatprep.subr.mxu0 0.0
      %5696 = vmatpush2.msra.mxu0 0.0
      %5697 = vmatprep.subr.mxu0 0.0
      %5698 = vmatpush2.msra.mxu0 0.0
      %5699 = vmatprep.subr.mxu0 0.0
      %5700 = vmatpush2.msra.mxu0 0.0
      %5701 = vmatprep.subr.mxu0 0.0
      %5702 = vmatpush2.msra.mxu0 0.0
      %5703 = vmatprep.subr.mxu0 0.0
      %5704 = vmatpush2.msra.mxu0 0.0
      %5705 = vmatprep.subr.mxu0 0.0
      %5706 = vmatpush2.msra.mxu0 0.0
      %5707 = vmatprep.subr.mxu0 0.0
      %5708 = vmatpush2.msra.mxu0 0.0
      %5709 = vmatprep.subr.mxu0 0.0
      %5710 = vmatpush2.msra.mxu0 0.0
      %5711 = vmatprep.subr.mxu0 0.0
      %5712 = vmatpush2.msra.mxu0 0.0
      %5713 = vmatprep.subr.mxu0 0.0
      %5714 = vmatpush2.msra.mxu0 0.0
      %5715 = vmatprep.subr.mxu0 0.0
      %5716 = vmatpush2.msra.mxu0 0.0
      %5717 = vmatprep.subr.mxu0 0.0
      %5718 = vmatpush2.msra.mxu0 0.0
      %5719 = vmatprep.subr.mxu0 0.0
      %5720 = vmatpush2.msra.mxu0 0.0
      %5721 = vmatprep.subr.mxu0 0.0
      %5722 = vmatpush2.msra.mxu0 0.0
      %5723 = vmatprep.subr.mxu0 0.0
      %v5724 = vand.u32 %v1770, 4294901760
      %5725 = vmatpush2.msra.mxu0 %v5724
      %5726 = vmatprep.subr.mxu0 0.0
      %v5727 = vand.u32 %v1769, 4294901760
      %5728 = vmatpush2.msra.mxu0 %v5727
      %v5729 = vand.u32 %v1779, 4294901760
      %5730 = vmatprep.mubr.f32.mxu0 %v5729
      %v5731 = vand.u32 %v1625, 4294901760
      %5732 = vmatmul.mubr.f32.gmra.mxu0 %v5731
      %v5733 = vpop.f32.mrf.mxu0
      %v5734 = vadd.f32 %v5203, %v5733
      %v5735 = vpop.f32.mrf.mxu0
      %v5736 = vand.u32 %v1782, 4294901760
      %5737 = vmatprep.mubr.f32.mxu0 %v5736
      %v5738 = vand.u32 %v1627, 4294901760
      %5739 = vmatmul.mubr.f32.gmra.mxu0 %v5738
      %v5740 = vpop.f32.mrf.mxu0
      %v5741 = vadd.f32 %v5210, %v5740
      %v5742 = vpop.f32.mrf.mxu0
      %v5743 = vand.u32 %v1785, 4294901760
      %5744 = vmatprep.mubr.f32.mxu0 %v5743
      %v5745 = vand.u32 %v1629, 4294901760
      %5746 = vmatmul.mubr.f32.gmra.mxu0 %v5745
      %v5747 = vpop.f32.mrf.mxu0
      %v5748 = vadd.f32 %v5217, %v5747
      %v5749 = vpop.f32.mrf.mxu0
      %v5750 = vand.u32 %v1788, 4294901760
      %5751 = vmatprep.mubr.f32.mxu0 %v5750
      %v5752 = vand.u32 %v1631, 4294901760
      %5753 = vmatmul.mubr.f32.gmra.mxu0 %v5752
      %v5754 = vpop.f32.mrf.mxu0
      %v5755 = vadd.f32 %v5224, %v5754
      %v5756 = vpop.f32.mrf.mxu0
      %v5757 = vand.u32 %v1791, 4294901760
      %5758 = vmatprep.mubr.f32.mxu0 %v5757
      %v5759 = vand.u32 %v1633, 4294901760
      %5760 = vmatmul.mubr.f32.gmra.mxu0 %v5759
      %v5761 = vpop.f32.mrf.mxu0
      %v5762 = vadd.f32 %v5231, %v5761
      %v5763 = vpop.f32.mrf.mxu0
      %v5764 = vand.u32 %v1794, 4294901760
      %5765 = vmatprep.mubr.f32.mxu0 %v5764
      %v5766 = vand.u32 %v1635, 4294901760
      %5767 = vmatmul.mubr.f32.gmra.mxu0 %v5766
      %v5768 = vpop.f32.mrf.mxu0
      %v5769 = vadd.f32 %v5238, %v5768
      %v5770 = vpop.f32.mrf.mxu0
      %v5771 = vand.u32 %v1797, 4294901760
      %5772 = vmatprep.mubr.f32.mxu0 %v5771
      %v5773 = vand.u32 %v1637, 4294901760
      %5774 = vmatmul.mubr.f32.gmra.mxu0 %v5773
      %v5775 = vpop.f32.mrf.mxu0
      %v5776 = vadd.f32 %v5245, %v5775
      %v5777 = vpop.f32.mrf.mxu0
      %v5778 = vand.u32 %v1800, 4294901760
      %5779 = vmatprep.mubr.f32.mxu0 %v5778
      %v5780 = vand.u32 %v1639, 4294901760
      %5781 = vmatmul.mubr.f32.gmra.mxu0 %v5780
      %v5782 = vpop.f32.mrf.mxu0
      %v5783 = vadd.f32 %v5252, %v5782
      %v5784 = vpop.f32.mrf.mxu0
      %v5785 = vand.u32 %v1803, 4294901760
      %5786 = vmatprep.mubr.f32.mxu0 %v5785
      %v5787 = vand.u32 %v1641, 4294901760
      %5788 = vmatmul.mubr.f32.gmra.mxu0 %v5787
      %v5789 = vpop.f32.mrf.mxu0
      %v5790 = vadd.f32 %v5259, %v5789
      %v5791 = vpop.f32.mrf.mxu0
      %v5792 = vand.u32 %v1806, 4294901760
      %5793 = vmatprep.mubr.f32.mxu0 %v5792
      %v5794 = vand.u32 %v1643, 4294901760
      %5795 = vmatmul.mubr.f32.gmra.mxu0 %v5794
      %v5796 = vpop.f32.mrf.mxu0
      %v5797 = vadd.f32 %v5266, %v5796
      %v5798 = vpop.f32.mrf.mxu0
      %v5799 = vand.u32 %v1809, 4294901760
      %5800 = vmatprep.mubr.f32.mxu0 %v5799
      %v5801 = vand.u32 %v1645, 4294901760
      %5802 = vmatmul.mubr.f32.gmra.mxu0 %v5801
      %v5803 = vpop.f32.mrf.mxu0
      %v5804 = vadd.f32 %v5273, %v5803
      %v5805 = vpop.f32.mrf.mxu0
      %v5806 = vand.u32 %v1812, 4294901760
      %5807 = vmatprep.mubr.f32.mxu0 %v5806
      %v5808 = vand.u32 %v1647, 4294901760
      %5809 = vmatmul.mubr.f32.gmra.mxu0 %v5808
      %v5810 = vpop.f32.mrf.mxu0
      %v5811 = vadd.f32 %v5280, %v5810
      %v5812 = vpop.f32.mrf.mxu0
      %v5813 = vand.u32 %v1815, 4294901760
      %5814 = vmatprep.mubr.f32.mxu0 %v5813
      %v5815 = vand.u32 %v1649, 4294901760
      %5816 = vmatmul.mubr.f32.gmra.mxu0 %v5815
      %v5817 = vpop.f32.mrf.mxu0
      %v5818 = vadd.f32 %v5287, %v5817
      %v5819 = vpop.f32.mrf.mxu0
      %v5820 = vand.u32 %v1818, 4294901760
      %5821 = vmatprep.mubr.f32.mxu0 %v5820
      %v5822 = vand.u32 %v1651, 4294901760
      %5823 = vmatmul.mubr.f32.gmra.mxu0 %v5822
      %v5824 = vpop.f32.mrf.mxu0
      %v5825 = vadd.f32 %v5294, %v5824
      %v5826 = vpop.f32.mrf.mxu0
      %v5827 = vand.u32 %v1821, 4294901760
      %5828 = vmatprep.mubr.f32.mxu0 %v5827
      %v5829 = vand.u32 %v1653, 4294901760
      %5830 = vmatmul.mubr.f32.gmra.mxu0 %v5829
      %v5831 = vpop.f32.mrf.mxu0
      %v5832 = vadd.f32 %v5301, %v5831
      %v5833 = vpop.f32.mrf.mxu0
      %v5834 = vand.u32 %v1824, 4294901760
      %5835 = vmatprep.mubr.f32.mxu0 %v5834
      %v5836 = vand.u32 %v1655, 4294901760
      %5837 = vmatmul.mubr.f32.gmra.mxu0 %v5836
      %v5838 = vpop.f32.mrf.mxu0
      %v5839 = vadd.f32 %v5308, %v5838
      %v5840 = vpop.f32.mrf.mxu0
      %v5841 = vand.u32 %v1827, 4294901760
      %5842 = vmatprep.mubr.f32.mxu0 %v5841
      %v5843 = vand.u32 %v1657, 4294901760
      %5844 = vmatmul.mubr.f32.gmra.mxu0 %v5843
      %v5845 = vpop.f32.mrf.mxu0
      %v5846 = vadd.f32 %v5315, %v5845
      %v5847 = vpop.f32.mrf.mxu0
      %v5848 = vand.u32 %v1830, 4294901760
      %5849 = vmatprep.mubr.f32.mxu0 %v5848
      %v5850 = vand.u32 %v1659, 4294901760
      %5851 = vmatmul.mubr.f32.gmra.mxu0 %v5850
      %v5852 = vpop.f32.mrf.mxu0
      %v5853 = vadd.f32 %v5322, %v5852
      %v5854 = vpop.f32.mrf.mxu0
      %v5855 = vand.u32 %v1833, 4294901760
      %5856 = vmatprep.mubr.f32.mxu0 %v5855
      %v5857 = vand.u32 %v1661, 4294901760
      %5858 = vmatmul.mubr.f32.gmra.mxu0 %v5857
      %v5859 = vpop.f32.mrf.mxu0
      %v5860 = vadd.f32 %v5329, %v5859
      %v5861 = vpop.f32.mrf.mxu0
      %v5862 = vand.u32 %v1836, 4294901760
      %5863 = vmatprep.mubr.f32.mxu0 %v5862
      %v5864 = vand.u32 %v1663, 4294901760
      %5865 = vmatmul.mubr.f32.gmra.mxu0 %v5864
      %v5866 = vpop.f32.mrf.mxu0
      %v5867 = vadd.f32 %v5336, %v5866
      %v5868 = vpop.f32.mrf.mxu0
      %v5869 = vand.u32 %v1839, 4294901760
      %5870 = vmatprep.mubr.f32.mxu0 %v5869
      %v5871 = vand.u32 %v1665, 4294901760
      %5872 = vmatmul.mubr.f32.gmra.mxu0 %v5871
      %v5873 = vpop.f32.mrf.mxu0
      %v5874 = vadd.f32 %v5343, %v5873
      %v5875 = vpop.f32.mrf.mxu0
      %v5876 = vand.u32 %v1842, 4294901760
      %5877 = vmatprep.mubr.f32.mxu0 %v5876
      %v5878 = vand.u32 %v1667, 4294901760
      %5879 = vmatmul.mubr.f32.gmra.mxu0 %v5878
      %v5880 = vpop.f32.mrf.mxu0
      %v5881 = vadd.f32 %v5350, %v5880
      %v5882 = vpop.f32.mrf.mxu0
      %v5883 = vand.u32 %v1845, 4294901760
      %5884 = vmatprep.mubr.f32.mxu0 %v5883
      %v5885 = vand.u32 %v1669, 4294901760
      %5886 = vmatmul.mubr.f32.gmra.mxu0 %v5885
      %v5887 = vpop.f32.mrf.mxu0
      %v5888 = vadd.f32 %v5357, %v5887
      %v5889 = vpop.f32.mrf.mxu0
      %v5890 = vand.u32 %v1848, 4294901760
      %5891 = vmatprep.mubr.f32.mxu0 %v5890
      %v5892 = vand.u32 %v1671, 4294901760
      %5893 = vmatmul.mubr.f32.gmra.mxu0 %v5892
      %v5894 = vpop.f32.mrf.mxu0
      %v5895 = vadd.f32 %v5364, %v5894
      %v5896 = vpop.f32.mrf.mxu0
      %v5897 = vand.u32 %v1851, 4294901760
      %5898 = vmatprep.mubr.f32.mxu0 %v5897
      %v5899 = vand.u32 %v1673, 4294901760
      %5900 = vmatmul.mubr.f32.gmra.mxu0 %v5899
      %v5901 = vpop.f32.mrf.mxu0
      %v5902 = vadd.f32 %v5371, %v5901
      %v5903 = vpop.f32.mrf.mxu0
      %v5904 = vand.u32 %v1854, 4294901760
      %5905 = vmatprep.mubr.f32.mxu0 %v5904
      %v5906 = vand.u32 %v1675, 4294901760
      %5907 = vmatmul.mubr.f32.gmra.mxu0 %v5906
      %v5908 = vpop.f32.mrf.mxu0
      %v5909 = vadd.f32 %v5378, %v5908
      %v5910 = vpop.f32.mrf.mxu0
      %v5911 = vand.u32 %v1857, 4294901760
      %5912 = vmatprep.mubr.f32.mxu0 %v5911
      %v5913 = vand.u32 %v1677, 4294901760
      %5914 = vmatmul.mubr.f32.gmra.mxu0 %v5913
      %v5915 = vpop.f32.mrf.mxu0
      %v5916 = vadd.f32 %v5385, %v5915
      %v5917 = vpop.f32.mrf.mxu0
      %v5918 = vand.u32 %v1860, 4294901760
      %5919 = vmatprep.mubr.f32.mxu0 %v5918
      %v5920 = vand.u32 %v1679, 4294901760
      %5921 = vmatmul.mubr.f32.gmra.mxu0 %v5920
      %v5922 = vpop.f32.mrf.mxu0
      %v5923 = vadd.f32 %v5392, %v5922
      %v5924 = vpop.f32.mrf.mxu0
      %v5925 = vand.u32 %v1863, 4294901760
      %5926 = vmatprep.mubr.f32.mxu0 %v5925
      %v5927 = vand.u32 %v1681, 4294901760
      %5928 = vmatmul.mubr.f32.gmra.mxu0 %v5927
      %v5929 = vpop.f32.mrf.mxu0
      %v5930 = vadd.f32 %v5399, %v5929
      %v5931 = vpop.f32.mrf.mxu0
      %v5932 = vand.u32 %v1866, 4294901760
      %5933 = vmatprep.mubr.f32.mxu0 %v5932
      %v5934 = vand.u32 %v1683, 4294901760
      %5935 = vmatmul.mubr.f32.gmra.mxu0 %v5934
      %v5936 = vpop.f32.mrf.mxu0
      %v5937 = vadd.f32 %v5406, %v5936
      %v5938 = vpop.f32.mrf.mxu0
      %v5939 = vand.u32 %v1869, 4294901760
      %5940 = vmatprep.mubr.f32.mxu0 %v5939
      %v5941 = vand.u32 %v1685, 4294901760
      %5942 = vmatmul.mubr.f32.gmra.mxu0 %v5941
      %v5943 = vpop.f32.mrf.mxu0
      %v5944 = vadd.f32 %v5413, %v5943
      %v5945 = vpop.f32.mrf.mxu0
      %v5946 = vand.u32 %v1872, 4294901760
      %5947 = vmatprep.mubr.f32.mxu0 %v5946
      %v5948 = vand.u32 %v1687, 4294901760
      %5949 = vmatmul.mubr.f32.gmra.mxu0 %v5948
      %v5950 = vpop.f32.mrf.mxu0
      %v5951 = vadd.f32 %v5420, %v5950
      %v5952 = vpop.f32.mrf.mxu0
      %v5953 = vand.u32 %v1875, 4294901760
      %5954 = vmatprep.mubr.f32.mxu0 %v5953
      %v5955 = vand.u32 %v1689, 4294901760
      %5956 = vmatmul.mubr.f32.gmra.mxu0 %v5955
      %v5957 = vpop.f32.mrf.mxu0
      %v5958 = vadd.f32 %v5427, %v5957
      %v5959 = vpop.f32.mrf.mxu0
      %v5960 = vand.u32 %v1878, 4294901760
      %5961 = vmatprep.mubr.f32.mxu0 %v5960
      %v5962 = vand.u32 %v1691, 4294901760
      %5963 = vmatmul.mubr.f32.gmra.mxu0 %v5962
      %v5964 = vpop.f32.mrf.mxu0
      %v5965 = vadd.f32 %v5434, %v5964
      %v5966 = vpop.f32.mrf.mxu0
      %v5967 = vand.u32 %v1881, 4294901760
      %5968 = vmatprep.mubr.f32.mxu0 %v5967
      %v5969 = vand.u32 %v1693, 4294901760
      %5970 = vmatmul.mubr.f32.gmra.mxu0 %v5969
      %v5971 = vpop.f32.mrf.mxu0
      %v5972 = vadd.f32 %v5441, %v5971
      %v5973 = vpop.f32.mrf.mxu0
      %v5974 = vand.u32 %v1884, 4294901760
      %5975 = vmatprep.mubr.f32.mxu0 %v5974
      %v5976 = vand.u32 %v1695, 4294901760
      %5977 = vmatmul.mubr.f32.gmra.mxu0 %v5976
      %v5978 = vpop.f32.mrf.mxu0
      %v5979 = vadd.f32 %v5448, %v5978
      %v5980 = vpop.f32.mrf.mxu0
      %v5981 = vand.u32 %v1887, 4294901760
      %5982 = vmatprep.mubr.f32.mxu0 %v5981
      %v5983 = vand.u32 %v1697, 4294901760
      %5984 = vmatmul.mubr.f32.gmra.mxu0 %v5983
      %v5985 = vpop.f32.mrf.mxu0
      %v5986 = vadd.f32 %v5455, %v5985
      %v5987 = vpop.f32.mrf.mxu0
      %v5988 = vand.u32 %v1890, 4294901760
      %5989 = vmatprep.mubr.f32.mxu0 %v5988
      %v5990 = vand.u32 %v1699, 4294901760
      %5991 = vmatmul.mubr.f32.gmra.mxu0 %v5990
      %v5992 = vpop.f32.mrf.mxu0
      %v5993 = vadd.f32 %v5462, %v5992
      %v5994 = vpop.f32.mrf.mxu0
      %v5995 = vand.u32 %v1893, 4294901760
      %5996 = vmatprep.mubr.f32.mxu0 %v5995
      %v5997 = vand.u32 %v1701, 4294901760
      %5998 = vmatmul.mubr.f32.gmra.mxu0 %v5997
      %v5999 = vpop.f32.mrf.mxu0
      %v6000 = vadd.f32 %v5469, %v5999
      %v6001 = vpop.f32.mrf.mxu0
      %v6002 = vand.u32 %v1896, 4294901760
      %6003 = vmatprep.mubr.f32.mxu0 %v6002
      %v6004 = vand.u32 %v1703, 4294901760
      %6005 = vmatmul.mubr.f32.gmra.mxu0 %v6004
      %v6006 = vpop.f32.mrf.mxu0
      %v6007 = vadd.f32 %v5476, %v6006
      %v6008 = vpop.f32.mrf.mxu0
      %v6009 = vand.u32 %v1899, 4294901760
      %6010 = vmatprep.mubr.f32.mxu0 %v6009
      %v6011 = vand.u32 %v1705, 4294901760
      %6012 = vmatmul.mubr.f32.gmra.mxu0 %v6011
      %v6013 = vpop.f32.mrf.mxu0
      %v6014 = vadd.f32 %v5483, %v6013
      %v6015 = vpop.f32.mrf.mxu0
      %v6016 = vand.u32 %v1902, 4294901760
      %6017 = vmatprep.mubr.f32.mxu0 %v6016
      %v6018 = vand.u32 %v1707, 4294901760
      %6019 = vmatmul.mubr.f32.gmra.mxu0 %v6018
      %v6020 = vpop.f32.mrf.mxu0
      %v6021 = vadd.f32 %v5490, %v6020
      %v6022 = vpop.f32.mrf.mxu0
      %v6023 = vand.u32 %v1905, 4294901760
      %6024 = vmatprep.mubr.f32.mxu0 %v6023
      %v6025 = vand.u32 %v1709, 4294901760
      %6026 = vmatmul.mubr.f32.gmra.mxu0 %v6025
      %v6027 = vpop.f32.mrf.mxu0
      %v6028 = vadd.f32 %v5497, %v6027
      %v6029 = vpop.f32.mrf.mxu0
      %v6030 = vand.u32 %v1908, 4294901760
      %6031 = vmatprep.mubr.f32.mxu0 %v6030
      %v6032 = vand.u32 %v1711, 4294901760
      %6033 = vmatmul.mubr.f32.gmra.mxu0 %v6032
      %v6034 = vpop.f32.mrf.mxu0
      %v6035 = vadd.f32 %v5504, %v6034
      %v6036 = vpop.f32.mrf.mxu0
      %v6037 = vand.u32 %v1911, 4294901760
      %6038 = vmatprep.mubr.f32.mxu0 %v6037
      %v6039 = vand.u32 %v1713, 4294901760
      %6040 = vmatmul.mubr.f32.gmra.mxu0 %v6039
      %v6041 = vpop.f32.mrf.mxu0
      %v6042 = vadd.f32 %v5511, %v6041
      %v6043 = vpop.f32.mrf.mxu0
      %v6044 = vand.u32 %v1914, 4294901760
      %6045 = vmatprep.mubr.f32.mxu0 %v6044
      %v6046 = vand.u32 %v1715, 4294901760
      %6047 = vmatmul.mubr.f32.gmra.mxu0 %v6046
      %v6048 = vpop.f32.mrf.mxu0
      %v6049 = vadd.f32 %v5518, %v6048
      %v6050 = vpop.f32.mrf.mxu0
      %v6051 = vand.u32 %v1917, 4294901760
      %6052 = vmatprep.mubr.f32.mxu0 %v6051
      %v6053 = vand.u32 %v1717, 4294901760
      %6054 = vmatmul.mubr.f32.gmra.mxu0 %v6053
      %v6055 = vpop.f32.mrf.mxu0
      %v6056 = vadd.f32 %v5525, %v6055
      %v6057 = vpop.f32.mrf.mxu0
      %v6058 = vand.u32 %v1920, 4294901760
      %6059 = vmatprep.mubr.f32.mxu0 %v6058
      %v6060 = vand.u32 %v1719, 4294901760
      %6061 = vmatmul.mubr.f32.gmra.mxu0 %v6060
      %v6062 = vpop.f32.mrf.mxu0
      %v6063 = vadd.f32 %v5532, %v6062
      %v6064 = vpop.f32.mrf.mxu0
      %v6065 = vand.u32 %v1923, 4294901760
      %6066 = vmatprep.mubr.f32.mxu0 %v6065
      %v6067 = vand.u32 %v1721, 4294901760
      %6068 = vmatmul.mubr.f32.gmra.mxu0 %v6067
      %v6069 = vpop.f32.mrf.mxu0
      %v6070 = vadd.f32 %v5539, %v6069
      %v6071 = vpop.f32.mrf.mxu0
      %v6072 = vand.u32 %v1926, 4294901760
      %6073 = vmatprep.mubr.f32.mxu0 %v6072
      %v6074 = vand.u32 %v1723, 4294901760
      %6075 = vmatmul.mubr.f32.gmra.mxu0 %v6074
      %v6076 = vpop.f32.mrf.mxu0
      %v6077 = vadd.f32 %v5546, %v6076
      %v6078 = vpop.f32.mrf.mxu0
      %v6079 = vand.u32 %v1929, 4294901760
      %6080 = vmatprep.mubr.f32.mxu0 %v6079
      %v6081 = vand.u32 %v1725, 4294901760
      %6082 = vmatmul.mubr.f32.gmra.mxu0 %v6081
      %v6083 = vpop.f32.mrf.mxu0
      %v6084 = vadd.f32 %v5553, %v6083
      %v6085 = vpop.f32.mrf.mxu0
      %v6086 = vand.u32 %v1932, 4294901760
      %6087 = vmatprep.mubr.f32.mxu0 %v6086
      %v6088 = vand.u32 %v1727, 4294901760
      %6089 = vmatmul.mubr.f32.gmra.mxu0 %v6088
      %v6090 = vpop.f32.mrf.mxu0
      %v6091 = vadd.f32 %v5560, %v6090
      %v6092 = vpop.f32.mrf.mxu0
      %v6093 = vand.u32 %v1935, 4294901760
      %6094 = vmatprep.mubr.f32.mxu0 %v6093
      %v6095 = vand.u32 %v1729, 4294901760
      %6096 = vmatmul.mubr.f32.gmra.mxu0 %v6095
      %v6097 = vpop.f32.mrf.mxu0
      %v6098 = vadd.f32 %v5567, %v6097
      %v6099 = vpop.f32.mrf.mxu0
      %v6100 = vand.u32 %v1938, 4294901760
      %6101 = vmatprep.mubr.f32.mxu0 %v6100
      %v6102 = vand.u32 %v1731, 4294901760
      %6103 = vmatmul.mubr.f32.gmra.mxu0 %v6102
      %v6104 = vpop.f32.mrf.mxu0
      %v6105 = vadd.f32 %v5574, %v6104
      %v6106 = vpop.f32.mrf.mxu0
      %v6107 = vand.u32 %v1941, 4294901760
      %6108 = vmatprep.mubr.f32.mxu0 %v6107
      %v6109 = vand.u32 %v1733, 4294901760
      %6110 = vmatmul.mubr.f32.gmra.mxu0 %v6109
      %v6111 = vpop.f32.mrf.mxu0
      %v6112 = vadd.f32 %v5581, %v6111
      %v6113 = vpop.f32.mrf.mxu0
      %v6114 = vand.u32 %v1944, 4294901760
      %6115 = vmatprep.mubr.f32.mxu0 %v6114
      %v6116 = vand.u32 %v1735, 4294901760
      %6117 = vmatmul.mubr.f32.gmra.mxu0 %v6116
      %v6118 = vpop.f32.mrf.mxu0
      %v6119 = vadd.f32 %v5588, %v6118
      %v6120 = vpop.f32.mrf.mxu0
      %v6121 = vand.u32 %v1947, 4294901760
      %6122 = vmatprep.mubr.f32.mxu0 %v6121
      %v6123 = vand.u32 %v1737, 4294901760
      %6124 = vmatmul.mubr.f32.gmra.mxu0 %v6123
      %v6125 = vpop.f32.mrf.mxu0
      %v6126 = vadd.f32 %v5595, %v6125
      %v6127 = vpop.f32.mrf.mxu0
      %v6128 = vand.u32 %v1950, 4294901760
      %6129 = vmatprep.mubr.f32.mxu0 %v6128
      %v6130 = vand.u32 %v1739, 4294901760
      %6131 = vmatmul.mubr.f32.gmra.mxu0 %v6130
      %v6132 = vpop.f32.mrf.mxu0
      %v6133 = vadd.f32 %v5602, %v6132
      %v6134 = vpop.f32.mrf.mxu0
      %v6135 = vand.u32 %v1953, 4294901760
      %6136 = vmatprep.mubr.f32.mxu0 %v6135
      %v6137 = vand.u32 %v1741, 4294901760
      %6138 = vmatmul.mubr.f32.gmra.mxu0 %v6137
      %v6139 = vpop.f32.mrf.mxu0
      %v6140 = vadd.f32 %v5609, %v6139
      %v6141 = vpop.f32.mrf.mxu0
      %v6142 = vand.u32 %v1956, 4294901760
      %6143 = vmatprep.mubr.f32.mxu0 %v6142
      %v6144 = vand.u32 %v1743, 4294901760
      %6145 = vmatmul.mubr.f32.gmra.mxu0 %v6144
      %v6146 = vpop.f32.mrf.mxu0
      %v6147 = vadd.f32 %v5616, %v6146
      %v6148 = vpop.f32.mrf.mxu0
      %v6149 = vand.u32 %v1959, 4294901760
      %6150 = vmatprep.mubr.f32.mxu0 %v6149
      %v6151 = vand.u32 %v1745, 4294901760
      %6152 = vmatmul.mubr.f32.gmra.mxu0 %v6151
      %v6153 = vpop.f32.mrf.mxu0
      %v6154 = vadd.f32 %v5623, %v6153
      %v6155 = vpop.f32.mrf.mxu0
      %v6156 = vand.u32 %v1962, 4294901760
      %6157 = vmatprep.mubr.f32.mxu0 %v6156
      %v6158 = vand.u32 %v1747, 4294901760
      %6159 = vmatmul.mubr.f32.gmra.mxu0 %v6158
      %v6160 = vpop.f32.mrf.mxu0
      %v6161 = vadd.f32 %v5630, %v6160
      %v6162 = vpop.f32.mrf.mxu0
      %v6163 = vand.u32 %v1965, 4294901760
      %6164 = vmatprep.mubr.f32.mxu0 %v6163
      %v6165 = vand.u32 %v1749, 4294901760
      %6166 = vmatmul.mubr.f32.gmra.mxu0 %v6165
      %v6167 = vpop.f32.mrf.mxu0
      %v6168 = vadd.f32 %v5637, %v6167
      %v6169 = vpop.f32.mrf.mxu0
      %v6170 = vand.u32 %v1968, 4294901760
      %6171 = vmatprep.mubr.f32.mxu0 %v6170
      %v6172 = vand.u32 %v1751, 4294901760
      %6173 = vmatmul.mubr.f32.gmra.mxu0 %v6172
      %v6174 = vpop.f32.mrf.mxu0
      %v6175 = vadd.f32 %v5644, %v6174
      %v6176 = vpop.f32.mrf.mxu0
      %6177 = vdwg.mxu0
      %vm6178 = vcmask 392192
      %6179 = vst.msk [vmem:[%s202] sm:$0xff] %vm6178, %v5734
      %6180 = vst.msk [vmem:[%s202 + $0x8] sm:$0xff] %vm6178, %v5741
      %6181 = vst.msk [vmem:[%s202 + $0x10] sm:$0xff] %vm6178, %v5748
      %6182 = vst.msk [vmem:[%s202 + $0x18] sm:$0xff] %vm6178, %v5755
      %6183 = vst.msk [vmem:[%s202 + $0x20] sm:$0xff] %vm6178, %v5762
      %6184 = vst.msk [vmem:[%s202 + $0x28] sm:$0xff] %vm6178, %v5769
      %6185 = vst.msk [vmem:[%s202 + $0x30] sm:$0xff] %vm6178, %v5776
      %6186 = vst.msk [vmem:[%s202 + $0x38] sm:$0xff] %vm6178, %v5783
      %6187 = vst.msk [vmem:[%s202 + $0x40] sm:$0xff] %vm6178, %v5790
      %6188 = vst.msk [vmem:[%s202 + $0x48] sm:$0xff] %vm6178, %v5797
      %6189 = vst.msk [vmem:[%s202 + $0x50] sm:$0xff] %vm6178, %v5804
      %6190 = vst.msk [vmem:[%s202 + $0x58] sm:$0xff] %vm6178, %v5811
      %6191 = vst.msk [vmem:[%s202 + $0x60] sm:$0xff] %vm6178, %v5818
      %6192 = vst.msk [vmem:[%s202 + $0x68] sm:$0xff] %vm6178, %v5825
      %6193 = vst.msk [vmem:[%s202 + $0x70] sm:$0xff] %vm6178, %v5832
      %6194 = vst.msk [vmem:[%s202 + $0x78] sm:$0xff] %vm6178, %v5839
      %6195 = vst.msk [vmem:[%s202 + $0x80] sm:$0xff] %vm6178, %v5846
      %6196 = vst.msk [vmem:[%s202 + $0x88] sm:$0xff] %vm6178, %v5853
      %6197 = vst.msk [vmem:[%s202 + $0x90] sm:$0xff] %vm6178, %v5860
      %6198 = vst.msk [vmem:[%s202 + $0x98] sm:$0xff] %vm6178, %v5867
      %6199 = vst.msk [vmem:[%s202 + $0xa0] sm:$0xff] %vm6178, %v5874
      %6200 = vst.msk [vmem:[%s202 + $0xa8] sm:$0xff] %vm6178, %v5881
      %6201 = vst.msk [vmem:[%s202 + $0xb0] sm:$0xff] %vm6178, %v5888
      %6202 = vst.msk [vmem:[%s202 + $0xb8] sm:$0xff] %vm6178, %v5895
      %6203 = vst.msk [vmem:[%s202 + $0xc0] sm:$0xff] %vm6178, %v5902
      %6204 = vst.msk [vmem:[%s202 + $0xc8] sm:$0xff] %vm6178, %v5909
      %6205 = vst.msk [vmem:[%s202 + $0xd0] sm:$0xff] %vm6178, %v5916
      %6206 = vst.msk [vmem:[%s202 + $0xd8] sm:$0xff] %vm6178, %v5923
      %6207 = vst.msk [vmem:[%s202 + $0xe0] sm:$0xff] %vm6178, %v5930
      %6208 = vst.msk [vmem:[%s202 + $0xe8] sm:$0xff] %vm6178, %v5937
      %6209 = vst.msk [vmem:[%s202 + $0xf0] sm:$0xff] %vm6178, %v5944
      %6210 = vst.msk [vmem:[%s202 + $0xf8] sm:$0xff] %vm6178, %v5951
      %6211 = vst.msk [vmem:[%s202 + $0x100] sm:$0xff] %vm6178, %v5958
      %6212 = vst.msk [vmem:[%s202 + $0x108] sm:$0xff] %vm6178, %v5965
      %6213 = vst.msk [vmem:[%s202 + $0x110] sm:$0xff] %vm6178, %v5972
      %6214 = vst.msk [vmem:[%s202 + $0x118] sm:$0xff] %vm6178, %v5979
      %6215 = vst.msk [vmem:[%s202 + $0x120] sm:$0xff] %vm6178, %v5986
      %6216 = vst.msk [vmem:[%s202 + $0x128] sm:$0xff] %vm6178, %v5993
      %6217 = vst.msk [vmem:[%s202 + $0x130] sm:$0xff] %vm6178, %v6000
      %6218 = vst.msk [vmem:[%s202 + $0x138] sm:$0xff] %vm6178, %v6007
      %6219 = vst.msk [vmem:[%s202 + $0x140] sm:$0xff] %vm6178, %v6014
      %6220 = vst.msk [vmem:[%s202 + $0x148] sm:$0xff] %vm6178, %v6021
      %6221 = vst.msk [vmem:[%s202 + $0x150] sm:$0xff] %vm6178, %v6028
      %6222 = vst.msk [vmem:[%s202 + $0x158] sm:$0xff] %vm6178, %v6035
      %6223 = vst.msk [vmem:[%s202 + $0x160] sm:$0xff] %vm6178, %v6042
      %6224 = vst.msk [vmem:[%s202 + $0x168] sm:$0xff] %vm6178, %v6049
      %6225 = vst.msk [vmem:[%s202 + $0x170] sm:$0xff] %vm6178, %v6056
      %6226 = vst.msk [vmem:[%s202 + $0x178] sm:$0xff] %vm6178, %v6063
      %6227 = vst.msk [vmem:[%s202 + $0x180] sm:$0xff] %vm6178, %v6070
      %6228 = vst.msk [vmem:[%s202 + $0x188] sm:$0xff] %vm6178, %v6077
      %6229 = vst.msk [vmem:[%s202 + $0x190] sm:$0xff] %vm6178, %v6084
      %6230 = vst.msk [vmem:[%s202 + $0x198] sm:$0xff] %vm6178, %v6091
      %6231 = vst.msk [vmem:[%s202 + $0x1a0] sm:$0xff] %vm6178, %v6098
      %6232 = vst.msk [vmem:[%s202 + $0x1a8] sm:$0xff] %vm6178, %v6105
      %6233 = vst.msk [vmem:[%s202 + $0x1b0] sm:$0xff] %vm6178, %v6112
      %6234 = vst.msk [vmem:[%s202 + $0x1b8] sm:$0xff] %vm6178, %v6119
      %6235 = vst.msk [vmem:[%s202 + $0x1c0] sm:$0xff] %vm6178, %v6126
      %6236 = vst.msk [vmem:[%s202 + $0x1c8] sm:$0xff] %vm6178, %v6133
      %6237 = vst.msk [vmem:[%s202 + $0x1d0] sm:$0xff] %vm6178, %v6140
      %6238 = vst.msk [vmem:[%s202 + $0x1d8] sm:$0xff] %vm6178, %v6147
      %6239 = vst.msk [vmem:[%s202 + $0x1e0] sm:$0xff] %vm6178, %v6154
      %6240 = vst.msk [vmem:[%s202 + $0x1e8] sm:$0xff] %vm6178, %v6161
      %6241 = vst.msk [vmem:[%s202 + $0x1f0] sm:$0xff] %vm6178, %v6168
      %6242 = vst.msk [vmem:[%s202 + $0x1f8] sm:$0xff] %vm6178, %v6175
      %s6243 = smul.u32 64, %s15
      %p6244 = scmp.lt.s32.totalorder %s6243, 127
      %s6245 = scalar_select %p6244, %s6243, 127
      %s6246 = smul.addr %s6245, 8
      %s6247 = scalar_lea.vmem %s4, %s6246
      // Predicated region
      $region37: #{tpu_custom_call.1} parent=35 // pred_check
        %p6248 = pneg %p122
      $region38: #{tpu_custom_call.1} parent=35 // pred_check_branch
        %6250 = sbr.rel (%p6248) target = $region40
      $region39: #{tpu_custom_call.1} parent=35 // pred_region
        %s6251 = smul.u32 64, %s15
      $region40: #{tpu_custom_call.1} parent=35 // pred_fallthru
        _
    $region36: #{tpu_custom_call.1} parent=5 // pred_fallthru
      _
    %p6252 = scmp.le.s32.totalorder 2, %s10
    // Predicated region
    $region41: #{tpu_custom_call.1} parent=5 // pred_check
      %p6253 = pneg %p6252
    $region42: #{tpu_custom_call.1} parent=5 // pred_check_branch
      %6255 = sbr.rel (%p6253) target = $region44
    $region43: #{tpu_custom_call.1} parent=5 // pred_region
      %s6256 = ssub.s32 %s10, 2
      // Predicated region
      $region45: #{tpu_custom_call.1} parent=43 // pred_check
        %p6257 = pneg %p128
      $region46: #{tpu_custom_call.1} parent=43 // pred_check_branch
        %6259 = sbr.rel (%p6257) target = $region48
      $region47: #{tpu_custom_call.1} parent=43 // pred_region
        %s6260 = smul.u32 64, %s16
        %p6261 = scmp.lt.s32.totalorder %s6260, 127
        %s6262 = scalar_select %p6261, %s6260, 127
        %s6263 = smul.addr %s6262, 8
        %s6264 = scalar_lea.vmem %s4, %s6263
      $region48: #{tpu_custom_call.1} parent=43 // pred_fallthru
        _
    $region44: #{tpu_custom_call.1} parent=5 // pred_fallthru
      _
  $region6: #{tpu_custom_call.1} parent=0 // loop_footer
    %s14 = sadd.s32 1, %s10
  $region7: #{tpu_custom_call.1} parent=0 // loop_footer_branch
    %9 = sbr.rel target = $region3
  $region8: #{tpu_custom_call.1} parent=0 // loop_exit
    _

</llo_original>
